<compile_context>
chip_gen: v7x
topology: tpu7x:2x2x1
jax: 0.10.0
libtpu: 0.0.40
codegen_flags: <defaults>
</compile_context>

<pallas_src>
import functools
import math

import numpy as np
import jax
import jax.numpy as jnp
from jax.experimental import pallas as pl
from jax.experimental.pallas import tpu as pltpu

# ---------------------------------------------------------------------------
# Model hyper-parameters (SpectralAttentionUNet defaults)
# ---------------------------------------------------------------------------
EMBED_DIM = 256
NUM_HEADS = 8
DIM_HEAD = EMBED_DIM // NUM_HEADS       # 32
MLP_DIM = 4 * EMBED_DIM                 # 1024
DEPTH = 2
N_MELS = 80
N_FREQ = 513                            # n_fft=1024 -> 513 linear bins
POST_CH = 128
LN_EPS = 1e-5
_HIGHEST = jax.lax.Precision.HIGHEST


# ---------------------------------------------------------------------------
# mel2lin matrix (host-side constant; librosa mel filterbank reimplemented)
# ---------------------------------------------------------------------------
def _slaney_mel_frequencies(n_mels, fmin, fmax):
    def hz_to_mel(f):
        f = np.asarray(f, dtype=np.float64)
        f_sp = 200.0 / 3
        min_log_hz = 1000.0
        min_log_mel = min_log_hz / f_sp
        logstep = np.log(6.4) / 27.0
        lin = f / f_sp
        log = min_log_mel + np.log(np.maximum(f, 1e-10) / min_log_hz) / logstep
        return np.where(f >= min_log_hz, log, lin)

    def mel_to_hz(m):
        m = np.asarray(m, dtype=np.float64)
        f_sp = 200.0 / 3
        min_log_hz = 1000.0
        min_log_mel = min_log_hz / f_sp
        logstep = np.log(6.4) / 27.0
        lin = f_sp * m
        log = min_log_hz * np.exp(logstep * (m - min_log_mel))
        return np.where(m >= min_log_mel, log, lin)

    mels = np.linspace(hz_to_mel(fmin), hz_to_mel(fmax), n_mels + 2)
    return mel_to_hz(mels)


def _mel_filterbank(sr=16000, n_fft=1024, n_mels=80, fmin=0.0, fmax=8000.0):
    # Same non-zero support pattern as librosa.filters.mel (slaney mel scale);
    # only the non-zero pattern per row is used downstream.
    fftfreqs = np.linspace(0.0, sr / 2.0, n_fft // 2 + 1)
    mel_f = _slaney_mel_frequencies(n_mels, fmin, fmax)
    fdiff = np.diff(mel_f)
    ramps = mel_f[:, None] - fftfreqs[None, :]
    weights = np.zeros((n_mels, n_fft // 2 + 1))
    for i in range(n_mels):
        lower = -ramps[i] / fdiff[i]
        upper = ramps[i + 2] / fdiff[i + 1]
        weights[i] = np.maximum(0.0, np.minimum(lower, upper))
    return weights


def build_mel2lin():
    mel_np = _mel_filterbank()
    slices = [(np.where(row)[0].min(), np.where(row)[0].max() + 1) for row in mel_np]
    slices = [s[0] for s in slices] + [slices[-1][1]]
    # one spare column guards against an off-by-one at the Nyquist bin
    mel2lin = np.zeros([81, N_FREQ + 1])
    for i, x1, x2 in zip(range(80), slices[:-1], slices[1:]):
        mel2lin[i, x1:x2 + 1] = np.linspace(1, 0, x2 - x1 + 1)
        mel2lin[i + 1, x1:x2 + 1] = np.linspace(0, 1, x2 - x1 + 1)
    mel2lin = mel2lin[1:, :N_FREQ]                       # (80, 513)
    return jnp.asarray(mel2lin.T, dtype=jnp.float32)     # (513, 80)


# ---------------------------------------------------------------------------
# In-kernel helpers
# ---------------------------------------------------------------------------
def _layer_norm(x, g, b):
    mu = jnp.mean(x, axis=-1, keepdims=True)
    xc = x - mu
    var = jnp.mean(xc * xc, axis=-1, keepdims=True)
    return xc * jax.lax.rsqrt(var + LN_EPS) * g + b


def _gelu_tanh(x):
    # TODO(synk): PyTorch nn.GELU defaults to the exact erf form; tanh approximation
    #             used here (erf is not guaranteed to lower in Mosaic).
    c = math.sqrt(2.0 / math.pi)
    return 0.5 * x * (1.0 + jnp.tanh(c * (x + 0.044715 * x * x * x)))


# ---------------------------------------------------------------------------
# Kernel 1: mel front-end  (mel2lin matmul + learnable 1x1 conv, fused)
# ---------------------------------------------------------------------------
def _frontend_kernel(melT_ref, wlin_ref, wconv_ref, bconv_ref, lin_ref, conv_ref):
    m = melT_ref[...].astype(jnp.float32)                 # (T, 80)
    wl = wlin_ref[...].astype(jnp.float32)                # (80, 513)
    wc = wconv_ref[...].astype(jnp.float32)               # (80, 513)
    lin = jnp.dot(m, wl, preferred_element_type=jnp.float32, precision=_HIGHEST)
    conv = jnp.dot(m, wc, preferred_element_type=jnp.float32, precision=_HIGHEST)
    conv = conv + bconv_ref[...].astype(jnp.float32)
    lin_ref[...] = lin.astype(lin_ref.dtype)
    conv_ref[...] = conv.astype(conv_ref.dtype)


def mel_frontend(melT, w_mel2lin, w_conv, b_conv):
    B, T, M = melT.shape
    F = w_mel2lin.shape[1]
    return pl.pallas_call(
        _frontend_kernel,
        out_shape=(jax.ShapeDtypeStruct((B, T, F), melT.dtype),
                   jax.ShapeDtypeStruct((B, T, F), melT.dtype)),
        grid_spec=pltpu.PrefetchScalarGridSpec(
            num_scalar_prefetch=0,
            grid=(B,),
            in_specs=[
                pl.BlockSpec((None, T, M), lambda b: (b, 0, 0)),
                pl.BlockSpec((M, F), lambda b: (0, 0)),
                pl.BlockSpec((M, F), lambda b: (0, 0)),
                pl.BlockSpec((1, F), lambda b: (0, 0)),
            ],
            out_specs=[
                pl.BlockSpec((None, T, F), lambda b: (b, 0, 0)),
                pl.BlockSpec((None, T, F), lambda b: (b, 0, 0)),
            ],
        ),
        compiler_params=pltpu.CompilerParams(dimension_semantics=("parallel",)),
    )(melT, w_mel2lin, w_conv, b_conv.reshape(1, F))


# ---------------------------------------------------------------------------
# Kernel 2: generic batched linear  (used for input projection and post conv)
# ---------------------------------------------------------------------------
def _linear_kernel(x_ref, w_ref, b_ref, o_ref):
    x = x_ref[...].astype(jnp.float32)
    w = w_ref[...].astype(jnp.float32)
    y = jnp.dot(x, w, preferred_element_type=jnp.float32, precision=_HIGHEST)
    y = y + b_ref[...].astype(jnp.float32)
    o_ref[...] = y.astype(o_ref.dtype)


def linear_batched(x, w, b):
    B, N, K = x.shape
    M = w.shape[1]
    return pl.pallas_call(
        _linear_kernel,
        out_shape=jax.ShapeDtypeStruct((B, N, M), x.dtype),
        grid_spec=pltpu.PrefetchScalarGridSpec(
            num_scalar_prefetch=0,
            grid=(B,),
            in_specs=[
                pl.BlockSpec((None, N, K), lambda i: (i, 0, 0)),
                pl.BlockSpec((K, M), lambda i: (0, 0)),
                pl.BlockSpec((1, M), lambda i: (0, 0)),
            ],
            out_specs=pl.BlockSpec((None, N, M), lambda i: (i, 0, 0)),
        ),
        compiler_params=pltpu.CompilerParams(dimension_semantics=("parallel",)),
    )(x, w, b.reshape(1, M))


# ---------------------------------------------------------------------------
# Kernel 3: fused PreNorm + multi-head attention + residual (one batch element)
# ---------------------------------------------------------------------------
def _attn_block_kernel(x_ref, g_ref, be_ref, wq_ref, wk_ref, wv_ref, wo_ref, bo_ref,
                       o_ref, *, heads, scale):
    x = x_ref[...].astype(jnp.float32)                    # (N, D)
    h = _layer_norm(x, g_ref[...].astype(jnp.float32), be_ref[...].astype(jnp.float32))
    acc = x + bo_ref[...].astype(jnp.float32)             # residual + out-proj bias
    for hh in range(heads):                               # static unroll over heads
        q = jnp.dot(h, wq_ref[hh].astype(jnp.float32),
                    preferred_element_type=jnp.float32, precision=_HIGHEST)
        k = jnp.dot(h, wk_ref[hh].astype(jnp.float32),
                    preferred_element_type=jnp.float32, precision=_HIGHEST)
        v = jnp.dot(h, wv_ref[hh].astype(jnp.float32),
                    preferred_element_type=jnp.float32, precision=_HIGHEST)
        dots = jnp.einsum('nd,md->nm', q, k, precision=_HIGHEST) * scale
        dots = dots - jnp.max(dots, axis=-1, keepdims=True)
        p = jnp.exp(dots)
        attn = p / jnp.sum(p, axis=-1, keepdims=True)
        oh = jnp.dot(attn, v, preferred_element_type=jnp.float32, precision=_HIGHEST)
        acc = acc + jnp.dot(oh, wo_ref[hh].astype(jnp.float32),
                            preferred_element_type=jnp.float32, precision=_HIGHEST)
    o_ref[...] = acc.astype(o_ref.dtype)


def attention_block(x, ln_g, ln_b, wq, wk, wv, wo, bo, heads, dim_head):
    B, N, D = x.shape
    scale = 1.0 / math.sqrt(dim_head)
    wq_h = wq.reshape(D, heads, dim_head).transpose(1, 0, 2)   # (H, D, dh)
    wk_h = wk.reshape(D, heads, dim_head).transpose(1, 0, 2)
    wv_h = wv.reshape(D, heads, dim_head).transpose(1, 0, 2)
    wo_h = wo.reshape(heads, dim_head, D)                      # (H, dh, D)
    kern = functools.partial(_attn_block_kernel, heads=heads, scale=scale)
    return pl.pallas_call(
        kern,
        out_shape=jax.ShapeDtypeStruct((B, N, D), x.dtype),
        grid_spec=pltpu.PrefetchScalarGridSpec(
            num_scalar_prefetch=0,
            grid=(B,),
            in_specs=[
                pl.BlockSpec((None, N, D), lambda i: (i, 0, 0)),
                pl.BlockSpec((1, D), lambda i: (0, 0)),
                pl.BlockSpec((1, D), lambda i: (0, 0)),
                pl.BlockSpec((heads, D, dim_head), lambda i: (0, 0, 0)),
                pl.BlockSpec((heads, D, dim_head), lambda i: (0, 0, 0)),
                pl.BlockSpec((heads, D, dim_head), lambda i: (0, 0, 0)),
                pl.BlockSpec((heads, dim_head, D), lambda i: (0, 0, 0)),
                pl.BlockSpec((1, D), lambda i: (0, 0)),
            ],
            out_specs=pl.BlockSpec((None, N, D), lambda i: (i, 0, 0)),
        ),
        compiler_params=pltpu.CompilerParams(dimension_semantics=("parallel",)),
    )(x, ln_g.reshape(1, D), ln_b.reshape(1, D), wq_h, wk_h, wv_h, wo_h, bo.reshape(1, D))


# ---------------------------------------------------------------------------
# Kernel 4: fused PreNorm + FeedForward (GELU) + residual (one batch element)
# ---------------------------------------------------------------------------
def _ffn_block_kernel(x_ref, g_ref, be_ref, w1_ref, b1_ref, w2_ref, b2_ref, o_ref):
    x = x_ref[...].astype(jnp.float32)                    # (N, D)
    h = _layer_norm(x, g_ref[...].astype(jnp.float32), be_ref[...].astype(jnp.float32))
    y = jnp.dot(h, w1_ref[...].astype(jnp.float32),
                preferred_element_type=jnp.float32, precision=_HIGHEST)
    y = _gelu_tanh(y + b1_ref[...].astype(jnp.float32))
    y = jnp.dot(y, w2_ref[...].astype(jnp.float32),
                preferred_element_type=jnp.float32, precision=_HIGHEST)
    o_ref[...] = (y + b2_ref[...].astype(jnp.float32) + x).astype(o_ref.dtype)


def ffn_block(x, ln_g, ln_b, w1, b1, w2, b2):
    B, N, D = x.shape
    Dh = w1.shape[1]
    return pl.pallas_call(
        _ffn_block_kernel,
        out_shape=jax.ShapeDtypeStruct((B, N, D), x.dtype),
        grid_spec=pltpu.PrefetchScalarGridSpec(
            num_scalar_prefetch=0,
            grid=(B,),
            in_specs=[
                pl.BlockSpec((None, N, D), lambda i: (i, 0, 0)),
                pl.BlockSpec((1, D), lambda i: (0, 0)),
                pl.BlockSpec((1, D), lambda i: (0, 0)),
                pl.BlockSpec((D, Dh), lambda i: (0, 0)),
                pl.BlockSpec((1, Dh), lambda i: (0, 0)),
                pl.BlockSpec((Dh, D), lambda i: (0, 0)),
                pl.BlockSpec((1, D), lambda i: (0, 0)),
            ],
            out_specs=pl.BlockSpec((None, N, D), lambda i: (i, 0, 0)),
        ),
        compiler_params=pltpu.CompilerParams(dimension_semantics=("parallel",)),
    )(x, ln_g.reshape(1, D), ln_b.reshape(1, D), w1, b1.reshape(1, Dh), w2, b2.reshape(1, D))


# ---------------------------------------------------------------------------
# Full forward (Pallas kernels + pure-layout glue in JAX)
# ---------------------------------------------------------------------------
def spectral_attention_unet_forward(mel, params):
    """mel: (B, 80, T) float32 -> (B, 128, T)."""
    B, _, T = mel.shape
    melT = jnp.transpose(mel, (0, 2, 1))                                 # (B, T, 80)
    linT, convT = mel_frontend(melT, params['mel2lin'].T, params['w_conv'].T,
                               params['b_conv'])                         # (B, T, 513) x2
    lin = jnp.transpose(linT, (0, 2, 1))                                 # (B, 513, T)
    conv = jnp.transpose(convT, (0, 2, 1))                               # (B, 513, T)
    pos = jnp.broadcast_to(
        jnp.linspace(0.0, 1.0, N_FREQ, dtype=mel.dtype)[None, None, :, None],
        (B, 1, N_FREQ, T))
    net = jnp.concatenate([lin[:, None], pos, conv[:, None]], axis=1)    # (B, 3, 513, T)
    # replicate torch .view(B, seq_len, C*F) on the contiguous (B, C, F, T) tensor
    net = net.reshape(B, T, 3 * N_FREQ)                                  # (B, T, 1539)
    # TODO(synk): the PyTorch forward builds a *fresh* randomly-initialized
    #             nn.Linear(1539, 256) each call; here it is a fixed deterministic weight.
    x = linear_batched(net, params['w_proj'], params['b_proj'])          # (B, T, 256)
    for lp in params['layers']:
        x = attention_block(x, lp['ln1_g'], lp['ln1_b'], lp['wq'], lp['wk'], lp['wv'],
                            lp['wo'], lp['bo'], NUM_HEADS, DIM_HEAD)
        x = ffn_block(x, lp['ln2_g'], lp['ln2_b'], lp['w1'], lp['b1'], lp['w2'], lp['b2'])
    out = linear_batched(x, params['w_post'], params['b_post'])          # (B, T, 128)
    return jnp.transpose(out, (0, 2, 1))                                 # (B, 128, T)


# ---------------------------------------------------------------------------
# Pure-JAX reference (same parameters, no Pallas)
# ---------------------------------------------------------------------------
def forward_reference(mel, params):
    B, _, T = mel.shape
    lin = jnp.einsum('fm,bmt->bft', params['mel2lin'], mel, precision=_HIGHEST)
    conv = (jnp.einsum('fm,bmt->bft', params['w_conv'], mel, precision=_HIGHEST)
            + params['b_conv'][None, :, None])
    pos = jnp.broadcast_to(jnp.linspace(0.0, 1.0, N_FREQ)[None, None, :, None],
                           (B, 1, N_FREQ, T))
    net = jnp.concatenate([lin[:, None], pos, conv[:, None]], axis=1)
    net = net.reshape(B, T, 3 * N_FREQ)
    x = jnp.einsum('btk,kd->btd', net, params['w_proj'], precision=_HIGHEST) + params['b_proj']
    for lp in params['layers']:
        h = _layer_norm(x, lp['ln1_g'], lp['ln1_b'])
        q = jnp.einsum('btd,de->bte', h, lp['wq'], precision=_HIGHEST).reshape(B, T, NUM_HEADS, DIM_HEAD)
        k = jnp.einsum('btd,de->bte', h, lp['wk'], precision=_HIGHEST).reshape(B, T, NUM_HEADS, DIM_HEAD)
        v = jnp.einsum('btd,de->bte', h, lp['wv'], precision=_HIGHEST).reshape(B, T, NUM_HEADS, DIM_HEAD)
        dots = jnp.einsum('bnhd,bmhd->bhnm', q, k, precision=_HIGHEST) / math.sqrt(DIM_HEAD)
        attn = jax.nn.softmax(dots, axis=-1)
        o = jnp.einsum('bhnm,bmhd->bnhd', attn, v, precision=_HIGHEST).reshape(B, T, EMBED_DIM)
        x = x + jnp.einsum('btd,de->bte', o, lp['wo'], precision=_HIGHEST) + lp['bo']
        h = _layer_norm(x, lp['ln2_g'], lp['ln2_b'])
        y = _gelu_tanh(jnp.einsum('btd,dh->bth', h, lp['w1'], precision=_HIGHEST) + lp['b1'])
        x = x + jnp.einsum('bth,hd->btd', y, lp['w2'], precision=_HIGHEST) + lp['b2']
    out = jnp.einsum('btd,dc->btc', x, params['w_post'], precision=_HIGHEST) + params['b_post']
    return jnp.transpose(out, (0, 2, 1))


# ---------------------------------------------------------------------------
# Parameters
# ---------------------------------------------------------------------------
def init_params(key):
    keys = jax.random.split(key, 64)
    it = iter(keys)

    def nrm(shape, scale):
        return scale * jax.random.normal(next(it), shape, dtype=jnp.float32)

    params = {
        'mel2lin': build_mel2lin(),                        # (513, 80), fixed (non-learnable)
        # weight_norm / spectral_norm reparameterizations fold into a plain weight at
        # a fixed parameterization, so we use plain weights here.
        'w_conv': nrm((N_FREQ, N_MELS), 0.05),             # Conv1d(80->513, k=1)
        'b_conv': nrm((N_FREQ,), 0.05),
        'w_proj': nrm((3 * N_FREQ, EMBED_DIM), 0.02),      # forward-time Linear(1539->256)
        'b_proj': nrm((EMBED_DIM,), 0.02),
        'w_post': nrm((EMBED_DIM, POST_CH), 0.05),         # Conv1d(256->128, k=1)
        'b_post': nrm((POST_CH,), 0.05),
        'layers': [],
    }
    for _ in range(DEPTH):
        params['layers'].append({
            'ln1_g': 1.0 + nrm((EMBED_DIM,), 0.1),
            'ln1_b': nrm((EMBED_DIM,), 0.1),
            'wq': nrm((EMBED_DIM, EMBED_DIM), 0.05),
            'wk': nrm((EMBED_DIM, EMBED_DIM), 0.05),
            'wv': nrm((EMBED_DIM, EMBED_DIM), 0.05),
            'wo': nrm((EMBED_DIM, EMBED_DIM), 0.05),
            'bo': nrm((EMBED_DIM,), 0.05),
            'ln2_g': 1.0 + nrm((EMBED_DIM,), 0.1),
            'ln2_b': nrm((EMBED_DIM,), 0.1),
            'w1': nrm((EMBED_DIM, MLP_DIM), 0.05),
            'b1': nrm((MLP_DIM,), 0.05),
            'w2': nrm((MLP_DIM, EMBED_DIM), 0.05),
            'b2': nrm((EMBED_DIM,), 0.05),
        })
    return params


if __name__ == "__main__":
    key = jax.random.PRNGKey(0)
    k_params, k_mel = jax.random.split(key)
    params = init_params(k_params)

    B, T = 2, 8
    mel = jax.random.normal(k_mel, (B, N_MELS, T), dtype=jnp.float32)

    out = spectral_attention_unet_forward(mel, params)
    out = jax.block_until_ready(out)
    assert out.shape == (B, POST_CH, T), out.shape

    ref = jax.block_until_ready(forward_reference(mel, params))
    max_diff = float(jnp.max(jnp.abs(out - ref)))
    assert jnp.allclose(out, ref, atol=3e-3, rtol=3e-3), f"mismatch vs reference: {max_diff}"

    print("KERNEL_OK")
</pallas_src>

<mosaic_0001>
module attributes {stable_mosaic.version = 11 : i64} {
  func.func @_frontend_kernel(%arg0: i32, %arg1: memref<1x8x80xf32, #tpu.memory_space<vmem>>, %arg2: memref<80x513xf32, #tpu.memory_space<vmem>>, %arg3: memref<80x513xf32, #tpu.memory_space<vmem>>, %arg4: memref<1x513xf32, #tpu.memory_space<vmem>>, %arg5: memref<1x8x513xf32, #tpu.memory_space<vmem>>, %arg6: memref<1x8x513xf32, #tpu.memory_space<vmem>>) attributes {dimension_semantics = [#tpu.dimension_semantics<parallel>], iteration_bounds = array<i64: 2>, scalar_prefetch = 0 : i64, scratch_operands = 0 : i64, tpu.core_type = #tpu.core_type<tc>, window_params = [{transform_indices = @transform_0, window_bounds = array<i64: 1, 8, 80>}, {pipeline_mode = #tpu.pipeline_mode<synchronous>, transform_indices = @transform_1, window_bounds = array<i64: 80, 513>}, {pipeline_mode = #tpu.pipeline_mode<synchronous>, transform_indices = @transform_2, window_bounds = array<i64: 80, 513>}, {pipeline_mode = #tpu.pipeline_mode<synchronous>, transform_indices = @transform_3, window_bounds = array<i64: 1, 513>}, {transform_indices = @transform_4, window_bounds = array<i64: 1, 8, 513>}, {transform_indices = @transform_5, window_bounds = array<i64: 1, 8, 513>}]} {
    %c0 = arith.constant 0 : index
    %c0_0 = arith.constant 0 : index
    %c0_1 = arith.constant 0 : index
    %0 = vector.load %arg1[%c0, %c0_0, %c0_1] : memref<1x8x80xf32, #tpu.memory_space<vmem>>, vector<1x8x80xf32>
    %1 = vector.shape_cast %0 : vector<1x8x80xf32> to vector<8x80xf32>
    %c0_2 = arith.constant 0 : index
    %c0_3 = arith.constant 0 : index
    %2 = vector.load %arg2[%c0_2, %c0_3] : memref<80x513xf32, #tpu.memory_space<vmem>>, vector<80x513xf32>
    %c0_4 = arith.constant 0 : index
    %c0_5 = arith.constant 0 : index
    %3 = vector.load %arg3[%c0_4, %c0_5] : memref<80x513xf32, #tpu.memory_space<vmem>>, vector<80x513xf32>
    %cst = arith.constant dense<0.000000e+00> : vector<8x513xf32>
    %4 = tpu.matmul %1, %2, %cst {dimension_numbers = #tpu.dot_dimension_numbers<[1], [0], [0], [1], [0, 0, 1, 1], [], []>, precision = #tpu.contract_precision<fp32>} : vector<8x80xf32>, vector<80x513xf32>, vector<8x513xf32> -> vector<8x513xf32>
    %cst_6 = arith.constant dense<0.000000e+00> : vector<8x513xf32>
    %5 = tpu.matmul %1, %3, %cst_6 {dimension_numbers = #tpu.dot_dimension_numbers<[1], [0], [0], [1], [0, 0, 1, 1], [], []>, precision = #tpu.contract_precision<fp32>} : vector<8x80xf32>, vector<80x513xf32>, vector<8x513xf32> -> vector<8x513xf32>
    %c0_7 = arith.constant 0 : index
    %c0_8 = arith.constant 0 : index
    %6 = vector.load %arg4[%c0_7, %c0_8] : memref<1x513xf32, #tpu.memory_space<vmem>>, vector<1x513xf32>
    %7 = vector.broadcast %6 : vector<1x513xf32> to vector<8x513xf32>
    %8 = arith.addf %5, %7 : vector<8x513xf32>
    %c0_9 = arith.constant 0 : index
    %c0_10 = arith.constant 0 : index
    %c0_11 = arith.constant 0 : index
    %9 = vector.load %arg5[%c0_9, %c0_10, %c0_11] : memref<1x8x513xf32, #tpu.memory_space<vmem>>, vector<1x8x513xf32>
    %10 = vector.shape_cast %9 : vector<1x8x513xf32> to vector<8x513xf32>
    %11 = vector.shape_cast %4 : vector<8x513xf32> to vector<1x8x513xf32>
    tpu.vector_store %arg5[%c0_9, %c0_10, %c0_11], %11 {strides = array<i32>} : memref<1x8x513xf32, #tpu.memory_space<vmem>>, vector<1x8x513xf32>,
    %c0_12 = arith.constant 0 : index
    %c0_13 = arith.constant 0 : index
    %c0_14 = arith.constant 0 : index
    %12 = vector.load %arg6[%c0_12, %c0_13, %c0_14] : memref<1x8x513xf32, #tpu.memory_space<vmem>>, vector<1x8x513xf32>
    %13 = vector.shape_cast %12 : vector<1x8x513xf32> to vector<8x513xf32>
    %14 = vector.shape_cast %8 : vector<8x513xf32> to vector<1x8x513xf32>
    tpu.vector_store %arg6[%c0_12, %c0_13, %c0_14], %14 {strides = array<i32>} : memref<1x8x513xf32, #tpu.memory_space<vmem>>, vector<1x8x513xf32>,
    return
  }
  func.func @transform_0(%arg0: i32) -> (i32, i32, i32) {
    %c0_i32 = arith.constant 0 : i32
    %c0_i32_0 = arith.constant 0 : i32
    %c0_i32_1 = arith.constant 0 : i32
    return %arg0, %c0_i32, %c0_i32_0 : i32, i32, i32
  }
  func.func @transform_1(%arg0: i32) -> (i32, i32) {
    %c0_i32 = arith.constant 0 : i32
    %c0_i32_0 = arith.constant 0 : i32
    %c0_i32_1 = arith.constant 0 : i32
    return %c0_i32, %c0_i32_0 : i32, i32
  }
  func.func @transform_2(%arg0: i32) -> (i32, i32) {
    %c0_i32 = arith.constant 0 : i32
    %c0_i32_0 = arith.constant 0 : i32
    %c0_i32_1 = arith.constant 0 : i32
    return %c0_i32, %c0_i32_0 : i32, i32
  }
  func.func @transform_3(%arg0: i32) -> (i32, i32) {
    %c0_i32 = arith.constant 0 : i32
    %c0_i32_0 = arith.constant 0 : i32
    %c0_i32_1 = arith.constant 0 : i32
    return %c0_i32, %c0_i32_0 : i32, i32
  }
  func.func @transform_4(%arg0: i32) -> (i32, i32, i32) {
    %c0_i32 = arith.constant 0 : i32
    %c0_i32_0 = arith.constant 0 : i32
    %c0_i32_1 = arith.constant 0 : i32
    return %arg0, %c0_i32, %c0_i32_0 : i32, i32, i32
  }
  func.func @transform_5(%arg0: i32) -> (i32, i32, i32) {
    %c0_i32 = arith.constant 0 : i32
    %c0_i32_0 = arith.constant 0 : i32
    %c0_i32_1 = arith.constant 0 : i32
    return %arg0, %c0_i32, %c0_i32_0 : i32, i32, i32
  }
}

</mosaic_0001>

<llo_original>
// kernel: tpu_custom_call.1
$region0: #{tpu_custom_call.1}
  #allocation0 [shape = 'u32[]', space=smem, size = 0x4, offset = 0x4, fixed_abs, tag = 'smem constant byte address 0x4 - core index']
  #allocation1 [shape = 'u32[144,128]{1,0:T(1,128)}', space=vmem, size = 0x12000, scoped, tag = 'internal scratch']
  %s0 = inlined_call_operand.hbm [shape: f32[2,8,80], index: 0, kind: input, shape index: {}]
  %s1 = inlined_call_operand.hbm [shape: f32[80,513], index: 1, kind: input, shape index: {}]
  %s2 = inlined_call_operand.hbm [shape: f32[80,513], index: 2, kind: input, shape index: {}]
  %s3 = inlined_call_operand.vmem [shape: f32[1,513], index: 3, kind: input, shape index: {}]
  %s4 = inlined_call_operand.hbm [shape: f32[2,8,513], index: 4, kind: output, shape index: {0}]
  %s5 = inlined_call_operand.hbm [shape: f32[2,8,513], index: 5, kind: output, shape index: {1}]
  %6 = xla_tuple %s4, %s5
  %s7 = sld [smem:[#allocation0]]
  $region69: #{tpu_custom_call.1} parent=0
    _
  %s9 = ssub.s32 1, %s7
  %s10 = scalar_select 0, %s9, %s7
  $region1: #{tpu_custom_call.1} parent=0
    #allocation2 [shape = 'u8[8192]{0}', space=vmem, size = 0x2000, scoped, tag = 'input window, operand 0']
    #allocation3 [shape = 's32[2]{0}', space=sflag, size = 0x8, scoped, tag = 'scoped memory for tpu_custom_call.1']
    #allocation4 [shape = 's32[2]{0}', space=sflag, size = 0x8, scoped, tag = 'scoped memory for tpu_custom_call.1']
    #allocation5 [shape = 'u8[204800]{0}', space=vmem, size = 0x32000, scoped, tag = 'input window, operand 1, single buffered']
    #allocation6 [shape = 's32[1]{0}', space=sflag, size = 0x4, scoped, tag = 'scoped memory for tpu_custom_call.1']
    #allocation7 [shape = 'u8[204800]{0}', space=vmem, size = 0x32000, scoped, tag = 'input window, operand 2, single buffered']
    #allocation8 [shape = 'u8[40960]{0}', space=vmem, size = 0xa000, scoped, tag = 'output window, operand 0']
    #allocation9 [shape = 'u8[40960]{0}', space=vmem, size = 0xa000, scoped, tag = 'output window, operand 1']
    #allocation10 [shape = 's32[2]{0}', space=sflag, size = 0x8, scoped, tag = 'scoped memory for tpu_custom_call.1']
    %11 = vsyncpa [#allocation3], 0
    %s12 = scalar_lea.sflag [#allocation3], 1
    %13 = vsyncpa %s12, 0
    %14 = vsyncpa [#allocation6], 0
    %15 = vsyncpa [#allocation4], 0
    %s16 = scalar_lea.sflag [#allocation4], 1
    %17 = vsyncpa %s16, 0
    %18 = vsyncpa [#allocation10], 0
    %s19 = scalar_lea.sflag [#allocation10], 1
    %20 = vsyncpa %s19, 0
    loop: start=0, step=1, limit=4
    $region2: #{tpu_custom_call.1} parent=1 // loop_pre_header
      _
    $region3: #{tpu_custom_call.1} parent=1 // loop_header
      %s22 = sphi 0, %s26
      %p23 = scmp.ge.s32.totalorder %s22, 4
      %s32 = sphi 0, %s34
      %s35 = sphi 0, %s32
      %s36 = sphi 0, %s35
      %s52 = sphi 0, %s36
      %s56 = sphi 0, %s56
      %s58 = sphi 0, %s56
      %s59 = sphi 0, %s58
      %s73 = sphi 0, %s59
      %s77 = sphi 0, %s77
      %s79 = sphi 0, %s77
      %s80 = sphi 0, %s79
      %s94 = sphi 0, %s80
      %s98 = sphi 0, %s98
      %s100 = sphi 0, %s98
      %s101 = sphi 0, %s100
      %s115 = sphi 0, %s101
      %s121 = sphi 0, %s123
      %s124 = sphi 0, %s121
      %s125 = sphi 0, %s124
      %s141 = sphi 0, %s125
      %s147 = sphi 0, %s149
      %s150 = sphi 0, %s147
      %s151 = sphi 0, %s150
      %s167 = sphi 0, %s151
    $region4: #{tpu_custom_call.1} parent=1 // loop_header_branch
      %25 = sbr.rel (%p23) target = $region8
    $region5: #{tpu_custom_call.1} parent=1 // loop_body
      %s27 = ssub.s32 %s22, 1
      %s28 = ssub.s32 %s22, 2
      %s29 = sadd.s32 %s22, 1
      %s30 = ssub.s32 %s22, %s29
      %p31 = scmp.eq.s32.totalorder %s30, 0
      %s33 = sadd.s32 %s32, 1
      %s34 = scalar_select %p31, %s32, %s33
      %p37 = pneg %p31
      %p38 = scmp.eq.s32.totalorder %s22, 1
      %p39 = por %p37, %p38
      %p40 = scmp.ne.s32.totalorder %s32, %s35
      %p41 = scmp.eq.s32.totalorder %s22, 0
      %p42 = por %p40, %p41
      %p43 = scmp.ne.s32.totalorder %s32, %s35
      %p44 = scmp.eq.s32.totalorder %s27, 1
      %p45 = por %p43, %p44
      %p46 = scmp.ne.s32.totalorder %s35, %s36
      %p47 = scmp.eq.s32.totalorder %s27, 0
      %p48 = por %p46, %p47
      %p49 = scmp.ne.s32.totalorder %s35, %s36
      %p50 = scmp.eq.s32.totalorder %s28, 1
      %p51 = por %p49, %p50
      %p53 = scmp.ne.s32.totalorder %s36, %s52
      %p54 = scmp.eq.s32.totalorder %s28, 0
      %p55 = por %p53, %p54
      %s57 = sadd.s32 %s56, 1
      %p60 = scmp.eq.s32.totalorder %s22, 1
      %p61 = scmp.ne.s32.totalorder %s56, %s58
      %p62 = scmp.eq.s32.totalorder %s22, 0
      %p63 = por %p61, %p62
      %p64 = scmp.ne.s32.totalorder %s56, %s58
      %p65 = scmp.eq.s32.totalorder %s27, 1
      %p66 = por %p64, %p65
      %p67 = scmp.ne.s32.totalorder %s58, %s59
      %p68 = scmp.eq.s32.totalorder %s27, 0
      %p69 = por %p67, %p68
      %p70 = scmp.ne.s32.totalorder %s58, %s59
      %p71 = scmp.eq.s32.totalorder %s28, 1
      %p72 = por %p70, %p71
      %p74 = scmp.ne.s32.totalorder %s59, %s73
      %p75 = scmp.eq.s32.totalorder %s28, 0
      %p76 = por %p74, %p75
      %s78 = sadd.s32 %s77, 1
      %p81 = scmp.eq.s32.totalorder %s22, 1
      %p82 = scmp.ne.s32.totalorder %s77, %s79
      %p83 = scmp.eq.s32.totalorder %s22, 0
      %p84 = por %p82, %p83
      %p85 = scmp.ne.s32.totalorder %s77, %s79
      %p86 = scmp.eq.s32.totalorder %s27, 1
      %p87 = por %p85, %p86
      %p88 = scmp.ne.s32.totalorder %s79, %s80
      %p89 = scmp.eq.s32.totalorder %s27, 0
      %p90 = por %p88, %p89
      %p91 = scmp.ne.s32.totalorder %s79, %s80
      %p92 = scmp.eq.s32.totalorder %s28, 1
      %p93 = por %p91, %p92
      %p95 = scmp.ne.s32.totalorder %s80, %s94
      %p96 = scmp.eq.s32.totalorder %s28, 0
      %p97 = por %p95, %p96
      %s99 = sadd.s32 %s98, 1
      %p102 = scmp.eq.s32.totalorder %s22, 1
      %p103 = scmp.ne.s32.totalorder %s98, %s100
      %p104 = scmp.eq.s32.totalorder %s22, 0
      %p105 = por %p103, %p104
      %p106 = scmp.ne.s32.totalorder %s98, %s100
      %p107 = scmp.eq.s32.totalorder %s27, 1
      %p108 = por %p106, %p107
      %p109 = scmp.ne.s32.totalorder %s100, %s101
      %p110 = scmp.eq.s32.totalorder %s27, 0
      %p111 = por %p109, %p110
      %p112 = scmp.ne.s32.totalorder %s100, %s101
      %p113 = scmp.eq.s32.totalorder %s28, 1
      %p114 = por %p112, %p113
      %p116 = scmp.ne.s32.totalorder %s101, %s115
      %p117 = scmp.eq.s32.totalorder %s28, 0
      %p118 = por %p116, %p117
      %s119 = ssub.s32 %s22, %s29
      %p120 = scmp.eq.s32.totalorder %s119, 0
      %s122 = sadd.s32 %s121, 1
      %s123 = scalar_select %p120, %s121, %s122
      %p126 = pneg %p120
      %p127 = scmp.eq.s32.totalorder %s22, 1
      %p128 = por %p126, %p127
      %p129 = scmp.ne.s32.totalorder %s121, %s124
      %p130 = scmp.eq.s32.totalorder %s22, 0
      %p131 = por %p129, %p130
      %p132 = scmp.ne.s32.totalorder %s121, %s124
      %p133 = scmp.eq.s32.totalorder %s27, 1
      %p134 = por %p132, %p133
      %p135 = scmp.ne.s32.totalorder %s124, %s125
      %p136 = scmp.eq.s32.totalorder %s27, 0
      %p137 = por %p135, %p136
      %p138 = scmp.ne.s32.totalorder %s124, %s125
      %p139 = scmp.eq.s32.totalorder %s28, 1
      %p140 = por %p138, %p139
      %p142 = scmp.ne.s32.totalorder %s125, %s141
      %p143 = scmp.eq.s32.totalorder %s28, 0
      %p144 = por %p142, %p143
      %s145 = ssub.s32 %s22, %s29
      %p146 = scmp.eq.s32.totalorder %s145, 0
      %s148 = sadd.s32 %s147, 1
      %s149 = scalar_select %p146, %s147, %s148
      %p152 = pneg %p146
      %p153 = scmp.eq.s32.totalorder %s22, 1
      %p154 = por %p152, %p153
      %p155 = scmp.ne.s32.totalorder %s147, %s150
      %p156 = scmp.eq.s32.totalorder %s22, 0
      %p157 = por %p155, %p156
      %p158 = scmp.ne.s32.totalorder %s147, %s150
      %p159 = scmp.eq.s32.totalorder %s27, 1
      %p160 = por %p158, %p159
      %p161 = scmp.ne.s32.totalorder %s150, %s151
      %p162 = scmp.eq.s32.totalorder %s27, 0
      %p163 = por %p161, %p162
      %p164 = scmp.ne.s32.totalorder %s150, %s151
      %p165 = scmp.eq.s32.totalorder %s28, 1
      %p166 = por %p164, %p165
      %p168 = scmp.ne.s32.totalorder %s151, %s167
      %p169 = scmp.eq.s32.totalorder %s28, 0
      %p170 = por %p168, %p169
      %p171 = scmp.le.s32.totalorder 1, %s22
      %p172 = scmp.lt.s32.totalorder %s22, 3
      %p173 = pnand %p171, %p172
      %p174 = pneg %p173
      // Predicated region
      $region9: #{tpu_custom_call.1} parent=5 // pred_check
        _
      $region10: #{tpu_custom_call.1} parent=5 // pred_check_branch
        %176 = sbr.rel (%p173) target = $region12
      $region11: #{tpu_custom_call.1} parent=5 // pred_region
        %s177 = ssub.s32 %s22, 1
        // Predicated region
        $region13: #{tpu_custom_call.1} parent=11 // pred_check
          %p178 = pneg %p69
        $region14: #{tpu_custom_call.1} parent=11 // pred_check_branch
          %180 = sbr.rel (%p178) target = $region16
        $region15: #{tpu_custom_call.1} parent=11 // pred_region
          %s182 = ssub.s32 6400, 6400
          %183 = vsyncadd [#allocation6], %s182
          %s184 = sshll.u32 [#allocation5], 4
          %s185 = int_to_ptr.vmem [resolvable:$true] %s184
          %190 = dma.hbm_to_vmem [thread:$0]  %s1, 6400, %s185, [#allocation6], 640, 640, 40
        $region16: #{tpu_custom_call.1} parent=11 // pred_fallthru
          _
        // Predicated region
        $region17: #{tpu_custom_call.1} parent=11 // pred_check
          %p191 = pneg %p90
        $region18: #{tpu_custom_call.1} parent=11 // pred_check_branch
          %193 = sbr.rel (%p191) target = $region20
        $region19: #{tpu_custom_call.1} parent=11 // pred_region
          %s195 = ssub.s32 6400, 6400
          %196 = vsyncadd [#allocation6], %s195
          %s197 = sshll.u32 [#allocation7], 4
          %s198 = int_to_ptr.vmem [resolvable:$true] %s197
          %203 = dma.hbm_to_vmem [thread:$0]  %s2, 6400, %s198, [#allocation6], 640, 640, 40
        $region20: #{tpu_custom_call.1} parent=11 // pred_fallthru
          _
        // Predicated region
        $region21: #{tpu_custom_call.1} parent=11 // pred_check
          %p204 = pneg %p111
        $region22: #{tpu_custom_call.1} parent=11 // pred_check_branch
          %206 = sbr.rel (%p204) target = $region24
        $region23: #{tpu_custom_call.1} parent=11 // pred_region
          _
        $region24: #{tpu_custom_call.1} parent=11 // pred_fallthru
          _
      $region12: #{tpu_custom_call.1} parent=5 // pred_fallthru
        _
      %p207 = scmp.lt.s32.totalorder %s22, 2
      // Predicated region
      $region25: #{tpu_custom_call.1} parent=5 // pred_check
        %p208 = pneg %p207
      $region26: #{tpu_custom_call.1} parent=5 // pred_check_branch
        %210 = sbr.rel (%p208) target = $region28
      $region27: #{tpu_custom_call.1} parent=5 // pred_region
        // Predicated region
        $region29: #{tpu_custom_call.1} parent=27 // pred_check
          %p211 = pneg %p42
        $region30: #{tpu_custom_call.1} parent=27 // pred_check_branch
          %213 = sbr.rel (%p211) target = $region32
        $region31: #{tpu_custom_call.1} parent=27 // pred_region
          %s214 = sand.u32 %s32, 1
          %s215 = scalar_lea.sflag [#allocation3], %s214
          %s216 = sand.u32 %s32, 1
          %s217 = smul.addr %s216, 8
          %s218 = scalar_lea.vmem [#allocation2], %s217
          %s220 = ssub.s32 128, 128
          %221 = vsyncadd %s215, %s220
          %s222 = smul.addr %s22, 128
          %s223 = scalar_lea.hbm %s0, %s222
          %s225 = sshll.u32 %s218, 4
          %s226 = int_to_ptr.vmem [resolvable:$true] %s225
          %228 = dma.hbm_to_vmem [thread:$0]  %s223, 128, %s226, %s215
        $region32: #{tpu_custom_call.1} parent=27 // pred_fallthru
          _
      $region28: #{tpu_custom_call.1} parent=5 // pred_fallthru
        _
      %p229 = scmp.le.s32.totalorder 1, %s22
      %p230 = scmp.lt.s32.totalorder %s22, 3
      %p231 = pnand %p229, %p230
      %p232 = pneg %p231
      // Predicated region
      $region33: #{tpu_custom_call.1} parent=5 // pred_check
        _
      $region34: #{tpu_custom_call.1} parent=5 // pred_check_branch
        %234 = sbr.rel (%p231) target = $region36
      $region35: #{tpu_custom_call.1} parent=5 // pred_region
        %s235 = ssub.s32 %s22, 1
        %s236 = sand.u32 %s35, 1
        %s237 = scalar_lea.sflag [#allocation3], %s236
        %s238 = sand.u32 %s35, 1
        %s239 = smul.addr %s238, 8
        %s240 = scalar_lea.vmem [#allocation2], %s239
        // Predicated region
        $region37: #{tpu_custom_call.1} parent=35 // pred_check
          %p241 = pneg %p48
        $region38: #{tpu_custom_call.1} parent=35 // pred_check_branch
          %243 = sbr.rel (%p241) target = $region40
        $region39: #{tpu_custom_call.1} parent=35 // pred_region
          %244 = dma.done %s237, 128
        $region40: #{tpu_custom_call.1} parent=35 // pred_fallthru
          _
        // Predicated region
        $region41: #{tpu_custom_call.1} parent=35 // pred_check
          %p245 = pneg %p69
        $region42: #{tpu_custom_call.1} parent=35 // pred_check_branch
          %247 = sbr.rel (%p245) target = $region44
        $region43: #{tpu_custom_call.1} parent=35 // pred_region
          %248 = dma.done [#allocation6], 6400
        $region44: #{tpu_custom_call.1} parent=35 // pred_fallthru
          _
        // Predicated region
        $region45: #{tpu_custom_call.1} parent=35 // pred_check
          %p249 = pneg %p90
        $region46: #{tpu_custom_call.1} parent=35 // pred_check_branch
          %251 = sbr.rel (%p249) target = $region48
        $region47: #{tpu_custom_call.1} parent=35 // pred_region
          %252 = dma.done [#allocation6], 6400
        $region48: #{tpu_custom_call.1} parent=35 // pred_fallthru
          _
        %s253 = sand.u32 %s35, 1
        %s254 = scalar_lea.sflag [#allocation3], %s253
        %s255 = sand.u32 %s35, 1
        %s256 = smul.addr %s255, 8
        %s257 = scalar_lea.vmem [#allocation2], %s256
        %p258 = pneg %p48
        %p259 = pneg %p45
        %p260 = pneg %p69
        %p261 = pneg %p66
        %p262 = pneg %p90
        %p263 = pneg %p87
        %p264 = pneg %p111
        %p265 = pneg %p108
        %p266 = pneg %p137
        %p267 = pneg %p134
        %s268 = sand.u32 %s124, 1
        %s269 = scalar_lea.sflag [#allocation4], %s268
        %s270 = sand.u32 %s124, 1
        %s271 = smul.addr %s270, 40
        %s272 = scalar_lea.vmem [#allocation8], %s271
        %p273 = pneg %p163
        %p274 = pneg %p160
        %s275 = sand.u32 %s150, 1
        %s276 = scalar_lea.sflag [#allocation10], %s275
        %s277 = sand.u32 %s150, 1
        %s278 = smul.addr %s277, 40
        %s279 = scalar_lea.vmem [#allocation9], %s278
        %v280 = vld [vmem:[%s240] sm:$0xff]
        %v281 = vld [vmem:[#allocation5] sm:$0xff]
        %v282 = vld [vmem:[#allocation5 + $0x8] sm:$0xff]
        %v283 = vld [vmem:[#allocation5 + $0x10] sm:$0xff]
        %v284 = vld [vmem:[#allocation5 + $0x18] sm:$0xff]
        %v285 = vld [vmem:[#allocation5 + $0x20] sm:$0xff]
        %v286 = vld [vmem:[#allocation5 + $0x28] sm:$0xff]
        %v287 = vld [vmem:[#allocation5 + $0x30] sm:$0xff]
        %v288 = vld [vmem:[#allocation5 + $0x38] sm:$0xff]
        %v289 = vld [vmem:[#allocation5 + $0x40] sm:$0xff]
        %v290 = vld [vmem:[#allocation5 + $0x48] sm:$0xff]
        %v291 = vld [vmem:[#allocation5 + $0x50] sm:$0xff]
        %v292 = vld [vmem:[#allocation5 + $0x58] sm:$0xff]
        %v293 = vld [vmem:[#allocation5 + $0x60] sm:$0xff]
        %v294 = vld [vmem:[#allocation5 + $0x68] sm:$0xff]
        %v295 = vld [vmem:[#allocation5 + $0x70] sm:$0xff]
        %v296 = vld [vmem:[#allocation5 + $0x78] sm:$0xff]
        %v297 = vld [vmem:[#allocation5 + $0x80] sm:$0xff]
        %v298 = vld [vmem:[#allocation5 + $0x88] sm:$0xff]
        %v299 = vld [vmem:[#allocation5 + $0x90] sm:$0xff]
        %v300 = vld [vmem:[#allocation5 + $0x98] sm:$0xff]
        %v301 = vld [vmem:[#allocation5 + $0xa0] sm:$0xff]
        %v302 = vld [vmem:[#allocation5 + $0xa8] sm:$0xff]
        %v303 = vld [vmem:[#allocation5 + $0xb0] sm:$0xff]
        %v304 = vld [vmem:[#allocation5 + $0xb8] sm:$0xff]
        %v305 = vld [vmem:[#allocation5 + $0xc0] sm:$0xff]
        %v306 = vld [vmem:[#allocation5 + $0xc8] sm:$0xff]
        %v307 = vld [vmem:[#allocation5 + $0xd0] sm:$0xff]
        %v308 = vld [vmem:[#allocation5 + $0xd8] sm:$0xff]
        %v309 = vld [vmem:[#allocation5 + $0xe0] sm:$0xff]
        %v310 = vld [vmem:[#allocation5 + $0xe8] sm:$0xff]
        %v311 = vld [vmem:[#allocation5 + $0xf0] sm:$0xff]
        %v312 = vld [vmem:[#allocation5 + $0xf8] sm:$0xff]
        %v313 = vld [vmem:[#allocation5 + $0x100] sm:$0xff]
        %v314 = vld [vmem:[#allocation5 + $0x108] sm:$0xff]
        %v315 = vld [vmem:[#allocation5 + $0x110] sm:$0xff]
        %v316 = vld [vmem:[#allocation5 + $0x118] sm:$0xff]
        %v317 = vld [vmem:[#allocation5 + $0x120] sm:$0xff]
        %v318 = vld [vmem:[#allocation5 + $0x128] sm:$0xff]
        %v319 = vld [vmem:[#allocation5 + $0x130] sm:$0xff]
        %v320 = vld [vmem:[#allocation5 + $0x138] sm:$0xff]
        %v321 = vld [vmem:[#allocation5 + $0x140] sm:$0xff]
        %v322 = vld [vmem:[#allocation5 + $0x148] sm:$0xff]
        %v323 = vld [vmem:[#allocation5 + $0x150] sm:$0xff]
        %v324 = vld [vmem:[#allocation5 + $0x158] sm:$0xff]
        %v325 = vld [vmem:[#allocation5 + $0x160] sm:$0xff]
        %v326 = vld [vmem:[#allocation5 + $0x168] sm:$0xff]
        %v327 = vld [vmem:[#allocation5 + $0x170] sm:$0xff]
        %v328 = vld [vmem:[#allocation5 + $0x178] sm:$0xff]
        %v329 = vld [vmem:[#allocation5 + $0x180] sm:$0xff]
        %v330 = vld [vmem:[#allocation5 + $0x188] sm:$0xff]
        %v331 = vld [vmem:[#allocation7] sm:$0xff]
        %v332 = vld [vmem:[#allocation7 + $0x8] sm:$0xff]
        %v333 = vld [vmem:[#allocation7 + $0x10] sm:$0xff]
        %v334 = vld [vmem:[#allocation7 + $0x18] sm:$0xff]
        %v335 = vld [vmem:[#allocation7 + $0x20] sm:$0xff]
        %v336 = vld [vmem:[#allocation7 + $0x28] sm:$0xff]
        %v337 = vld [vmem:[#allocation7 + $0x30] sm:$0xff]
        %v338 = vld [vmem:[#allocation7 + $0x38] sm:$0xff]
        %v339 = vld [vmem:[#allocation7 + $0x40] sm:$0xff]
        %v340 = vld [vmem:[#allocation7 + $0x48] sm:$0xff]
        %v341 = vld [vmem:[#allocation7 + $0x50] sm:$0xff]
        %v342 = vld [vmem:[#allocation7 + $0x58] sm:$0xff]
        %v343 = vld [vmem:[#allocation7 + $0x60] sm:$0xff]
        %v344 = vld [vmem:[#allocation7 + $0x68] sm:$0xff]
        %v345 = vld [vmem:[#allocation7 + $0x70] sm:$0xff]
        %v346 = vld [vmem:[#allocation7 + $0x78] sm:$0xff]
        %v347 = vld [vmem:[#allocation7 + $0x80] sm:$0xff]
        %v348 = vld [vmem:[#allocation7 + $0x88] sm:$0xff]
        %v349 = vld [vmem:[#allocation7 + $0x90] sm:$0xff]
        %v350 = vld [vmem:[#allocation7 + $0x98] sm:$0xff]
        %v351 = vld [vmem:[#allocation7 + $0xa0] sm:$0xff]
        %v352 = vld [vmem:[#allocation7 + $0xa8] sm:$0xff]
        %v353 = vld [vmem:[#allocation7 + $0xb0] sm:$0xff]
        %v354 = vld [vmem:[#allocation7 + $0xb8] sm:$0xff]
        %v355 = vld [vmem:[#allocation7 + $0xc0] sm:$0xff]
        %v356 = vld [vmem:[#allocation7 + $0xc8] sm:$0xff]
        %v357 = vld [vmem:[#allocation7 + $0xd0] sm:$0xff]
        %v358 = vld [vmem:[#allocation7 + $0xd8] sm:$0xff]
        %v359 = vld [vmem:[#allocation7 + $0xe0] sm:$0xff]
        %v360 = vld [vmem:[#allocation7 + $0xe8] sm:$0xff]
        %v361 = vld [vmem:[#allocation7 + $0xf0] sm:$0xff]
        %v362 = vld [vmem:[#allocation7 + $0xf8] sm:$0xff]
        %v363 = vld [vmem:[#allocation7 + $0x100] sm:$0xff]
        %v364 = vld [vmem:[#allocation7 + $0x108] sm:$0xff]
        %v365 = vld [vmem:[#allocation7 + $0x110] sm:$0xff]
        %v366 = vld [vmem:[#allocation7 + $0x118] sm:$0xff]
        %v367 = vld [vmem:[#allocation7 + $0x120] sm:$0xff]
        %v368 = vld [vmem:[#allocation7 + $0x128] sm:$0xff]
        %v369 = vld [vmem:[#allocation7 + $0x130] sm:$0xff]
        %v370 = vld [vmem:[#allocation7 + $0x138] sm:$0xff]
        %v371 = vld [vmem:[#allocation7 + $0x140] sm:$0xff]
        %v372 = vld [vmem:[#allocation7 + $0x148] sm:$0xff]
        %v373 = vld [vmem:[#allocation7 + $0x150] sm:$0xff]
        %v374 = vld [vmem:[#allocation7 + $0x158] sm:$0xff]
        %v375 = vld [vmem:[#allocation7 + $0x160] sm:$0xff]
        %v376 = vld [vmem:[#allocation7 + $0x168] sm:$0xff]
        %v377 = vld [vmem:[#allocation7 + $0x170] sm:$0xff]
        %v378 = vld [vmem:[#allocation7 + $0x178] sm:$0xff]
        %v379 = vld [vmem:[#allocation7 + $0x180] sm:$0xff]
        %v380 = vld [vmem:[#allocation7 + $0x188] sm:$0xff]
        %vm381 = vcmask 654336
        %v383 = vsel %vm381, %v280, 0
        %v385 = vand.u32 %v282, 4294901760
        %386 = vmatprep.subr.mxu0 %v385
        %v387 = vand.u32 %v281, 4294901760
        %388 = vmatpush1.msra.mxu0 %v387
        %v389 = vand.u32 %v287, 4294901760
        %390 = vmatprep.subr.mxu0 %v389
        %v391 = vand.u32 %v286, 4294901760
        %392 = vmatpush1.msra.mxu0 %v391
        %v393 = vand.u32 %v292, 4294901760
        %394 = vmatprep.subr.mxu0 %v393
        %v395 = vand.u32 %v291, 4294901760
        %396 = vmatpush1.msra.mxu0 %v395
        %v397 = vand.u32 %v297, 4294901760
        %398 = vmatprep.subr.mxu0 %v397
        %v399 = vand.u32 %v296, 4294901760
        %400 = vmatpush1.msra.mxu0 %v399
        %v401 = vand.u32 %v302, 4294901760
        %402 = vmatprep.subr.mxu0 %v401
        %v403 = vand.u32 %v301, 4294901760
        %404 = vmatpush1.msra.mxu0 %v403
        %v405 = vand.u32 %v307, 4294901760
        %406 = vmatprep.subr.mxu0 %v405
        %v407 = vand.u32 %v306, 4294901760
        %408 = vmatpush1.msra.mxu0 %v407
        %v409 = vand.u32 %v312, 4294901760
        %410 = vmatprep.subr.mxu0 %v409
        %v411 = vand.u32 %v311, 4294901760
        %412 = vmatpush1.msra.mxu0 %v411
        %v413 = vand.u32 %v317, 4294901760
        %414 = vmatprep.subr.mxu0 %v413
        %v415 = vand.u32 %v316, 4294901760
        %416 = vmatpush1.msra.mxu0 %v415
        %v417 = vand.u32 %v322, 4294901760
        %418 = vmatprep.subr.mxu0 %v417
        %v419 = vand.u32 %v321, 4294901760
        %420 = vmatpush1.msra.mxu0 %v419
        %v421 = vand.u32 %v327, 4294901760
        %422 = vmatprep.subr.mxu0 %v421
        %v423 = vand.u32 %v326, 4294901760
        %424 = vmatpush1.msra.mxu0 %v423
        %425 = vmatprep.subr.mxu0 0.0
        %426 = vmatpush1.msra.mxu0 0.0
        %427 = vmatprep.subr.mxu0 0.0
        %428 = vmatpush1.msra.mxu0 0.0
        %429 = vmatprep.subr.mxu0 0.0
        %430 = vmatpush1.msra.mxu0 0.0
        %431 = vmatprep.subr.mxu0 0.0
        %432 = vmatpush1.msra.mxu0 0.0
        %433 = vmatprep.subr.mxu0 0.0
        %434 = vmatpush1.msra.mxu0 0.0
        %435 = vmatprep.subr.mxu0 0.0
        %436 = vmatpush1.msra.mxu0 0.0
        %437 = vmatprep.subr.mxu0 0.0
        %438 = vmatpush1.msra.mxu0 0.0
        %439 = vmatprep.subr.mxu0 0.0
        %440 = vmatpush1.msra.mxu0 0.0
        %441 = vmatprep.subr.mxu0 0.0
        %442 = vmatpush1.msra.mxu0 0.0
        %443 = vmatprep.subr.mxu0 0.0
        %444 = vmatpush1.msra.mxu0 0.0
        %445 = vmatprep.subr.mxu0 0.0
        %446 = vmatpush1.msra.mxu0 0.0
        %447 = vmatprep.subr.mxu0 0.0
        %448 = vmatpush1.msra.mxu0 0.0
        %449 = vmatprep.subr.mxu0 0.0
        %450 = vmatpush1.msra.mxu0 0.0
        %451 = vmatprep.subr.mxu0 0.0
        %452 = vmatpush1.msra.mxu0 0.0
        %453 = vmatprep.subr.mxu0 0.0
        %454 = vmatpush1.msra.mxu0 0.0
        %455 = vmatprep.subr.mxu0 0.0
        %456 = vmatpush1.msra.mxu0 0.0
        %457 = vmatprep.subr.mxu0 0.0
        %458 = vmatpush1.msra.mxu0 0.0
        %459 = vmatprep.subr.mxu0 0.0
        %460 = vmatpush1.msra.mxu0 0.0
        %461 = vmatprep.subr.mxu0 0.0
        %462 = vmatpush1.msra.mxu0 0.0
        %463 = vmatprep.subr.mxu0 0.0
        %464 = vmatpush1.msra.mxu0 0.0
        %465 = vmatprep.subr.mxu0 0.0
        %466 = vmatpush1.msra.mxu0 0.0
        %467 = vmatprep.subr.mxu0 0.0
        %468 = vmatpush1.msra.mxu0 0.0
        %469 = vmatprep.mubr.f32.mxu0 0.0
        %v470 = vand.u32 %v383, 4294901760
        %v471 = vsub.f32 %v383, %v470
        %v472 = vand.u32 %v471, 4294901760
        %v473 = vsub.f32 %v471, %v472
        %v474 = vand.u32 %v473, 4294901760
        %475 = vmatmul.mubr.f32.gmra.mrb[0].mxu0 %v474
        %v476 = vpop.f32.mrb[0].mxu0
        %v477 = vadd.f32 0.0, %v476
        %v478 = vpop.f32.mrb[0].mxu0
        %v479 = vadd.f32 0.0, %v478
        %480 = vdwg.mxu0
        %v481 = vand.u32 %v282, 4294901760
        %v482 = vsub.f32 %v282, %v481
        %v483 = vand.u32 %v482, 4294901760
        %v484 = vsub.f32 %v482, %v483
        %v485 = vand.u32 %v484, 4294901760
        %486 = vmatprep.subr.mxu0 %v485
        %v487 = vand.u32 %v281, 4294901760
        %v488 = vsub.f32 %v281, %v487
        %v489 = vand.u32 %v488, 4294901760
        %v490 = vsub.f32 %v488, %v489
        %v491 = vand.u32 %v490, 4294901760
        %492 = vmatpush1.msra.mxu0 %v491
        %v493 = vand.u32 %v287, 4294901760
        %v494 = vsub.f32 %v287, %v493
        %v495 = vand.u32 %v494, 4294901760
        %v496 = vsub.f32 %v494, %v495
        %v497 = vand.u32 %v496, 4294901760
        %498 = vmatprep.subr.mxu0 %v497
        %v499 = vand.u32 %v286, 4294901760
        %v500 = vsub.f32 %v286, %v499
        %v501 = vand.u32 %v500, 4294901760
        %v502 = vsub.f32 %v500, %v501
        %v503 = vand.u32 %v502, 4294901760
        %504 = vmatpush1.msra.mxu0 %v503
        %v505 = vand.u32 %v292, 4294901760
        %v506 = vsub.f32 %v292, %v505
        %v507 = vand.u32 %v506, 4294901760
        %v508 = vsub.f32 %v506, %v507
        %v509 = vand.u32 %v508, 4294901760
        %510 = vmatprep.subr.mxu0 %v509
        %v511 = vand.u32 %v291, 4294901760
        %v512 = vsub.f32 %v291, %v511
        %v513 = vand.u32 %v512, 4294901760
        %v514 = vsub.f32 %v512, %v513
        %v515 = vand.u32 %v514, 4294901760
        %516 = vmatpush1.msra.mxu0 %v515
        %v517 = vand.u32 %v297, 4294901760
        %v518 = vsub.f32 %v297, %v517
        %v519 = vand.u32 %v518, 4294901760
        %v520 = vsub.f32 %v518, %v519
        %v521 = vand.u32 %v520, 4294901760
        %522 = vmatprep.subr.mxu0 %v521
        %v523 = vand.u32 %v296, 4294901760
        %v524 = vsub.f32 %v296, %v523
        %v525 = vand.u32 %v524, 4294901760
        %v526 = vsub.f32 %v524, %v525
        %v527 = vand.u32 %v526, 4294901760
        %528 = vmatpush1.msra.mxu0 %v527
        %v529 = vand.u32 %v302, 4294901760
        %v530 = vsub.f32 %v302, %v529
        %v531 = vand.u32 %v530, 4294901760
        %v532 = vsub.f32 %v530, %v531
        %v533 = vand.u32 %v532, 4294901760
        %534 = vmatprep.subr.mxu0 %v533
        %v535 = vand.u32 %v301, 4294901760
        %v536 = vsub.f32 %v301, %v535
        %v537 = vand.u32 %v536, 4294901760
        %v538 = vsub.f32 %v536, %v537
        %v539 = vand.u32 %v538, 4294901760
        %540 = vmatpush1.msra.mxu0 %v539
        %v541 = vand.u32 %v307, 4294901760
        %v542 = vsub.f32 %v307, %v541
        %v543 = vand.u32 %v542, 4294901760
        %v544 = vsub.f32 %v542, %v543
        %v545 = vand.u32 %v544, 4294901760
        %546 = vmatprep.subr.mxu0 %v545
        %v547 = vand.u32 %v306, 4294901760
        %v548 = vsub.f32 %v306, %v547
        %v549 = vand.u32 %v548, 4294901760
        %v550 = vsub.f32 %v548, %v549
        %v551 = vand.u32 %v550, 4294901760
        %552 = vmatpush1.msra.mxu0 %v551
        %v553 = vand.u32 %v312, 4294901760
        %v554 = vsub.f32 %v312, %v553
        %v555 = vand.u32 %v554, 4294901760
        %v556 = vsub.f32 %v554, %v555
        %v557 = vand.u32 %v556, 4294901760
        %558 = vmatprep.subr.mxu0 %v557
        %v559 = vand.u32 %v311, 4294901760
        %v560 = vsub.f32 %v311, %v559
        %v561 = vand.u32 %v560, 4294901760
        %v562 = vsub.f32 %v560, %v561
        %v563 = vand.u32 %v562, 4294901760
        %564 = vmatpush1.msra.mxu0 %v563
        %v565 = vand.u32 %v317, 4294901760
        %v566 = vsub.f32 %v317, %v565
        %v567 = vand.u32 %v566, 4294901760
        %v568 = vsub.f32 %v566, %v567
        %v569 = vand.u32 %v568, 4294901760
        %570 = vmatprep.subr.mxu0 %v569
        %v571 = vand.u32 %v316, 4294901760
        %v572 = vsub.f32 %v316, %v571
        %v573 = vand.u32 %v572, 4294901760
        %v574 = vsub.f32 %v572, %v573
        %v575 = vand.u32 %v574, 4294901760
        %576 = vmatpush1.msra.mxu0 %v575
        %v577 = vand.u32 %v322, 4294901760
        %v578 = vsub.f32 %v322, %v577
        %v579 = vand.u32 %v578, 4294901760
        %v580 = vsub.f32 %v578, %v579
        %v581 = vand.u32 %v580, 4294901760
        %582 = vmatprep.subr.mxu0 %v581
        %v583 = vand.u32 %v321, 4294901760
        %v584 = vsub.f32 %v321, %v583
        %v585 = vand.u32 %v584, 4294901760
        %v586 = vsub.f32 %v584, %v585
        %v587 = vand.u32 %v586, 4294901760
        %588 = vmatpush1.msra.mxu0 %v587
        %v589 = vand.u32 %v327, 4294901760
        %v590 = vsub.f32 %v327, %v589
        %v591 = vand.u32 %v590, 4294901760
        %v592 = vsub.f32 %v590, %v591
        %v593 = vand.u32 %v592, 4294901760
        %594 = vmatprep.subr.mxu0 %v593
        %v595 = vand.u32 %v326, 4294901760
        %v596 = vsub.f32 %v326, %v595
        %v597 = vand.u32 %v596, 4294901760
        %v598 = vsub.f32 %v596, %v597
        %v599 = vand.u32 %v598, 4294901760
        %600 = vmatpush1.msra.mxu0 %v599
        %601 = vmatprep.subr.mxu0 0.0
        %602 = vmatpush1.msra.mxu0 0.0
        %603 = vmatprep.subr.mxu0 0.0
        %604 = vmatpush1.msra.mxu0 0.0
        %605 = vmatprep.subr.mxu0 0.0
        %606 = vmatpush1.msra.mxu0 0.0
        %607 = vmatprep.subr.mxu0 0.0
        %608 = vmatpush1.msra.mxu0 0.0
        %609 = vmatprep.subr.mxu0 0.0
        %610 = vmatpush1.msra.mxu0 0.0
        %611 = vmatprep.subr.mxu0 0.0
        %612 = vmatpush1.msra.mxu0 0.0
        %613 = vmatprep.subr.mxu0 0.0
        %614 = vmatpush1.msra.mxu0 0.0
        %615 = vmatprep.subr.mxu0 0.0
        %616 = vmatpush1.msra.mxu0 0.0
        %617 = vmatprep.subr.mxu0 0.0
        %618 = vmatpush1.msra.mxu0 0.0
        %619 = vmatprep.subr.mxu0 0.0
        %620 = vmatpush1.msra.mxu0 0.0
        %621 = vmatprep.subr.mxu0 0.0
        %622 = vmatpush1.msra.mxu0 0.0
        %623 = vmatprep.subr.mxu0 0.0
        %624 = vmatpush1.msra.mxu0 0.0
        %625 = vmatprep.subr.mxu0 0.0
        %626 = vmatpush1.msra.mxu0 0.0
        %627 = vmatprep.subr.mxu0 0.0
        %628 = vmatpush1.msra.mxu0 0.0
        %629 = vmatprep.subr.mxu0 0.0
        %630 = vmatpush1.msra.mxu0 0.0
        %631 = vmatprep.subr.mxu0 0.0
        %632 = vmatpush1.msra.mxu0 0.0
        %633 = vmatprep.subr.mxu0 0.0
        %634 = vmatpush1.msra.mxu0 0.0
        %635 = vmatprep.subr.mxu0 0.0
        %636 = vmatpush1.msra.mxu0 0.0
        %637 = vmatprep.subr.mxu0 0.0
        %638 = vmatpush1.msra.mxu0 0.0
        %639 = vmatprep.subr.mxu0 0.0
        %640 = vmatpush1.msra.mxu0 0.0
        %641 = vmatprep.subr.mxu0 0.0
        %642 = vmatpush1.msra.mxu0 0.0
        %643 = vmatprep.subr.mxu0 0.0
        %644 = vmatpush1.msra.mxu0 0.0
        %645 = vmatprep.mubr.f32.mxu0 0.0
        %v646 = vand.u32 %v383, 4294901760
        %647 = vmatmul.mubr.f32.gmra.mrb[0].mxu0 %v646
        %v648 = vpop.f32.mrb[0].mxu0
        %v649 = vadd.f32 %v477, %v648
        %v650 = vpop.f32.mrb[0].mxu0
        %v651 = vadd.f32 %v479, %v650
        %652 = vdwg.mxu0
        %v653 = vand.u32 %v282, 4294901760
        %v654 = vsub.f32 %v282, %v653
        %655 = vmatprep.subr.mxu0 %v654
        %v656 = vand.u32 %v281, 4294901760
        %v657 = vsub.f32 %v281, %v656
        %658 = vmatpush1.msra.mxu0 %v657
        %v659 = vand.u32 %v287, 4294901760
        %v660 = vsub.f32 %v287, %v659
        %661 = vmatprep.subr.mxu0 %v660
        %v662 = vand.u32 %v286, 4294901760
        %v663 = vsub.f32 %v286, %v662
        %664 = vmatpush1.msra.mxu0 %v663
        %v665 = vand.u32 %v292, 4294901760
        %v666 = vsub.f32 %v292, %v665
        %667 = vmatprep.subr.mxu0 %v666
        %v668 = vand.u32 %v291, 4294901760
        %v669 = vsub.f32 %v291, %v668
        %670 = vmatpush1.msra.mxu0 %v669
        %v671 = vand.u32 %v297, 4294901760
        %v672 = vsub.f32 %v297, %v671
        %673 = vmatprep.subr.mxu0 %v672
        %v674 = vand.u32 %v296, 4294901760
        %v675 = vsub.f32 %v296, %v674
        %676 = vmatpush1.msra.mxu0 %v675
        %v677 = vand.u32 %v302, 4294901760
        %v678 = vsub.f32 %v302, %v677
        %679 = vmatprep.subr.mxu0 %v678
        %v680 = vand.u32 %v301, 4294901760
        %v681 = vsub.f32 %v301, %v680
        %682 = vmatpush1.msra.mxu0 %v681
        %v683 = vand.u32 %v307, 4294901760
        %v684 = vsub.f32 %v307, %v683
        %685 = vmatprep.subr.mxu0 %v684
        %v686 = vand.u32 %v306, 4294901760
        %v687 = vsub.f32 %v306, %v686
        %688 = vmatpush1.msra.mxu0 %v687
        %v689 = vand.u32 %v312, 4294901760
        %v690 = vsub.f32 %v312, %v689
        %691 = vmatprep.subr.mxu0 %v690
        %v692 = vand.u32 %v311, 4294901760
        %v693 = vsub.f32 %v311, %v692
        %694 = vmatpush1.msra.mxu0 %v693
        %v695 = vand.u32 %v317, 4294901760
        %v696 = vsub.f32 %v317, %v695
        %697 = vmatprep.subr.mxu0 %v696
        %v698 = vand.u32 %v316, 4294901760
        %v699 = vsub.f32 %v316, %v698
        %700 = vmatpush1.msra.mxu0 %v699
        %v701 = vand.u32 %v322, 4294901760
        %v702 = vsub.f32 %v322, %v701
        %703 = vmatprep.subr.mxu0 %v702
        %v704 = vand.u32 %v321, 4294901760
        %v705 = vsub.f32 %v321, %v704
        %706 = vmatpush1.msra.mxu0 %v705
        %v707 = vand.u32 %v327, 4294901760
        %v708 = vsub.f32 %v327, %v707
        %709 = vmatprep.subr.mxu0 %v708
        %v710 = vand.u32 %v326, 4294901760
        %v711 = vsub.f32 %v326, %v710
        %712 = vmatpush1.msra.mxu0 %v711
        %713 = vmatprep.subr.mxu0 0.0
        %714 = vmatpush1.msra.mxu0 0.0
        %715 = vmatprep.subr.mxu0 0.0
        %716 = vmatpush1.msra.mxu0 0.0
        %717 = vmatprep.subr.mxu0 0.0
        %718 = vmatpush1.msra.mxu0 0.0
        %719 = vmatprep.subr.mxu0 0.0
        %720 = vmatpush1.msra.mxu0 0.0
        %721 = vmatprep.subr.mxu0 0.0
        %722 = vmatpush1.msra.mxu0 0.0
        %723 = vmatprep.subr.mxu0 0.0
        %724 = vmatpush1.msra.mxu0 0.0
        %725 = vmatprep.subr.mxu0 0.0
        %726 = vmatpush1.msra.mxu0 0.0
        %727 = vmatprep.subr.mxu0 0.0
        %728 = vmatpush1.msra.mxu0 0.0
        %729 = vmatprep.subr.mxu0 0.0
        %730 = vmatpush1.msra.mxu0 0.0
        %731 = vmatprep.subr.mxu0 0.0
        %732 = vmatpush1.msra.mxu0 0.0
        %733 = vmatprep.subr.mxu0 0.0
        %734 = vmatpush1.msra.mxu0 0.0
        %735 = vmatprep.subr.mxu0 0.0
        %736 = vmatpush1.msra.mxu0 0.0
        %737 = vmatprep.subr.mxu0 0.0
        %738 = vmatpush1.msra.mxu0 0.0
        %739 = vmatprep.subr.mxu0 0.0
        %740 = vmatpush1.msra.mxu0 0.0
        %741 = vmatprep.subr.mxu0 0.0
        %742 = vmatpush1.msra.mxu0 0.0
        %743 = vmatprep.subr.mxu0 0.0
        %744 = vmatpush1.msra.mxu0 0.0
        %745 = vmatprep.subr.mxu0 0.0
        %746 = vmatpush1.msra.mxu0 0.0
        %747 = vmatprep.subr.mxu0 0.0
        %748 = vmatpush1.msra.mxu0 0.0
        %749 = vmatprep.subr.mxu0 0.0
        %750 = vmatpush1.msra.mxu0 0.0
        %751 = vmatprep.subr.mxu0 0.0
        %752 = vmatpush1.msra.mxu0 0.0
        %753 = vmatprep.subr.mxu0 0.0
        %754 = vmatpush1.msra.mxu0 0.0
        %755 = vmatprep.subr.mxu0 0.0
        %756 = vmatpush1.msra.mxu0 0.0
        %757 = vmatprep.mubr.f32.mxu0 0.0
        %v758 = vand.u32 %v383, 4294901760
        %v759 = vsub.f32 %v383, %v758
        %760 = vmatmul.mubr.f32.gmra.mrb[0].mxu0 %v759
        %v761 = vpop.f32.mrb[0].mxu0
        %v762 = vadd.f32 %v649, %v761
        %v763 = vpop.f32.mrb[0].mxu0
        %v764 = vadd.f32 %v651, %v763
        %765 = vdwg.mxu0
        %v766 = vand.u32 %v282, 4294901760
        %767 = vmatprep.subr.mxu0 %v766
        %v768 = vand.u32 %v281, 4294901760
        %769 = vmatpush1.msra.mxu0 %v768
        %v770 = vand.u32 %v287, 4294901760
        %771 = vmatprep.subr.mxu0 %v770
        %v772 = vand.u32 %v286, 4294901760
        %773 = vmatpush1.msra.mxu0 %v772
        %v774 = vand.u32 %v292, 4294901760
        %775 = vmatprep.subr.mxu0 %v774
        %v776 = vand.u32 %v291, 4294901760
        %777 = vmatpush1.msra.mxu0 %v776
        %v778 = vand.u32 %v297, 4294901760
        %779 = vmatprep.subr.mxu0 %v778
        %v780 = vand.u32 %v296, 4294901760
        %781 = vmatpush1.msra.mxu0 %v780
        %v782 = vand.u32 %v302, 4294901760
        %783 = vmatprep.subr.mxu0 %v782
        %v784 = vand.u32 %v301, 4294901760
        %785 = vmatpush1.msra.mxu0 %v784
        %v786 = vand.u32 %v307, 4294901760
        %787 = vmatprep.subr.mxu0 %v786
        %v788 = vand.u32 %v306, 4294901760
        %789 = vmatpush1.msra.mxu0 %v788
        %v790 = vand.u32 %v312, 4294901760
        %791 = vmatprep.subr.mxu0 %v790
        %v792 = vand.u32 %v311, 4294901760
        %793 = vmatpush1.msra.mxu0 %v792
        %v794 = vand.u32 %v317, 4294901760
        %795 = vmatprep.subr.mxu0 %v794
        %v796 = vand.u32 %v316, 4294901760
        %797 = vmatpush1.msra.mxu0 %v796
        %v798 = vand.u32 %v322, 4294901760
        %799 = vmatprep.subr.mxu0 %v798
        %v800 = vand.u32 %v321, 4294901760
        %801 = vmatpush1.msra.mxu0 %v800
        %v802 = vand.u32 %v327, 4294901760
        %803 = vmatprep.subr.mxu0 %v802
        %v804 = vand.u32 %v326, 4294901760
        %805 = vmatpush1.msra.mxu0 %v804
        %806 = vmatprep.subr.mxu0 0.0
        %807 = vmatpush1.msra.mxu0 0.0
        %808 = vmatprep.subr.mxu0 0.0
        %809 = vmatpush1.msra.mxu0 0.0
        %810 = vmatprep.subr.mxu0 0.0
        %811 = vmatpush1.msra.mxu0 0.0
        %812 = vmatprep.subr.mxu0 0.0
        %813 = vmatpush1.msra.mxu0 0.0
        %814 = vmatprep.subr.mxu0 0.0
        %815 = vmatpush1.msra.mxu0 0.0
        %816 = vmatprep.subr.mxu0 0.0
        %817 = vmatpush1.msra.mxu0 0.0
        %818 = vmatprep.subr.mxu0 0.0
        %819 = vmatpush1.msra.mxu0 0.0
        %820 = vmatprep.subr.mxu0 0.0
        %821 = vmatpush1.msra.mxu0 0.0
        %822 = vmatprep.subr.mxu0 0.0
        %823 = vmatpush1.msra.mxu0 0.0
        %824 = vmatprep.subr.mxu0 0.0
        %825 = vmatpush1.msra.mxu0 0.0
        %826 = vmatprep.subr.mxu0 0.0
        %827 = vmatpush1.msra.mxu0 0.0
        %828 = vmatprep.subr.mxu0 0.0
        %829 = vmatpush1.msra.mxu0 0.0
        %830 = vmatprep.subr.mxu0 0.0
        %831 = vmatpush1.msra.mxu0 0.0
        %832 = vmatprep.subr.mxu0 0.0
        %833 = vmatpush1.msra.mxu0 0.0
        %834 = vmatprep.subr.mxu0 0.0
        %835 = vmatpush1.msra.mxu0 0.0
        %836 = vmatprep.subr.mxu0 0.0
        %837 = vmatpush1.msra.mxu0 0.0
        %838 = vmatprep.subr.mxu0 0.0
        %839 = vmatpush1.msra.mxu0 0.0
        %840 = vmatprep.subr.mxu0 0.0
        %841 = vmatpush1.msra.mxu0 0.0
        %842 = vmatprep.subr.mxu0 0.0
        %843 = vmatpush1.msra.mxu0 0.0
        %844 = vmatprep.subr.mxu0 0.0
        %845 = vmatpush1.msra.mxu0 0.0
        %846 = vmatprep.subr.mxu0 0.0
        %847 = vmatpush1.msra.mxu0 0.0
        %848 = vmatprep.subr.mxu0 0.0
        %849 = vmatpush1.msra.mxu0 0.0
        %850 = vmatprep.mubr.f32.mxu0 0.0
        %v851 = vand.u32 %v383, 4294901760
        %v852 = vsub.f32 %v383, %v851
        %v853 = vand.u32 %v852, 4294901760
        %854 = vmatmul.mubr.f32.gmra.mrb[0].mxu0 %v853
        %v855 = vpop.f32.mrb[0].mxu0
        %v856 = vadd.f32 %v762, %v855
        %v857 = vpop.f32.mrb[0].mxu0
        %v858 = vadd.f32 %v764, %v857
        %859 = vdwg.mxu0
        %v860 = vand.u32 %v282, 4294901760
        %v861 = vsub.f32 %v282, %v860
        %v862 = vand.u32 %v861, 4294901760
        %863 = vmatprep.subr.mxu0 %v862
        %v864 = vand.u32 %v281, 4294901760
        %v865 = vsub.f32 %v281, %v864
        %v866 = vand.u32 %v865, 4294901760
        %867 = vmatpush1.msra.mxu0 %v866
        %v868 = vand.u32 %v287, 4294901760
        %v869 = vsub.f32 %v287, %v868
        %v870 = vand.u32 %v869, 4294901760
        %871 = vmatprep.subr.mxu0 %v870
        %v872 = vand.u32 %v286, 4294901760
        %v873 = vsub.f32 %v286, %v872
        %v874 = vand.u32 %v873, 4294901760
        %875 = vmatpush1.msra.mxu0 %v874
        %v876 = vand.u32 %v292, 4294901760
        %v877 = vsub.f32 %v292, %v876
        %v878 = vand.u32 %v877, 4294901760
        %879 = vmatprep.subr.mxu0 %v878
        %v880 = vand.u32 %v291, 4294901760
        %v881 = vsub.f32 %v291, %v880
        %v882 = vand.u32 %v881, 4294901760
        %883 = vmatpush1.msra.mxu0 %v882
        %v884 = vand.u32 %v297, 4294901760
        %v885 = vsub.f32 %v297, %v884
        %v886 = vand.u32 %v885, 4294901760
        %887 = vmatprep.subr.mxu0 %v886
        %v888 = vand.u32 %v296, 4294901760
        %v889 = vsub.f32 %v296, %v888
        %v890 = vand.u32 %v889, 4294901760
        %891 = vmatpush1.msra.mxu0 %v890
        %v892 = vand.u32 %v302, 4294901760
        %v893 = vsub.f32 %v302, %v892
        %v894 = vand.u32 %v893, 4294901760
        %895 = vmatprep.subr.mxu0 %v894
        %v896 = vand.u32 %v301, 4294901760
        %v897 = vsub.f32 %v301, %v896
        %v898 = vand.u32 %v897, 4294901760
        %899 = vmatpush1.msra.mxu0 %v898
        %v900 = vand.u32 %v307, 4294901760
        %v901 = vsub.f32 %v307, %v900
        %v902 = vand.u32 %v901, 4294901760
        %903 = vmatprep.subr.mxu0 %v902
        %v904 = vand.u32 %v306, 4294901760
        %v905 = vsub.f32 %v306, %v904
        %v906 = vand.u32 %v905, 4294901760
        %907 = vmatpush1.msra.mxu0 %v906
        %v908 = vand.u32 %v312, 4294901760
        %v909 = vsub.f32 %v312, %v908
        %v910 = vand.u32 %v909, 4294901760
        %911 = vmatprep.subr.mxu0 %v910
        %v912 = vand.u32 %v311, 4294901760
        %v913 = vsub.f32 %v311, %v912
        %v914 = vand.u32 %v913, 4294901760
        %915 = vmatpush1.msra.mxu0 %v914
        %v916 = vand.u32 %v317, 4294901760
        %v917 = vsub.f32 %v317, %v916
        %v918 = vand.u32 %v917, 4294901760
        %919 = vmatprep.subr.mxu0 %v918
        %v920 = vand.u32 %v316, 4294901760
        %v921 = vsub.f32 %v316, %v920
        %v922 = vand.u32 %v921, 4294901760
        %923 = vmatpush1.msra.mxu0 %v922
        %v924 = vand.u32 %v322, 4294901760
        %v925 = vsub.f32 %v322, %v924
        %v926 = vand.u32 %v925, 4294901760
        %927 = vmatprep.subr.mxu0 %v926
        %v928 = vand.u32 %v321, 4294901760
        %v929 = vsub.f32 %v321, %v928
        %v930 = vand.u32 %v929, 4294901760
        %931 = vmatpush1.msra.mxu0 %v930
        %v932 = vand.u32 %v327, 4294901760
        %v933 = vsub.f32 %v327, %v932
        %v934 = vand.u32 %v933, 4294901760
        %935 = vmatprep.subr.mxu0 %v934
        %v936 = vand.u32 %v326, 4294901760
        %v937 = vsub.f32 %v326, %v936
        %v938 = vand.u32 %v937, 4294901760
        %939 = vmatpush1.msra.mxu0 %v938
        %940 = vmatprep.subr.mxu0 0.0
        %941 = vmatpush1.msra.mxu0 0.0
        %942 = vmatprep.subr.mxu0 0.0
        %943 = vmatpush1.msra.mxu0 0.0
        %944 = vmatprep.subr.mxu0 0.0
        %945 = vmatpush1.msra.mxu0 0.0
        %946 = vmatprep.subr.mxu0 0.0
        %947 = vmatpush1.msra.mxu0 0.0
        %948 = vmatprep.subr.mxu0 0.0
        %949 = vmatpush1.msra.mxu0 0.0
        %950 = vmatprep.subr.mxu0 0.0
        %951 = vmatpush1.msra.mxu0 0.0
        %952 = vmatprep.subr.mxu0 0.0
        %953 = vmatpush1.msra.mxu0 0.0
        %954 = vmatprep.subr.mxu0 0.0
        %955 = vmatpush1.msra.mxu0 0.0
        %956 = vmatprep.subr.mxu0 0.0
        %957 = vmatpush1.msra.mxu0 0.0
        %958 = vmatprep.subr.mxu0 0.0
        %959 = vmatpush1.msra.mxu0 0.0
        %960 = vmatprep.subr.mxu0 0.0
        %961 = vmatpush1.msra.mxu0 0.0
        %962 = vmatprep.subr.mxu0 0.0
        %963 = vmatpush1.msra.mxu0 0.0
        %964 = vmatprep.subr.mxu0 0.0
        %965 = vmatpush1.msra.mxu0 0.0
        %966 = vmatprep.subr.mxu0 0.0
        %967 = vmatpush1.msra.mxu0 0.0
        %968 = vmatprep.subr.mxu0 0.0
        %969 = vmatpush1.msra.mxu0 0.0
        %970 = vmatprep.subr.mxu0 0.0
        %971 = vmatpush1.msra.mxu0 0.0
        %972 = vmatprep.subr.mxu0 0.0
        %973 = vmatpush1.msra.mxu0 0.0
        %974 = vmatprep.subr.mxu0 0.0
        %975 = vmatpush1.msra.mxu0 0.0
        %976 = vmatprep.subr.mxu0 0.0
        %977 = vmatpush1.msra.mxu0 0.0
        %978 = vmatprep.subr.mxu0 0.0
        %979 = vmatpush1.msra.mxu0 0.0
        %980 = vmatprep.subr.mxu0 0.0
        %981 = vmatpush1.msra.mxu0 0.0
        %982 = vmatprep.subr.mxu0 0.0
        %983 = vmatpush1.msra.mxu0 0.0
        %984 = vmatprep.mubr.f32.mxu0 0.0
        %v985 = vand.u32 %v383, 4294901760
        %986 = vmatmul.mubr.f32.gmra.mrb[0].mxu0 %v985
        %v987 = vpop.f32.mrb[0].mxu0
        %v988 = vadd.f32 %v856, %v987
        %v989 = vpop.f32.mrb[0].mxu0
        %v990 = vadd.f32 %v858, %v989
        %991 = vdwg.mxu0
        %v992 = vand.u32 %v282, 4294901760
        %993 = vmatprep.subr.mxu0 %v992
        %v994 = vand.u32 %v281, 4294901760
        %995 = vmatpush1.msra.mxu0 %v994
        %v996 = vand.u32 %v287, 4294901760
        %997 = vmatprep.subr.mxu0 %v996
        %v998 = vand.u32 %v286, 4294901760
        %999 = vmatpush1.msra.mxu0 %v998
        %v1000 = vand.u32 %v292, 4294901760
        %1001 = vmatprep.subr.mxu0 %v1000
        %v1002 = vand.u32 %v291, 4294901760
        %1003 = vmatpush1.msra.mxu0 %v1002
        %v1004 = vand.u32 %v297, 4294901760
        %1005 = vmatprep.subr.mxu0 %v1004
        %v1006 = vand.u32 %v296, 4294901760
        %1007 = vmatpush1.msra.mxu0 %v1006
        %v1008 = vand.u32 %v302, 4294901760
        %1009 = vmatprep.subr.mxu0 %v1008
        %v1010 = vand.u32 %v301, 4294901760
        %1011 = vmatpush1.msra.mxu0 %v1010
        %v1012 = vand.u32 %v307, 4294901760
        %1013 = vmatprep.subr.mxu0 %v1012
        %v1014 = vand.u32 %v306, 4294901760
        %1015 = vmatpush1.msra.mxu0 %v1014
        %v1016 = vand.u32 %v312, 4294901760
        %1017 = vmatprep.subr.mxu0 %v1016
        %v1018 = vand.u32 %v311, 4294901760
        %1019 = vmatpush1.msra.mxu0 %v1018
        %v1020 = vand.u32 %v317, 4294901760
        %1021 = vmatprep.subr.mxu0 %v1020
        %v1022 = vand.u32 %v316, 4294901760
        %1023 = vmatpush1.msra.mxu0 %v1022
        %v1024 = vand.u32 %v322, 4294901760
        %1025 = vmatprep.subr.mxu0 %v1024
        %v1026 = vand.u32 %v321, 4294901760
        %1027 = vmatpush1.msra.mxu0 %v1026
        %v1028 = vand.u32 %v327, 4294901760
        %1029 = vmatprep.subr.mxu0 %v1028
        %v1030 = vand.u32 %v326, 4294901760
        %1031 = vmatpush1.msra.mxu0 %v1030
        %1032 = vmatprep.subr.mxu0 0.0
        %1033 = vmatpush1.msra.mxu0 0.0
        %1034 = vmatprep.subr.mxu0 0.0
        %1035 = vmatpush1.msra.mxu0 0.0
        %1036 = vmatprep.subr.mxu0 0.0
        %1037 = vmatpush1.msra.mxu0 0.0
        %1038 = vmatprep.subr.mxu0 0.0
        %1039 = vmatpush1.msra.mxu0 0.0
        %1040 = vmatprep.subr.mxu0 0.0
        %1041 = vmatpush1.msra.mxu0 0.0
        %1042 = vmatprep.subr.mxu0 0.0
        %1043 = vmatpush1.msra.mxu0 0.0
        %1044 = vmatprep.subr.mxu0 0.0
        %1045 = vmatpush1.msra.mxu0 0.0
        %1046 = vmatprep.subr.mxu0 0.0
        %1047 = vmatpush1.msra.mxu0 0.0
        %1048 = vmatprep.subr.mxu0 0.0
        %1049 = vmatpush1.msra.mxu0 0.0
        %1050 = vmatprep.subr.mxu0 0.0
        %1051 = vmatpush1.msra.mxu0 0.0
        %1052 = vmatprep.subr.mxu0 0.0
        %1053 = vmatpush1.msra.mxu0 0.0
        %1054 = vmatprep.subr.mxu0 0.0
        %1055 = vmatpush1.msra.mxu0 0.0
        %1056 = vmatprep.subr.mxu0 0.0
        %1057 = vmatpush1.msra.mxu0 0.0
        %1058 = vmatprep.subr.mxu0 0.0
        %1059 = vmatpush1.msra.mxu0 0.0
        %1060 = vmatprep.subr.mxu0 0.0
        %1061 = vmatpush1.msra.mxu0 0.0
        %1062 = vmatprep.subr.mxu0 0.0
        %1063 = vmatpush1.msra.mxu0 0.0
        %1064 = vmatprep.subr.mxu0 0.0
        %1065 = vmatpush1.msra.mxu0 0.0
        %1066 = vmatprep.subr.mxu0 0.0
        %1067 = vmatpush1.msra.mxu0 0.0
        %1068 = vmatprep.subr.mxu0 0.0
        %1069 = vmatpush1.msra.mxu0 0.0
        %1070 = vmatprep.subr.mxu0 0.0
        %1071 = vmatpush1.msra.mxu0 0.0
        %1072 = vmatprep.subr.mxu0 0.0
        %1073 = vmatpush1.msra.mxu0 0.0
        %1074 = vmatprep.subr.mxu0 0.0
        %1075 = vmatpush1.msra.mxu0 0.0
        %1076 = vmatprep.mubr.f32.mxu0 0.0
        %v1077 = vand.u32 %v383, 4294901760
        %1078 = vmatmul.mubr.f32.gmra.mrb[0].mxu0 %v1077
        %v1079 = vpop.f32.mrb[0].mxu0
        %v1080 = vadd.f32 %v988, %v1079
        %v1081 = vpop.f32.mrb[0].mxu0
        %v1082 = vadd.f32 %v990, %v1081
        %1083 = vdwg.mxu0
        %v1084 = vand.u32 %v284, 4294901760
        %1085 = vmatprep.subr.mxu0 %v1084
        %v1086 = vand.u32 %v283, 4294901760
        %1087 = vmatpush1.msra.mxu0 %v1086
        %v1088 = vand.u32 %v289, 4294901760
        %1089 = vmatprep.subr.mxu0 %v1088
        %v1090 = vand.u32 %v288, 4294901760
        %1091 = vmatpush1.msra.mxu0 %v1090
        %v1092 = vand.u32 %v294, 4294901760
        %1093 = vmatprep.subr.mxu0 %v1092
        %v1094 = vand.u32 %v293, 4294901760
        %1095 = vmatpush1.msra.mxu0 %v1094
        %v1096 = vand.u32 %v299, 4294901760
        %1097 = vmatprep.subr.mxu0 %v1096
        %v1098 = vand.u32 %v298, 4294901760
        %1099 = vmatpush1.msra.mxu0 %v1098
        %v1100 = vand.u32 %v304, 4294901760
        %1101 = vmatprep.subr.mxu0 %v1100
        %v1102 = vand.u32 %v303, 4294901760
        %1103 = vmatpush1.msra.mxu0 %v1102
        %v1104 = vand.u32 %v309, 4294901760
        %1105 = vmatprep.subr.mxu0 %v1104
        %v1106 = vand.u32 %v308, 4294901760
        %1107 = vmatpush1.msra.mxu0 %v1106
        %v1108 = vand.u32 %v314, 4294901760
        %1109 = vmatprep.subr.mxu0 %v1108
        %v1110 = vand.u32 %v313, 4294901760
        %1111 = vmatpush1.msra.mxu0 %v1110
        %v1112 = vand.u32 %v319, 4294901760
        %1113 = vmatprep.subr.mxu0 %v1112
        %v1114 = vand.u32 %v318, 4294901760
        %1115 = vmatpush1.msra.mxu0 %v1114
        %v1116 = vand.u32 %v324, 4294901760
        %1117 = vmatprep.subr.mxu0 %v1116
        %v1118 = vand.u32 %v323, 4294901760
        %1119 = vmatpush1.msra.mxu0 %v1118
        %v1120 = vand.u32 %v329, 4294901760
        %1121 = vmatprep.subr.mxu0 %v1120
        %v1122 = vand.u32 %v328, 4294901760
        %1123 = vmatpush1.msra.mxu0 %v1122
        %1124 = vmatprep.subr.mxu0 0.0
        %1125 = vmatpush1.msra.mxu0 0.0
        %1126 = vmatprep.subr.mxu0 0.0
        %1127 = vmatpush1.msra.mxu0 0.0
        %1128 = vmatprep.subr.mxu0 0.0
        %1129 = vmatpush1.msra.mxu0 0.0
        %1130 = vmatprep.subr.mxu0 0.0
        %1131 = vmatpush1.msra.mxu0 0.0
        %1132 = vmatprep.subr.mxu0 0.0
        %1133 = vmatpush1.msra.mxu0 0.0
        %1134 = vmatprep.subr.mxu0 0.0
        %1135 = vmatpush1.msra.mxu0 0.0
        %1136 = vmatprep.subr.mxu0 0.0
        %1137 = vmatpush1.msra.mxu0 0.0
        %1138 = vmatprep.subr.mxu0 0.0
        %1139 = vmatpush1.msra.mxu0 0.0
        %1140 = vmatprep.subr.mxu0 0.0
        %1141 = vmatpush1.msra.mxu0 0.0
        %1142 = vmatprep.subr.mxu0 0.0
        %1143 = vmatpush1.msra.mxu0 0.0
        %1144 = vmatprep.subr.mxu0 0.0
        %1145 = vmatpush1.msra.mxu0 0.0
        %1146 = vmatprep.subr.mxu0 0.0
        %1147 = vmatpush1.msra.mxu0 0.0
        %1148 = vmatprep.subr.mxu0 0.0
        %1149 = vmatpush1.msra.mxu0 0.0
        %1150 = vmatprep.subr.mxu0 0.0
        %1151 = vmatpush1.msra.mxu0 0.0
        %1152 = vmatprep.subr.mxu0 0.0
        %1153 = vmatpush1.msra.mxu0 0.0
        %1154 = vmatprep.subr.mxu0 0.0
        %1155 = vmatpush1.msra.mxu0 0.0
        %1156 = vmatprep.subr.mxu0 0.0
        %1157 = vmatpush1.msra.mxu0 0.0
        %1158 = vmatprep.subr.mxu0 0.0
        %1159 = vmatpush1.msra.mxu0 0.0
        %1160 = vmatprep.subr.mxu0 0.0
        %1161 = vmatpush1.msra.mxu0 0.0
        %1162 = vmatprep.subr.mxu0 0.0
        %1163 = vmatpush1.msra.mxu0 0.0
        %1164 = vmatprep.subr.mxu0 0.0
        %1165 = vmatpush1.msra.mxu0 0.0
        %1166 = vmatprep.subr.mxu0 0.0
        %1167 = vmatpush1.msra.mxu0 0.0
        %1168 = vmatprep.mubr.f32.mxu0 0.0
        %v1169 = vand.u32 %v383, 4294901760
        %v1170 = vsub.f32 %v383, %v1169
        %v1171 = vand.u32 %v1170, 4294901760
        %v1172 = vsub.f32 %v1170, %v1171
        %v1173 = vand.u32 %v1172, 4294901760
        %1174 = vmatmul.mubr.f32.gmra.mrb[0].mxu0 %v1173
        %v1175 = vpop.f32.mrb[0].mxu0
        %v1176 = vadd.f32 0.0, %v1175
        %v1177 = vpop.f32.mrb[0].mxu0
        %v1178 = vadd.f32 0.0, %v1177
        %1179 = vdwg.mxu0
        %v1180 = vand.u32 %v284, 4294901760
        %v1181 = vsub.f32 %v284, %v1180
        %v1182 = vand.u32 %v1181, 4294901760
        %v1183 = vsub.f32 %v1181, %v1182
        %v1184 = vand.u32 %v1183, 4294901760
        %1185 = vmatprep.subr.mxu0 %v1184
        %v1186 = vand.u32 %v283, 4294901760
        %v1187 = vsub.f32 %v283, %v1186
        %v1188 = vand.u32 %v1187, 4294901760
        %v1189 = vsub.f32 %v1187, %v1188
        %v1190 = vand.u32 %v1189, 4294901760
        %1191 = vmatpush1.msra.mxu0 %v1190
        %v1192 = vand.u32 %v289, 4294901760
        %v1193 = vsub.f32 %v289, %v1192
        %v1194 = vand.u32 %v1193, 4294901760
        %v1195 = vsub.f32 %v1193, %v1194
        %v1196 = vand.u32 %v1195, 4294901760
        %1197 = vmatprep.subr.mxu0 %v1196
        %v1198 = vand.u32 %v288, 4294901760
        %v1199 = vsub.f32 %v288, %v1198
        %v1200 = vand.u32 %v1199, 4294901760
        %v1201 = vsub.f32 %v1199, %v1200
        %v1202 = vand.u32 %v1201, 4294901760
        %1203 = vmatpush1.msra.mxu0 %v1202
        %v1204 = vand.u32 %v294, 4294901760
        %v1205 = vsub.f32 %v294, %v1204
        %v1206 = vand.u32 %v1205, 4294901760
        %v1207 = vsub.f32 %v1205, %v1206
        %v1208 = vand.u32 %v1207, 4294901760
        %1209 = vmatprep.subr.mxu0 %v1208
        %v1210 = vand.u32 %v293, 4294901760
        %v1211 = vsub.f32 %v293, %v1210
        %v1212 = vand.u32 %v1211, 4294901760
        %v1213 = vsub.f32 %v1211, %v1212
        %v1214 = vand.u32 %v1213, 4294901760
        %1215 = vmatpush1.msra.mxu0 %v1214
        %v1216 = vand.u32 %v299, 4294901760
        %v1217 = vsub.f32 %v299, %v1216
        %v1218 = vand.u32 %v1217, 4294901760
        %v1219 = vsub.f32 %v1217, %v1218
        %v1220 = vand.u32 %v1219, 4294901760
        %1221 = vmatprep.subr.mxu0 %v1220
        %v1222 = vand.u32 %v298, 4294901760
        %v1223 = vsub.f32 %v298, %v1222
        %v1224 = vand.u32 %v1223, 4294901760
        %v1225 = vsub.f32 %v1223, %v1224
        %v1226 = vand.u32 %v1225, 4294901760
        %1227 = vmatpush1.msra.mxu0 %v1226
        %v1228 = vand.u32 %v304, 4294901760
        %v1229 = vsub.f32 %v304, %v1228
        %v1230 = vand.u32 %v1229, 4294901760
        %v1231 = vsub.f32 %v1229, %v1230
        %v1232 = vand.u32 %v1231, 4294901760
        %1233 = vmatprep.subr.mxu0 %v1232
        %v1234 = vand.u32 %v303, 4294901760
        %v1235 = vsub.f32 %v303, %v1234
        %v1236 = vand.u32 %v1235, 4294901760
        %v1237 = vsub.f32 %v1235, %v1236
        %v1238 = vand.u32 %v1237, 4294901760
        %1239 = vmatpush1.msra.mxu0 %v1238
        %v1240 = vand.u32 %v309, 4294901760
        %v1241 = vsub.f32 %v309, %v1240
        %v1242 = vand.u32 %v1241, 4294901760
        %v1243 = vsub.f32 %v1241, %v1242
        %v1244 = vand.u32 %v1243, 4294901760
        %1245 = vmatprep.subr.mxu0 %v1244
        %v1246 = vand.u32 %v308, 4294901760
        %v1247 = vsub.f32 %v308, %v1246
        %v1248 = vand.u32 %v1247, 4294901760
        %v1249 = vsub.f32 %v1247, %v1248
        %v1250 = vand.u32 %v1249, 4294901760
        %1251 = vmatpush1.msra.mxu0 %v1250
        %v1252 = vand.u32 %v314, 4294901760
        %v1253 = vsub.f32 %v314, %v1252
        %v1254 = vand.u32 %v1253, 4294901760
        %v1255 = vsub.f32 %v1253, %v1254
        %v1256 = vand.u32 %v1255, 4294901760
        %1257 = vmatprep.subr.mxu0 %v1256
        %v1258 = vand.u32 %v313, 4294901760
        %v1259 = vsub.f32 %v313, %v1258
        %v1260 = vand.u32 %v1259, 4294901760
        %v1261 = vsub.f32 %v1259, %v1260
        %v1262 = vand.u32 %v1261, 4294901760
        %1263 = vmatpush1.msra.mxu0 %v1262
        %v1264 = vand.u32 %v319, 4294901760
        %v1265 = vsub.f32 %v319, %v1264
        %v1266 = vand.u32 %v1265, 4294901760
        %v1267 = vsub.f32 %v1265, %v1266
        %v1268 = vand.u32 %v1267, 4294901760
        %1269 = vmatprep.subr.mxu0 %v1268
        %v1270 = vand.u32 %v318, 4294901760
        %v1271 = vsub.f32 %v318, %v1270
        %v1272 = vand.u32 %v1271, 4294901760
        %v1273 = vsub.f32 %v1271, %v1272
        %v1274 = vand.u32 %v1273, 4294901760
        %1275 = vmatpush1.msra.mxu0 %v1274
        %v1276 = vand.u32 %v324, 4294901760
        %v1277 = vsub.f32 %v324, %v1276
        %v1278 = vand.u32 %v1277, 4294901760
        %v1279 = vsub.f32 %v1277, %v1278
        %v1280 = vand.u32 %v1279, 4294901760
        %1281 = vmatprep.subr.mxu0 %v1280
        %v1282 = vand.u32 %v323, 4294901760
        %v1283 = vsub.f32 %v323, %v1282
        %v1284 = vand.u32 %v1283, 4294901760
        %v1285 = vsub.f32 %v1283, %v1284
        %v1286 = vand.u32 %v1285, 4294901760
        %1287 = vmatpush1.msra.mxu0 %v1286
        %v1288 = vand.u32 %v329, 4294901760
        %v1289 = vsub.f32 %v329, %v1288
        %v1290 = vand.u32 %v1289, 4294901760
        %v1291 = vsub.f32 %v1289, %v1290
        %v1292 = vand.u32 %v1291, 4294901760
        %1293 = vmatprep.subr.mxu0 %v1292
        %v1294 = vand.u32 %v328, 4294901760
        %v1295 = vsub.f32 %v328, %v1294
        %v1296 = vand.u32 %v1295, 4294901760
        %v1297 = vsub.f32 %v1295, %v1296
        %v1298 = vand.u32 %v1297, 4294901760
        %1299 = vmatpush1.msra.mxu0 %v1298
        %1300 = vmatprep.subr.mxu0 0.0
        %1301 = vmatpush1.msra.mxu0 0.0
        %1302 = vmatprep.subr.mxu0 0.0
        %1303 = vmatpush1.msra.mxu0 0.0
        %1304 = vmatprep.subr.mxu0 0.0
        %1305 = vmatpush1.msra.mxu0 0.0
        %1306 = vmatprep.subr.mxu0 0.0
        %1307 = vmatpush1.msra.mxu0 0.0
        %1308 = vmatprep.subr.mxu0 0.0
        %1309 = vmatpush1.msra.mxu0 0.0
        %1310 = vmatprep.subr.mxu0 0.0
        %1311 = vmatpush1.msra.mxu0 0.0
        %1312 = vmatprep.subr.mxu0 0.0
        %1313 = vmatpush1.msra.mxu0 0.0
        %1314 = vmatprep.subr.mxu0 0.0
        %1315 = vmatpush1.msra.mxu0 0.0
        %1316 = vmatprep.subr.mxu0 0.0
        %1317 = vmatpush1.msra.mxu0 0.0
        %1318 = vmatprep.subr.mxu0 0.0
        %1319 = vmatpush1.msra.mxu0 0.0
        %1320 = vmatprep.subr.mxu0 0.0
        %1321 = vmatpush1.msra.mxu0 0.0
        %1322 = vmatprep.subr.mxu0 0.0
        %1323 = vmatpush1.msra.mxu0 0.0
        %1324 = vmatprep.subr.mxu0 0.0
        %1325 = vmatpush1.msra.mxu0 0.0
        %1326 = vmatprep.subr.mxu0 0.0
        %1327 = vmatpush1.msra.mxu0 0.0
        %1328 = vmatprep.subr.mxu0 0.0
        %1329 = vmatpush1.msra.mxu0 0.0
        %1330 = vmatprep.subr.mxu0 0.0
        %1331 = vmatpush1.msra.mxu0 0.0
        %1332 = vmatprep.subr.mxu0 0.0
        %1333 = vmatpush1.msra.mxu0 0.0
        %1334 = vmatprep.subr.mxu0 0.0
        %1335 = vmatpush1.msra.mxu0 0.0
        %1336 = vmatprep.subr.mxu0 0.0
        %1337 = vmatpush1.msra.mxu0 0.0
        %1338 = vmatprep.subr.mxu0 0.0
        %1339 = vmatpush1.msra.mxu0 0.0
        %1340 = vmatprep.subr.mxu0 0.0
        %1341 = vmatpush1.msra.mxu0 0.0
        %1342 = vmatprep.subr.mxu0 0.0
        %1343 = vmatpush1.msra.mxu0 0.0
        %1344 = vmatprep.mubr.f32.mxu0 0.0
        %v1345 = vand.u32 %v383, 4294901760
        %1346 = vmatmul.mubr.f32.gmra.mrb[0].mxu0 %v1345
        %v1347 = vpop.f32.mrb[0].mxu0
        %v1348 = vadd.f32 %v1176, %v1347
        %v1349 = vpop.f32.mrb[0].mxu0
        %v1350 = vadd.f32 %v1178, %v1349
        %1351 = vdwg.mxu0
        %v1352 = vand.u32 %v284, 4294901760
        %v1353 = vsub.f32 %v284, %v1352
        %1354 = vmatprep.subr.mxu0 %v1353
        %v1355 = vand.u32 %v283, 4294901760
        %v1356 = vsub.f32 %v283, %v1355
        %1357 = vmatpush1.msra.mxu0 %v1356
        %v1358 = vand.u32 %v289, 4294901760
        %v1359 = vsub.f32 %v289, %v1358
        %1360 = vmatprep.subr.mxu0 %v1359
        %v1361 = vand.u32 %v288, 4294901760
        %v1362 = vsub.f32 %v288, %v1361
        %1363 = vmatpush1.msra.mxu0 %v1362
        %v1364 = vand.u32 %v294, 4294901760
        %v1365 = vsub.f32 %v294, %v1364
        %1366 = vmatprep.subr.mxu0 %v1365
        %v1367 = vand.u32 %v293, 4294901760
        %v1368 = vsub.f32 %v293, %v1367
        %1369 = vmatpush1.msra.mxu0 %v1368
        %v1370 = vand.u32 %v299, 4294901760
        %v1371 = vsub.f32 %v299, %v1370
        %1372 = vmatprep.subr.mxu0 %v1371
        %v1373 = vand.u32 %v298, 4294901760
        %v1374 = vsub.f32 %v298, %v1373
        %1375 = vmatpush1.msra.mxu0 %v1374
        %v1376 = vand.u32 %v304, 4294901760
        %v1377 = vsub.f32 %v304, %v1376
        %1378 = vmatprep.subr.mxu0 %v1377
        %v1379 = vand.u32 %v303, 4294901760
        %v1380 = vsub.f32 %v303, %v1379
        %1381 = vmatpush1.msra.mxu0 %v1380
        %v1382 = vand.u32 %v309, 4294901760
        %v1383 = vsub.f32 %v309, %v1382
        %1384 = vmatprep.subr.mxu0 %v1383
        %v1385 = vand.u32 %v308, 4294901760
        %v1386 = vsub.f32 %v308, %v1385
        %1387 = vmatpush1.msra.mxu0 %v1386
        %v1388 = vand.u32 %v314, 4294901760
        %v1389 = vsub.f32 %v314, %v1388
        %1390 = vmatprep.subr.mxu0 %v1389
        %v1391 = vand.u32 %v313, 4294901760
        %v1392 = vsub.f32 %v313, %v1391
        %1393 = vmatpush1.msra.mxu0 %v1392
        %v1394 = vand.u32 %v319, 4294901760
        %v1395 = vsub.f32 %v319, %v1394
        %1396 = vmatprep.subr.mxu0 %v1395
        %v1397 = vand.u32 %v318, 4294901760
        %v1398 = vsub.f32 %v318, %v1397
        %1399 = vmatpush1.msra.mxu0 %v1398
        %v1400 = vand.u32 %v324, 4294901760
        %v1401 = vsub.f32 %v324, %v1400
        %1402 = vmatprep.subr.mxu0 %v1401
        %v1403 = vand.u32 %v323, 4294901760
        %v1404 = vsub.f32 %v323, %v1403
        %1405 = vmatpush1.msra.mxu0 %v1404
        %v1406 = vand.u32 %v329, 4294901760
        %v1407 = vsub.f32 %v329, %v1406
        %1408 = vmatprep.subr.mxu0 %v1407
        %v1409 = vand.u32 %v328, 4294901760
        %v1410 = vsub.f32 %v328, %v1409
        %1411 = vmatpush1.msra.mxu0 %v1410
        %1412 = vmatprep.subr.mxu0 0.0
        %1413 = vmatpush1.msra.mxu0 0.0
        %1414 = vmatprep.subr.mxu0 0.0
        %1415 = vmatpush1.msra.mxu0 0.0
        %1416 = vmatprep.subr.mxu0 0.0
        %1417 = vmatpush1.msra.mxu0 0.0
        %1418 = vmatprep.subr.mxu0 0.0
        %1419 = vmatpush1.msra.mxu0 0.0
        %1420 = vmatprep.subr.mxu0 0.0
        %1421 = vmatpush1.msra.mxu0 0.0
        %1422 = vmatprep.subr.mxu0 0.0
        %1423 = vmatpush1.msra.mxu0 0.0
        %1424 = vmatprep.subr.mxu0 0.0
        %1425 = vmatpush1.msra.mxu0 0.0
        %1426 = vmatprep.subr.mxu0 0.0
        %1427 = vmatpush1.msra.mxu0 0.0
        %1428 = vmatprep.subr.mxu0 0.0
        %1429 = vmatpush1.msra.mxu0 0.0
        %1430 = vmatprep.subr.mxu0 0.0
        %1431 = vmatpush1.msra.mxu0 0.0
        %1432 = vmatprep.subr.mxu0 0.0
        %1433 = vmatpush1.msra.mxu0 0.0
        %1434 = vmatprep.subr.mxu0 0.0
        %1435 = vmatpush1.msra.mxu0 0.0
        %1436 = vmatprep.subr.mxu0 0.0
        %1437 = vmatpush1.msra.mxu0 0.0
        %1438 = vmatprep.subr.mxu0 0.0
        %1439 = vmatpush1.msra.mxu0 0.0
        %1440 = vmatprep.subr.mxu0 0.0
        %1441 = vmatpush1.msra.mxu0 0.0
        %1442 = vmatprep.subr.mxu0 0.0
        %1443 = vmatpush1.msra.mxu0 0.0
        %1444 = vmatprep.subr.mxu0 0.0
        %1445 = vmatpush1.msra.mxu0 0.0
        %1446 = vmatprep.subr.mxu0 0.0
        %1447 = vmatpush1.msra.mxu0 0.0
        %1448 = vmatprep.subr.mxu0 0.0
        %1449 = vmatpush1.msra.mxu0 0.0
        %1450 = vmatprep.subr.mxu0 0.0
        %1451 = vmatpush1.msra.mxu0 0.0
        %1452 = vmatprep.subr.mxu0 0.0
        %1453 = vmatpush1.msra.mxu0 0.0
        %1454 = vmatprep.subr.mxu0 0.0
        %1455 = vmatpush1.msra.mxu0 0.0
        %1456 = vmatprep.mubr.f32.mxu0 0.0
        %v1457 = vand.u32 %v383, 4294901760
        %v1458 = vsub.f32 %v383, %v1457
        %1459 = vmatmul.mubr.f32.gmra.mrb[0].mxu0 %v1458
        %v1460 = vpop.f32.mrb[0].mxu0
        %v1461 = vadd.f32 %v1348, %v1460
        %v1462 = vpop.f32.mrb[0].mxu0
        %v1463 = vadd.f32 %v1350, %v1462
        %1464 = vdwg.mxu0
        %v1465 = vand.u32 %v284, 4294901760
        %1466 = vmatprep.subr.mxu0 %v1465
        %v1467 = vand.u32 %v283, 4294901760
        %1468 = vmatpush1.msra.mxu0 %v1467
        %v1469 = vand.u32 %v289, 4294901760
        %1470 = vmatprep.subr.mxu0 %v1469
        %v1471 = vand.u32 %v288, 4294901760
        %1472 = vmatpush1.msra.mxu0 %v1471
        %v1473 = vand.u32 %v294, 4294901760
        %1474 = vmatprep.subr.mxu0 %v1473
        %v1475 = vand.u32 %v293, 4294901760
        %1476 = vmatpush1.msra.mxu0 %v1475
        %v1477 = vand.u32 %v299, 4294901760
        %1478 = vmatprep.subr.mxu0 %v1477
        %v1479 = vand.u32 %v298, 4294901760
        %1480 = vmatpush1.msra.mxu0 %v1479
        %v1481 = vand.u32 %v304, 4294901760
        %1482 = vmatprep.subr.mxu0 %v1481
        %v1483 = vand.u32 %v303, 4294901760
        %1484 = vmatpush1.msra.mxu0 %v1483
        %v1485 = vand.u32 %v309, 4294901760
        %1486 = vmatprep.subr.mxu0 %v1485
        %v1487 = vand.u32 %v308, 4294901760
        %1488 = vmatpush1.msra.mxu0 %v1487
        %v1489 = vand.u32 %v314, 4294901760
        %1490 = vmatprep.subr.mxu0 %v1489
        %v1491 = vand.u32 %v313, 4294901760
        %1492 = vmatpush1.msra.mxu0 %v1491
        %v1493 = vand.u32 %v319, 4294901760
        %1494 = vmatprep.subr.mxu0 %v1493
        %v1495 = vand.u32 %v318, 4294901760
        %1496 = vmatpush1.msra.mxu0 %v1495
        %v1497 = vand.u32 %v324, 4294901760
        %1498 = vmatprep.subr.mxu0 %v1497
        %v1499 = vand.u32 %v323, 4294901760
        %1500 = vmatpush1.msra.mxu0 %v1499
        %v1501 = vand.u32 %v329, 4294901760
        %1502 = vmatprep.subr.mxu0 %v1501
        %v1503 = vand.u32 %v328, 4294901760
        %1504 = vmatpush1.msra.mxu0 %v1503
        %1505 = vmatprep.subr.mxu0 0.0
        %1506 = vmatpush1.msra.mxu0 0.0
        %1507 = vmatprep.subr.mxu0 0.0
        %1508 = vmatpush1.msra.mxu0 0.0
        %1509 = vmatprep.subr.mxu0 0.0
        %1510 = vmatpush1.msra.mxu0 0.0
        %1511 = vmatprep.subr.mxu0 0.0
        %1512 = vmatpush1.msra.mxu0 0.0
        %1513 = vmatprep.subr.mxu0 0.0
        %1514 = vmatpush1.msra.mxu0 0.0
        %1515 = vmatprep.subr.mxu0 0.0
        %1516 = vmatpush1.msra.mxu0 0.0
        %1517 = vmatprep.subr.mxu0 0.0
        %1518 = vmatpush1.msra.mxu0 0.0
        %1519 = vmatprep.subr.mxu0 0.0
        %1520 = vmatpush1.msra.mxu0 0.0
        %1521 = vmatprep.subr.mxu0 0.0
        %1522 = vmatpush1.msra.mxu0 0.0
        %1523 = vmatprep.subr.mxu0 0.0
        %1524 = vmatpush1.msra.mxu0 0.0
        %1525 = vmatprep.subr.mxu0 0.0
        %1526 = vmatpush1.msra.mxu0 0.0
        %1527 = vmatprep.subr.mxu0 0.0
        %1528 = vmatpush1.msra.mxu0 0.0
        %1529 = vmatprep.subr.mxu0 0.0
        %1530 = vmatpush1.msra.mxu0 0.0
        %1531 = vmatprep.subr.mxu0 0.0
        %1532 = vmatpush1.msra.mxu0 0.0
        %1533 = vmatprep.subr.mxu0 0.0
        %1534 = vmatpush1.msra.mxu0 0.0
        %1535 = vmatprep.subr.mxu0 0.0
        %1536 = vmatpush1.msra.mxu0 0.0
        %1537 = vmatprep.subr.mxu0 0.0
        %1538 = vmatpush1.msra.mxu0 0.0
        %1539 = vmatprep.subr.mxu0 0.0
        %1540 = vmatpush1.msra.mxu0 0.0
        %1541 = vmatprep.subr.mxu0 0.0
        %1542 = vmatpush1.msra.mxu0 0.0
        %1543 = vmatprep.subr.mxu0 0.0
        %1544 = vmatpush1.msra.mxu0 0.0
        %1545 = vmatprep.subr.mxu0 0.0
        %1546 = vmatpush1.msra.mxu0 0.0
        %1547 = vmatprep.subr.mxu0 0.0
        %1548 = vmatpush1.msra.mxu0 0.0
        %1549 = vmatprep.mubr.f32.mxu0 0.0
        %v1550 = vand.u32 %v383, 4294901760
        %v1551 = vsub.f32 %v383, %v1550
        %v1552 = vand.u32 %v1551, 4294901760
        %1553 = vmatmul.mubr.f32.gmra.mrb[0].mxu0 %v1552
        %v1554 = vpop.f32.mrb[0].mxu0
        %v1555 = vadd.f32 %v1461, %v1554
        %v1556 = vpop.f32.mrb[0].mxu0
        %v1557 = vadd.f32 %v1463, %v1556
        %1558 = vdwg.mxu0
        %v1559 = vand.u32 %v284, 4294901760
        %v1560 = vsub.f32 %v284, %v1559
        %v1561 = vand.u32 %v1560, 4294901760
        %1562 = vmatprep.subr.mxu0 %v1561
        %v1563 = vand.u32 %v283, 4294901760
        %v1564 = vsub.f32 %v283, %v1563
        %v1565 = vand.u32 %v1564, 4294901760
        %1566 = vmatpush1.msra.mxu0 %v1565
        %v1567 = vand.u32 %v289, 4294901760
        %v1568 = vsub.f32 %v289, %v1567
        %v1569 = vand.u32 %v1568, 4294901760
        %1570 = vmatprep.subr.mxu0 %v1569
        %v1571 = vand.u32 %v288, 4294901760
        %v1572 = vsub.f32 %v288, %v1571
        %v1573 = vand.u32 %v1572, 4294901760
        %1574 = vmatpush1.msra.mxu0 %v1573
        %v1575 = vand.u32 %v294, 4294901760
        %v1576 = vsub.f32 %v294, %v1575
        %v1577 = vand.u32 %v1576, 4294901760
        %1578 = vmatprep.subr.mxu0 %v1577
        %v1579 = vand.u32 %v293, 4294901760
        %v1580 = vsub.f32 %v293, %v1579
        %v1581 = vand.u32 %v1580, 4294901760
        %1582 = vmatpush1.msra.mxu0 %v1581
        %v1583 = vand.u32 %v299, 4294901760
        %v1584 = vsub.f32 %v299, %v1583
        %v1585 = vand.u32 %v1584, 4294901760
        %1586 = vmatprep.subr.mxu0 %v1585
        %v1587 = vand.u32 %v298, 4294901760
        %v1588 = vsub.f32 %v298, %v1587
        %v1589 = vand.u32 %v1588, 4294901760
        %1590 = vmatpush1.msra.mxu0 %v1589
        %v1591 = vand.u32 %v304, 4294901760
        %v1592 = vsub.f32 %v304, %v1591
        %v1593 = vand.u32 %v1592, 4294901760
        %1594 = vmatprep.subr.mxu0 %v1593
        %v1595 = vand.u32 %v303, 4294901760
        %v1596 = vsub.f32 %v303, %v1595
        %v1597 = vand.u32 %v1596, 4294901760
        %1598 = vmatpush1.msra.mxu0 %v1597
        %v1599 = vand.u32 %v309, 4294901760
        %v1600 = vsub.f32 %v309, %v1599
        %v1601 = vand.u32 %v1600, 4294901760
        %1602 = vmatprep.subr.mxu0 %v1601
        %v1603 = vand.u32 %v308, 4294901760
        %v1604 = vsub.f32 %v308, %v1603
        %v1605 = vand.u32 %v1604, 4294901760
        %1606 = vmatpush1.msra.mxu0 %v1605
        %v1607 = vand.u32 %v314, 4294901760
        %v1608 = vsub.f32 %v314, %v1607
        %v1609 = vand.u32 %v1608, 4294901760
        %1610 = vmatprep.subr.mxu0 %v1609
        %v1611 = vand.u32 %v313, 4294901760
        %v1612 = vsub.f32 %v313, %v1611
        %v1613 = vand.u32 %v1612, 4294901760
        %1614 = vmatpush1.msra.mxu0 %v1613
        %v1615 = vand.u32 %v319, 4294901760
        %v1616 = vsub.f32 %v319, %v1615
        %v1617 = vand.u32 %v1616, 4294901760
        %1618 = vmatprep.subr.mxu0 %v1617
        %v1619 = vand.u32 %v318, 4294901760
        %v1620 = vsub.f32 %v318, %v1619
        %v1621 = vand.u32 %v1620, 4294901760
        %1622 = vmatpush1.msra.mxu0 %v1621
        %v1623 = vand.u32 %v324, 4294901760
        %v1624 = vsub.f32 %v324, %v1623
        %v1625 = vand.u32 %v1624, 4294901760
        %1626 = vmatprep.subr.mxu0 %v1625
        %v1627 = vand.u32 %v323, 4294901760
        %v1628 = vsub.f32 %v323, %v1627
        %v1629 = vand.u32 %v1628, 4294901760
        %1630 = vmatpush1.msra.mxu0 %v1629
        %v1631 = vand.u32 %v329, 4294901760
        %v1632 = vsub.f32 %v329, %v1631
        %v1633 = vand.u32 %v1632, 4294901760
        %1634 = vmatprep.subr.mxu0 %v1633
        %v1635 = vand.u32 %v328, 4294901760
        %v1636 = vsub.f32 %v328, %v1635
        %v1637 = vand.u32 %v1636, 4294901760
        %1638 = vmatpush1.msra.mxu0 %v1637
        %1639 = vmatprep.subr.mxu0 0.0
        %1640 = vmatpush1.msra.mxu0 0.0
        %1641 = vmatprep.subr.mxu0 0.0
        %1642 = vmatpush1.msra.mxu0 0.0
        %1643 = vmatprep.subr.mxu0 0.0
        %1644 = vmatpush1.msra.mxu0 0.0
        %1645 = vmatprep.subr.mxu0 0.0
        %1646 = vmatpush1.msra.mxu0 0.0
        %1647 = vmatprep.subr.mxu0 0.0
        %1648 = vmatpush1.msra.mxu0 0.0
        %1649 = vmatprep.subr.mxu0 0.0
        %1650 = vmatpush1.msra.mxu0 0.0
        %1651 = vmatprep.subr.mxu0 0.0
        %1652 = vmatpush1.msra.mxu0 0.0
        %1653 = vmatprep.subr.mxu0 0.0
        %1654 = vmatpush1.msra.mxu0 0.0
        %1655 = vmatprep.subr.mxu0 0.0
        %1656 = vmatpush1.msra.mxu0 0.0
        %1657 = vmatprep.subr.mxu0 0.0
        %1658 = vmatpush1.msra.mxu0 0.0
        %1659 = vmatprep.subr.mxu0 0.0
        %1660 = vmatpush1.msra.mxu0 0.0
        %1661 = vmatprep.subr.mxu0 0.0
        %1662 = vmatpush1.msra.mxu0 0.0
        %1663 = vmatprep.subr.mxu0 0.0
        %1664 = vmatpush1.msra.mxu0 0.0
        %1665 = vmatprep.subr.mxu0 0.0
        %1666 = vmatpush1.msra.mxu0 0.0
        %1667 = vmatprep.subr.mxu0 0.0
        %1668 = vmatpush1.msra.mxu0 0.0
        %1669 = vmatprep.subr.mxu0 0.0
        %1670 = vmatpush1.msra.mxu0 0.0
        %1671 = vmatprep.subr.mxu0 0.0
        %1672 = vmatpush1.msra.mxu0 0.0
        %1673 = vmatprep.subr.mxu0 0.0
        %1674 = vmatpush1.msra.mxu0 0.0
        %1675 = vmatprep.subr.mxu0 0.0
        %1676 = vmatpush1.msra.mxu0 0.0
        %1677 = vmatprep.subr.mxu0 0.0
        %1678 = vmatpush1.msra.mxu0 0.0
        %1679 = vmatprep.subr.mxu0 0.0
        %1680 = vmatpush1.msra.mxu0 0.0
        %1681 = vmatprep.subr.mxu0 0.0
        %1682 = vmatpush1.msra.mxu0 0.0
        %1683 = vmatprep.mubr.f32.mxu0 0.0
        %v1684 = vand.u32 %v383, 4294901760
        %1685 = vmatmul.mubr.f32.gmra.mrb[0].mxu0 %v1684
        %v1686 = vpop.f32.mrb[0].mxu0
        %v1687 = vadd.f32 %v1555, %v1686
        %v1688 = vpop.f32.mrb[0].mxu0
        %v1689 = vadd.f32 %v1557, %v1688
        %1690 = vdwg.mxu0
        %v1691 = vand.u32 %v284, 4294901760
        %1692 = vmatprep.subr.mxu0 %v1691
        %v1693 = vand.u32 %v283, 4294901760
        %1694 = vmatpush1.msra.mxu0 %v1693
        %v1695 = vand.u32 %v289, 4294901760
        %1696 = vmatprep.subr.mxu0 %v1695
        %v1697 = vand.u32 %v288, 4294901760
        %1698 = vmatpush1.msra.mxu0 %v1697
        %v1699 = vand.u32 %v294, 4294901760
        %1700 = vmatprep.subr.mxu0 %v1699
        %v1701 = vand.u32 %v293, 4294901760
        %1702 = vmatpush1.msra.mxu0 %v1701
        %v1703 = vand.u32 %v299, 4294901760
        %1704 = vmatprep.subr.mxu0 %v1703
        %v1705 = vand.u32 %v298, 4294901760
        %1706 = vmatpush1.msra.mxu0 %v1705
        %v1707 = vand.u32 %v304, 4294901760
        %1708 = vmatprep.subr.mxu0 %v1707
        %v1709 = vand.u32 %v303, 4294901760
        %1710 = vmatpush1.msra.mxu0 %v1709
        %v1711 = vand.u32 %v309, 4294901760
        %1712 = vmatprep.subr.mxu0 %v1711
        %v1713 = vand.u32 %v308, 4294901760
        %1714 = vmatpush1.msra.mxu0 %v1713
        %v1715 = vand.u32 %v314, 4294901760
        %1716 = vmatprep.subr.mxu0 %v1715
        %v1717 = vand.u32 %v313, 4294901760
        %1718 = vmatpush1.msra.mxu0 %v1717
        %v1719 = vand.u32 %v319, 4294901760
        %1720 = vmatprep.subr.mxu0 %v1719
        %v1721 = vand.u32 %v318, 4294901760
        %1722 = vmatpush1.msra.mxu0 %v1721
        %v1723 = vand.u32 %v324, 4294901760
        %1724 = vmatprep.subr.mxu0 %v1723
        %v1725 = vand.u32 %v323, 4294901760
        %1726 = vmatpush1.msra.mxu0 %v1725
        %v1727 = vand.u32 %v329, 4294901760
        %1728 = vmatprep.subr.mxu0 %v1727
        %v1729 = vand.u32 %v328, 4294901760
        %1730 = vmatpush1.msra.mxu0 %v1729
        %1731 = vmatprep.subr.mxu0 0.0
        %1732 = vmatpush1.msra.mxu0 0.0
        %1733 = vmatprep.subr.mxu0 0.0
        %1734 = vmatpush1.msra.mxu0 0.0
        %1735 = vmatprep.subr.mxu0 0.0
        %1736 = vmatpush1.msra.mxu0 0.0
        %1737 = vmatprep.subr.mxu0 0.0
        %1738 = vmatpush1.msra.mxu0 0.0
        %1739 = vmatprep.subr.mxu0 0.0
        %1740 = vmatpush1.msra.mxu0 0.0
        %1741 = vmatprep.subr.mxu0 0.0
        %1742 = vmatpush1.msra.mxu0 0.0
        %1743 = vmatprep.subr.mxu0 0.0
        %1744 = vmatpush1.msra.mxu0 0.0
        %1745 = vmatprep.subr.mxu0 0.0
        %1746 = vmatpush1.msra.mxu0 0.0
        %1747 = vmatprep.subr.mxu0 0.0
        %1748 = vmatpush1.msra.mxu0 0.0
        %1749 = vmatprep.subr.mxu0 0.0
        %1750 = vmatpush1.msra.mxu0 0.0
        %1751 = vmatprep.subr.mxu0 0.0
        %1752 = vmatpush1.msra.mxu0 0.0
        %1753 = vmatprep.subr.mxu0 0.0
        %1754 = vmatpush1.msra.mxu0 0.0
        %1755 = vmatprep.subr.mxu0 0.0
        %1756 = vmatpush1.msra.mxu0 0.0
        %1757 = vmatprep.subr.mxu0 0.0
        %1758 = vmatpush1.msra.mxu0 0.0
        %1759 = vmatprep.subr.mxu0 0.0
        %1760 = vmatpush1.msra.mxu0 0.0
        %1761 = vmatprep.subr.mxu0 0.0
        %1762 = vmatpush1.msra.mxu0 0.0
        %1763 = vmatprep.subr.mxu0 0.0
        %1764 = vmatpush1.msra.mxu0 0.0
        %1765 = vmatprep.subr.mxu0 0.0
        %1766 = vmatpush1.msra.mxu0 0.0
        %1767 = vmatprep.subr.mxu0 0.0
        %1768 = vmatpush1.msra.mxu0 0.0
        %1769 = vmatprep.subr.mxu0 0.0
        %1770 = vmatpush1.msra.mxu0 0.0
        %1771 = vmatprep.subr.mxu0 0.0
        %1772 = vmatpush1.msra.mxu0 0.0
        %1773 = vmatprep.subr.mxu0 0.0
        %1774 = vmatpush1.msra.mxu0 0.0
        %1775 = vmatprep.mubr.f32.mxu0 0.0
        %v1776 = vand.u32 %v383, 4294901760
        %1777 = vmatmul.mubr.f32.gmra.mrb[0].mxu0 %v1776
        %v1778 = vpop.f32.mrb[0].mxu0
        %v1779 = vadd.f32 %v1687, %v1778
        %v1780 = vpop.f32.mrb[0].mxu0
        %v1781 = vadd.f32 %v1689, %v1780
        %1782 = vdwg.mxu0
        %1783 = vmatprep.subr.mxu0 0.0
        %v1784 = vand.u32 %v285, 4294901760
        %1785 = vmatpush1.msra.mxu0 %v1784
        %1786 = vmatprep.subr.mxu0 0.0
        %v1787 = vand.u32 %v290, 4294901760
        %1788 = vmatpush1.msra.mxu0 %v1787
        %1789 = vmatprep.subr.mxu0 0.0
        %v1790 = vand.u32 %v295, 4294901760
        %1791 = vmatpush1.msra.mxu0 %v1790
        %1792 = vmatprep.subr.mxu0 0.0
        %v1793 = vand.u32 %v300, 4294901760
        %1794 = vmatpush1.msra.mxu0 %v1793
        %1795 = vmatprep.subr.mxu0 0.0
        %v1796 = vand.u32 %v305, 4294901760
        %1797 = vmatpush1.msra.mxu0 %v1796
        %1798 = vmatprep.subr.mxu0 0.0
        %v1799 = vand.u32 %v310, 4294901760
        %1800 = vmatpush1.msra.mxu0 %v1799
        %1801 = vmatprep.subr.mxu0 0.0
        %v1802 = vand.u32 %v315, 4294901760
        %1803 = vmatpush1.msra.mxu0 %v1802
        %1804 = vmatprep.subr.mxu0 0.0
        %v1805 = vand.u32 %v320, 4294901760
        %1806 = vmatpush1.msra.mxu0 %v1805
        %1807 = vmatprep.subr.mxu0 0.0
        %v1808 = vand.u32 %v325, 4294901760
        %1809 = vmatpush1.msra.mxu0 %v1808
        %1810 = vmatprep.subr.mxu0 0.0
        %v1811 = vand.u32 %v330, 4294901760
        %1812 = vmatpush1.msra.mxu0 %v1811
        %1813 = vmatprep.subr.mxu0 0.0
        %1814 = vmatpush1.msra.mxu0 0.0
        %1815 = vmatprep.subr.mxu0 0.0
        %1816 = vmatpush1.msra.mxu0 0.0
        %1817 = vmatprep.subr.mxu0 0.0
        %1818 = vmatpush1.msra.mxu0 0.0
        %1819 = vmatprep.subr.mxu0 0.0
        %1820 = vmatpush1.msra.mxu0 0.0
        %1821 = vmatprep.subr.mxu0 0.0
        %1822 = vmatpush1.msra.mxu0 0.0
        %1823 = vmatprep.subr.mxu0 0.0
        %1824 = vmatpush1.msra.mxu0 0.0
        %1825 = vmatprep.subr.mxu0 0.0
        %1826 = vmatpush1.msra.mxu0 0.0
        %1827 = vmatprep.subr.mxu0 0.0
        %1828 = vmatpush1.msra.mxu0 0.0
        %1829 = vmatprep.subr.mxu0 0.0
        %1830 = vmatpush1.msra.mxu0 0.0
        %1831 = vmatprep.subr.mxu0 0.0
        %1832 = vmatpush1.msra.mxu0 0.0
        %1833 = vmatprep.subr.mxu0 0.0
        %1834 = vmatpush1.msra.mxu0 0.0
        %1835 = vmatprep.subr.mxu0 0.0
        %1836 = vmatpush1.msra.mxu0 0.0
        %1837 = vmatprep.subr.mxu0 0.0
        %1838 = vmatpush1.msra.mxu0 0.0
        %1839 = vmatprep.subr.mxu0 0.0
        %1840 = vmatpush1.msra.mxu0 0.0
        %1841 = vmatprep.subr.mxu0 0.0
        %1842 = vmatpush1.msra.mxu0 0.0
        %1843 = vmatprep.subr.mxu0 0.0
        %1844 = vmatpush1.msra.mxu0 0.0
        %1845 = vmatprep.subr.mxu0 0.0
        %1846 = vmatpush1.msra.mxu0 0.0
        %1847 = vmatprep.subr.mxu0 0.0
        %1848 = vmatpush1.msra.mxu0 0.0
        %1849 = vmatprep.subr.mxu0 0.0
        %1850 = vmatpush1.msra.mxu0 0.0
        %1851 = vmatprep.subr.mxu0 0.0
        %1852 = vmatpush1.msra.mxu0 0.0
        %1853 = vmatprep.subr.mxu0 0.0
        %1854 = vmatpush1.msra.mxu0 0.0
        %1855 = vmatprep.subr.mxu0 0.0
        %1856 = vmatpush1.msra.mxu0 0.0
        %1857 = vmatprep.mubr.f32.mxu0 0.0
        %v1858 = vand.u32 %v383, 4294901760
        %v1859 = vsub.f32 %v383, %v1858
        %v1860 = vand.u32 %v1859, 4294901760
        %v1861 = vsub.f32 %v1859, %v1860
        %v1862 = vand.u32 %v1861, 4294901760
        %1863 = vmatmul.mubr.f32.gmra.mrb[0].mxu0 %v1862
        %v1864 = vpop.f32.mrb[0].mxu0
        %v1865 = vadd.f32 0.0, %v1864
        %v1866 = vpop.f32.mrb[0].mxu0
        %1867 = vdwg.mxu0
        %1868 = vmatprep.subr.mxu0 0.0
        %v1869 = vand.u32 %v285, 4294901760
        %v1870 = vsub.f32 %v285, %v1869
        %v1871 = vand.u32 %v1870, 4294901760
        %v1872 = vsub.f32 %v1870, %v1871
        %v1873 = vand.u32 %v1872, 4294901760
        %1874 = vmatpush1.msra.mxu0 %v1873
        %1875 = vmatprep.subr.mxu0 0.0
        %v1876 = vand.u32 %v290, 4294901760
        %v1877 = vsub.f32 %v290, %v1876
        %v1878 = vand.u32 %v1877, 4294901760
        %v1879 = vsub.f32 %v1877, %v1878
        %v1880 = vand.u32 %v1879, 4294901760
        %1881 = vmatpush1.msra.mxu0 %v1880
        %1882 = vmatprep.subr.mxu0 0.0
        %v1883 = vand.u32 %v295, 4294901760
        %v1884 = vsub.f32 %v295, %v1883
        %v1885 = vand.u32 %v1884, 4294901760
        %v1886 = vsub.f32 %v1884, %v1885
        %v1887 = vand.u32 %v1886, 4294901760
        %1888 = vmatpush1.msra.mxu0 %v1887
        %1889 = vmatprep.subr.mxu0 0.0
        %v1890 = vand.u32 %v300, 4294901760
        %v1891 = vsub.f32 %v300, %v1890
        %v1892 = vand.u32 %v1891, 4294901760
        %v1893 = vsub.f32 %v1891, %v1892
        %v1894 = vand.u32 %v1893, 4294901760
        %1895 = vmatpush1.msra.mxu0 %v1894
        %1896 = vmatprep.subr.mxu0 0.0
        %v1897 = vand.u32 %v305, 4294901760
        %v1898 = vsub.f32 %v305, %v1897
        %v1899 = vand.u32 %v1898, 4294901760
        %v1900 = vsub.f32 %v1898, %v1899
        %v1901 = vand.u32 %v1900, 4294901760
        %1902 = vmatpush1.msra.mxu0 %v1901
        %1903 = vmatprep.subr.mxu0 0.0
        %v1904 = vand.u32 %v310, 4294901760
        %v1905 = vsub.f32 %v310, %v1904
        %v1906 = vand.u32 %v1905, 4294901760
        %v1907 = vsub.f32 %v1905, %v1906
        %v1908 = vand.u32 %v1907, 4294901760
        %1909 = vmatpush1.msra.mxu0 %v1908
        %1910 = vmatprep.subr.mxu0 0.0
        %v1911 = vand.u32 %v315, 4294901760
        %v1912 = vsub.f32 %v315, %v1911
        %v1913 = vand.u32 %v1912, 4294901760
        %v1914 = vsub.f32 %v1912, %v1913
        %v1915 = vand.u32 %v1914, 4294901760
        %1916 = vmatpush1.msra.mxu0 %v1915
        %1917 = vmatprep.subr.mxu0 0.0
        %v1918 = vand.u32 %v320, 4294901760
        %v1919 = vsub.f32 %v320, %v1918
        %v1920 = vand.u32 %v1919, 4294901760
        %v1921 = vsub.f32 %v1919, %v1920
        %v1922 = vand.u32 %v1921, 4294901760
        %1923 = vmatpush1.msra.mxu0 %v1922
        %1924 = vmatprep.subr.mxu0 0.0
        %v1925 = vand.u32 %v325, 4294901760
        %v1926 = vsub.f32 %v325, %v1925
        %v1927 = vand.u32 %v1926, 4294901760
        %v1928 = vsub.f32 %v1926, %v1927
        %v1929 = vand.u32 %v1928, 4294901760
        %1930 = vmatpush1.msra.mxu0 %v1929
        %1931 = vmatprep.subr.mxu0 0.0
        %v1932 = vand.u32 %v330, 4294901760
        %v1933 = vsub.f32 %v330, %v1932
        %v1934 = vand.u32 %v1933, 4294901760
        %v1935 = vsub.f32 %v1933, %v1934
        %v1936 = vand.u32 %v1935, 4294901760
        %1937 = vmatpush1.msra.mxu0 %v1936
        %1938 = vmatprep.subr.mxu0 0.0
        %1939 = vmatpush1.msra.mxu0 0.0
        %1940 = vmatprep.subr.mxu0 0.0
        %1941 = vmatpush1.msra.mxu0 0.0
        %1942 = vmatprep.subr.mxu0 0.0
        %1943 = vmatpush1.msra.mxu0 0.0
        %1944 = vmatprep.subr.mxu0 0.0
        %1945 = vmatpush1.msra.mxu0 0.0
        %1946 = vmatprep.subr.mxu0 0.0
        %1947 = vmatpush1.msra.mxu0 0.0
        %1948 = vmatprep.subr.mxu0 0.0
        %1949 = vmatpush1.msra.mxu0 0.0
        %1950 = vmatprep.subr.mxu0 0.0
        %1951 = vmatpush1.msra.mxu0 0.0
        %1952 = vmatprep.subr.mxu0 0.0
        %1953 = vmatpush1.msra.mxu0 0.0
        %1954 = vmatprep.subr.mxu0 0.0
        %1955 = vmatpush1.msra.mxu0 0.0
        %1956 = vmatprep.subr.mxu0 0.0
        %1957 = vmatpush1.msra.mxu0 0.0
        %1958 = vmatprep.subr.mxu0 0.0
        %1959 = vmatpush1.msra.mxu0 0.0
        %1960 = vmatprep.subr.mxu0 0.0
        %1961 = vmatpush1.msra.mxu0 0.0
        %1962 = vmatprep.subr.mxu0 0.0
        %1963 = vmatpush1.msra.mxu0 0.0
        %1964 = vmatprep.subr.mxu0 0.0
        %1965 = vmatpush1.msra.mxu0 0.0
        %1966 = vmatprep.subr.mxu0 0.0
        %1967 = vmatpush1.msra.mxu0 0.0
        %1968 = vmatprep.subr.mxu0 0.0
        %1969 = vmatpush1.msra.mxu0 0.0
        %1970 = vmatprep.subr.mxu0 0.0
        %1971 = vmatpush1.msra.mxu0 0.0
        %1972 = vmatprep.subr.mxu0 0.0
        %1973 = vmatpush1.msra.mxu0 0.0
        %1974 = vmatprep.subr.mxu0 0.0
        %1975 = vmatpush1.msra.mxu0 0.0
        %1976 = vmatprep.subr.mxu0 0.0
        %1977 = vmatpush1.msra.mxu0 0.0
        %1978 = vmatprep.subr.mxu0 0.0
        %1979 = vmatpush1.msra.mxu0 0.0
        %1980 = vmatprep.subr.mxu0 0.0
        %1981 = vmatpush1.msra.mxu0 0.0
        %1982 = vmatprep.mubr.f32.mxu0 0.0
        %v1983 = vand.u32 %v383, 4294901760
        %1984 = vmatmul.mubr.f32.gmra.mrb[0].mxu0 %v1983
        %v1985 = vpop.f32.mrb[0].mxu0
        %v1986 = vadd.f32 %v1865, %v1985
        %v1987 = vpop.f32.mrb[0].mxu0
        %1988 = vdwg.mxu0
        %1989 = vmatprep.subr.mxu0 0.0
        %v1990 = vand.u32 %v285, 4294901760
        %v1991 = vsub.f32 %v285, %v1990
        %1992 = vmatpush1.msra.mxu0 %v1991
        %1993 = vmatprep.subr.mxu0 0.0
        %v1994 = vand.u32 %v290, 4294901760
        %v1995 = vsub.f32 %v290, %v1994
        %1996 = vmatpush1.msra.mxu0 %v1995
        %1997 = vmatprep.subr.mxu0 0.0
        %v1998 = vand.u32 %v295, 4294901760
        %v1999 = vsub.f32 %v295, %v1998
        %2000 = vmatpush1.msra.mxu0 %v1999
        %2001 = vmatprep.subr.mxu0 0.0
        %v2002 = vand.u32 %v300, 4294901760
        %v2003 = vsub.f32 %v300, %v2002
        %2004 = vmatpush1.msra.mxu0 %v2003
        %2005 = vmatprep.subr.mxu0 0.0
        %v2006 = vand.u32 %v305, 4294901760
        %v2007 = vsub.f32 %v305, %v2006
        %2008 = vmatpush1.msra.mxu0 %v2007
        %2009 = vmatprep.subr.mxu0 0.0
        %v2010 = vand.u32 %v310, 4294901760
        %v2011 = vsub.f32 %v310, %v2010
        %2012 = vmatpush1.msra.mxu0 %v2011
        %2013 = vmatprep.subr.mxu0 0.0
        %v2014 = vand.u32 %v315, 4294901760
        %v2015 = vsub.f32 %v315, %v2014
        %2016 = vmatpush1.msra.mxu0 %v2015
        %2017 = vmatprep.subr.mxu0 0.0
        %v2018 = vand.u32 %v320, 4294901760
        %v2019 = vsub.f32 %v320, %v2018
        %2020 = vmatpush1.msra.mxu0 %v2019
        %2021 = vmatprep.subr.mxu0 0.0
        %v2022 = vand.u32 %v325, 4294901760
        %v2023 = vsub.f32 %v325, %v2022
        %2024 = vmatpush1.msra.mxu0 %v2023
        %2025 = vmatprep.subr.mxu0 0.0
        %v2026 = vand.u32 %v330, 4294901760
        %v2027 = vsub.f32 %v330, %v2026
        %2028 = vmatpush1.msra.mxu0 %v2027
        %2029 = vmatprep.subr.mxu0 0.0
        %2030 = vmatpush1.msra.mxu0 0.0
        %2031 = vmatprep.subr.mxu0 0.0
        %2032 = vmatpush1.msra.mxu0 0.0
        %2033 = vmatprep.subr.mxu0 0.0
        %2034 = vmatpush1.msra.mxu0 0.0
        %2035 = vmatprep.subr.mxu0 0.0
        %2036 = vmatpush1.msra.mxu0 0.0
        %2037 = vmatprep.subr.mxu0 0.0
        %2038 = vmatpush1.msra.mxu0 0.0
        %2039 = vmatprep.subr.mxu0 0.0
        %2040 = vmatpush1.msra.mxu0 0.0
        %2041 = vmatprep.subr.mxu0 0.0
        %2042 = vmatpush1.msra.mxu0 0.0
        %2043 = vmatprep.subr.mxu0 0.0
        %2044 = vmatpush1.msra.mxu0 0.0
        %2045 = vmatprep.subr.mxu0 0.0
        %2046 = vmatpush1.msra.mxu0 0.0
        %2047 = vmatprep.subr.mxu0 0.0
        %2048 = vmatpush1.msra.mxu0 0.0
        %2049 = vmatprep.subr.mxu0 0.0
        %2050 = vmatpush1.msra.mxu0 0.0
        %2051 = vmatprep.subr.mxu0 0.0
        %2052 = vmatpush1.msra.mxu0 0.0
        %2053 = vmatprep.subr.mxu0 0.0
        %2054 = vmatpush1.msra.mxu0 0.0
        %2055 = vmatprep.subr.mxu0 0.0
        %2056 = vmatpush1.msra.mxu0 0.0
        %2057 = vmatprep.subr.mxu0 0.0
        %2058 = vmatpush1.msra.mxu0 0.0
        %2059 = vmatprep.subr.mxu0 0.0
        %2060 = vmatpush1.msra.mxu0 0.0
        %2061 = vmatprep.subr.mxu0 0.0
        %2062 = vmatpush1.msra.mxu0 0.0
        %2063 = vmatprep.subr.mxu0 0.0
        %2064 = vmatpush1.msra.mxu0 0.0
        %2065 = vmatprep.subr.mxu0 0.0
        %2066 = vmatpush1.msra.mxu0 0.0
        %2067 = vmatprep.subr.mxu0 0.0
        %2068 = vmatpush1.msra.mxu0 0.0
        %2069 = vmatprep.subr.mxu0 0.0
        %2070 = vmatpush1.msra.mxu0 0.0
        %2071 = vmatprep.subr.mxu0 0.0
        %2072 = vmatpush1.msra.mxu0 0.0
        %2073 = vmatprep.mubr.f32.mxu0 0.0
        %v2074 = vand.u32 %v383, 4294901760
        %v2075 = vsub.f32 %v383, %v2074
        %2076 = vmatmul.mubr.f32.gmra.mrb[0].mxu0 %v2075
        %v2077 = vpop.f32.mrb[0].mxu0
        %v2078 = vadd.f32 %v1986, %v2077
        %v2079 = vpop.f32.mrb[0].mxu0
        %2080 = vdwg.mxu0
        %2081 = vmatprep.subr.mxu0 0.0
        %v2082 = vand.u32 %v285, 4294901760
        %2083 = vmatpush1.msra.mxu0 %v2082
        %2084 = vmatprep.subr.mxu0 0.0
        %v2085 = vand.u32 %v290, 4294901760
        %2086 = vmatpush1.msra.mxu0 %v2085
        %2087 = vmatprep.subr.mxu0 0.0
        %v2088 = vand.u32 %v295, 4294901760
        %2089 = vmatpush1.msra.mxu0 %v2088
        %2090 = vmatprep.subr.mxu0 0.0
        %v2091 = vand.u32 %v300, 4294901760
        %2092 = vmatpush1.msra.mxu0 %v2091
        %2093 = vmatprep.subr.mxu0 0.0
        %v2094 = vand.u32 %v305, 4294901760
        %2095 = vmatpush1.msra.mxu0 %v2094
        %2096 = vmatprep.subr.mxu0 0.0
        %v2097 = vand.u32 %v310, 4294901760
        %2098 = vmatpush1.msra.mxu0 %v2097
        %2099 = vmatprep.subr.mxu0 0.0
        %v2100 = vand.u32 %v315, 4294901760
        %2101 = vmatpush1.msra.mxu0 %v2100
        %2102 = vmatprep.subr.mxu0 0.0
        %v2103 = vand.u32 %v320, 4294901760
        %2104 = vmatpush1.msra.mxu0 %v2103
        %2105 = vmatprep.subr.mxu0 0.0
        %v2106 = vand.u32 %v325, 4294901760
        %2107 = vmatpush1.msra.mxu0 %v2106
        %2108 = vmatprep.subr.mxu0 0.0
        %v2109 = vand.u32 %v330, 4294901760
        %2110 = vmatpush1.msra.mxu0 %v2109
        %2111 = vmatprep.subr.mxu0 0.0
        %2112 = vmatpush1.msra.mxu0 0.0
        %2113 = vmatprep.subr.mxu0 0.0
        %2114 = vmatpush1.msra.mxu0 0.0
        %2115 = vmatprep.subr.mxu0 0.0
        %2116 = vmatpush1.msra.mxu0 0.0
        %2117 = vmatprep.subr.mxu0 0.0
        %2118 = vmatpush1.msra.mxu0 0.0
        %2119 = vmatprep.subr.mxu0 0.0
        %2120 = vmatpush1.msra.mxu0 0.0
        %2121 = vmatprep.subr.mxu0 0.0
        %2122 = vmatpush1.msra.mxu0 0.0
        %2123 = vmatprep.subr.mxu0 0.0
        %2124 = vmatpush1.msra.mxu0 0.0
        %2125 = vmatprep.subr.mxu0 0.0
        %2126 = vmatpush1.msra.mxu0 0.0
        %2127 = vmatprep.subr.mxu0 0.0
        %2128 = vmatpush1.msra.mxu0 0.0
        %2129 = vmatprep.subr.mxu0 0.0
        %2130 = vmatpush1.msra.mxu0 0.0
        %2131 = vmatprep.subr.mxu0 0.0
        %2132 = vmatpush1.msra.mxu0 0.0
        %2133 = vmatprep.subr.mxu0 0.0
        %2134 = vmatpush1.msra.mxu0 0.0
        %2135 = vmatprep.subr.mxu0 0.0
        %2136 = vmatpush1.msra.mxu0 0.0
        %2137 = vmatprep.subr.mxu0 0.0
        %2138 = vmatpush1.msra.mxu0 0.0
        %2139 = vmatprep.subr.mxu0 0.0
        %2140 = vmatpush1.msra.mxu0 0.0
        %2141 = vmatprep.subr.mxu0 0.0
        %2142 = vmatpush1.msra.mxu0 0.0
        %2143 = vmatprep.subr.mxu0 0.0
        %2144 = vmatpush1.msra.mxu0 0.0
        %2145 = vmatprep.subr.mxu0 0.0
        %2146 = vmatpush1.msra.mxu0 0.0
        %2147 = vmatprep.subr.mxu0 0.0
        %2148 = vmatpush1.msra.mxu0 0.0
        %2149 = vmatprep.subr.mxu0 0.0
        %2150 = vmatpush1.msra.mxu0 0.0
        %2151 = vmatprep.subr.mxu0 0.0
        %2152 = vmatpush1.msra.mxu0 0.0
        %2153 = vmatprep.subr.mxu0 0.0
        %2154 = vmatpush1.msra.mxu0 0.0
        %2155 = vmatprep.mubr.f32.mxu0 0.0
        %v2156 = vand.u32 %v383, 4294901760
        %v2157 = vsub.f32 %v383, %v2156
        %v2158 = vand.u32 %v2157, 4294901760
        %2159 = vmatmul.mubr.f32.gmra.mrb[0].mxu0 %v2158
        %v2160 = vpop.f32.mrb[0].mxu0
        %v2161 = vadd.f32 %v2078, %v2160
        %v2162 = vpop.f32.mrb[0].mxu0
        %2163 = vdwg.mxu0
        %2164 = vmatprep.subr.mxu0 0.0
        %v2165 = vand.u32 %v285, 4294901760
        %v2166 = vsub.f32 %v285, %v2165
        %v2167 = vand.u32 %v2166, 4294901760
        %2168 = vmatpush1.msra.mxu0 %v2167
        %2169 = vmatprep.subr.mxu0 0.0
        %v2170 = vand.u32 %v290, 4294901760
        %v2171 = vsub.f32 %v290, %v2170
        %v2172 = vand.u32 %v2171, 4294901760
        %2173 = vmatpush1.msra.mxu0 %v2172
        %2174 = vmatprep.subr.mxu0 0.0
        %v2175 = vand.u32 %v295, 4294901760
        %v2176 = vsub.f32 %v295, %v2175
        %v2177 = vand.u32 %v2176, 4294901760
        %2178 = vmatpush1.msra.mxu0 %v2177
        %2179 = vmatprep.subr.mxu0 0.0
        %v2180 = vand.u32 %v300, 4294901760
        %v2181 = vsub.f32 %v300, %v2180
        %v2182 = vand.u32 %v2181, 4294901760
        %2183 = vmatpush1.msra.mxu0 %v2182
        %2184 = vmatprep.subr.mxu0 0.0
        %v2185 = vand.u32 %v305, 4294901760
        %v2186 = vsub.f32 %v305, %v2185
        %v2187 = vand.u32 %v2186, 4294901760
        %2188 = vmatpush1.msra.mxu0 %v2187
        %2189 = vmatprep.subr.mxu0 0.0
        %v2190 = vand.u32 %v310, 4294901760
        %v2191 = vsub.f32 %v310, %v2190
        %v2192 = vand.u32 %v2191, 4294901760
        %2193 = vmatpush1.msra.mxu0 %v2192
        %2194 = vmatprep.subr.mxu0 0.0
        %v2195 = vand.u32 %v315, 4294901760
        %v2196 = vsub.f32 %v315, %v2195
        %v2197 = vand.u32 %v2196, 4294901760
        %2198 = vmatpush1.msra.mxu0 %v2197
        %2199 = vmatprep.subr.mxu0 0.0
        %v2200 = vand.u32 %v320, 4294901760
        %v2201 = vsub.f32 %v320, %v2200
        %v2202 = vand.u32 %v2201, 4294901760
        %2203 = vmatpush1.msra.mxu0 %v2202
        %2204 = vmatprep.subr.mxu0 0.0
        %v2205 = vand.u32 %v325, 4294901760
        %v2206 = vsub.f32 %v325, %v2205
        %v2207 = vand.u32 %v2206, 4294901760
        %2208 = vmatpush1.msra.mxu0 %v2207
        %2209 = vmatprep.subr.mxu0 0.0
        %v2210 = vand.u32 %v330, 4294901760
        %v2211 = vsub.f32 %v330, %v2210
        %v2212 = vand.u32 %v2211, 4294901760
        %2213 = vmatpush1.msra.mxu0 %v2212
        %2214 = vmatprep.subr.mxu0 0.0
        %2215 = vmatpush1.msra.mxu0 0.0
        %2216 = vmatprep.subr.mxu0 0.0
        %2217 = vmatpush1.msra.mxu0 0.0
        %2218 = vmatprep.subr.mxu0 0.0
        %2219 = vmatpush1.msra.mxu0 0.0
        %2220 = vmatprep.subr.mxu0 0.0
        %2221 = vmatpush1.msra.mxu0 0.0
        %2222 = vmatprep.subr.mxu0 0.0
        %2223 = vmatpush1.msra.mxu0 0.0
        %2224 = vmatprep.subr.mxu0 0.0
        %2225 = vmatpush1.msra.mxu0 0.0
        %2226 = vmatprep.subr.mxu0 0.0
        %2227 = vmatpush1.msra.mxu0 0.0
        %2228 = vmatprep.subr.mxu0 0.0
        %2229 = vmatpush1.msra.mxu0 0.0
        %2230 = vmatprep.subr.mxu0 0.0
        %2231 = vmatpush1.msra.mxu0 0.0
        %2232 = vmatprep.subr.mxu0 0.0
        %2233 = vmatpush1.msra.mxu0 0.0
        %2234 = vmatprep.subr.mxu0 0.0
        %2235 = vmatpush1.msra.mxu0 0.0
        %2236 = vmatprep.subr.mxu0 0.0
        %2237 = vmatpush1.msra.mxu0 0.0
        %2238 = vmatprep.subr.mxu0 0.0
        %2239 = vmatpush1.msra.mxu0 0.0
        %2240 = vmatprep.subr.mxu0 0.0
        %2241 = vmatpush1.msra.mxu0 0.0
        %2242 = vmatprep.subr.mxu0 0.0
        %2243 = vmatpush1.msra.mxu0 0.0
        %2244 = vmatprep.subr.mxu0 0.0
        %2245 = vmatpush1.msra.mxu0 0.0
        %2246 = vmatprep.subr.mxu0 0.0
        %2247 = vmatpush1.msra.mxu0 0.0
        %2248 = vmatprep.subr.mxu0 0.0
        %2249 = vmatpush1.msra.mxu0 0.0
        %2250 = vmatprep.subr.mxu0 0.0
        %2251 = vmatpush1.msra.mxu0 0.0
        %2252 = vmatprep.subr.mxu0 0.0
        %2253 = vmatpush1.msra.mxu0 0.0
        %2254 = vmatprep.subr.mxu0 0.0
        %2255 = vmatpush1.msra.mxu0 0.0
        %2256 = vmatprep.subr.mxu0 0.0
        %2257 = vmatpush1.msra.mxu0 0.0
        %2258 = vmatprep.mubr.f32.mxu0 0.0
        %v2259 = vand.u32 %v383, 4294901760
        %2260 = vmatmul.mubr.f32.gmra.mrb[0].mxu0 %v2259
        %v2261 = vpop.f32.mrb[0].mxu0
        %v2262 = vadd.f32 %v2161, %v2261
        %v2263 = vpop.f32.mrb[0].mxu0
        %2264 = vdwg.mxu0
        %2265 = vmatprep.subr.mxu0 0.0
        %v2266 = vand.u32 %v285, 4294901760
        %2267 = vmatpush1.msra.mxu0 %v2266
        %2268 = vmatprep.subr.mxu0 0.0
        %v2269 = vand.u32 %v290, 4294901760
        %2270 = vmatpush1.msra.mxu0 %v2269
        %2271 = vmatprep.subr.mxu0 0.0
        %v2272 = vand.u32 %v295, 4294901760
        %2273 = vmatpush1.msra.mxu0 %v2272
        %2274 = vmatprep.subr.mxu0 0.0
        %v2275 = vand.u32 %v300, 4294901760
        %2276 = vmatpush1.msra.mxu0 %v2275
        %2277 = vmatprep.subr.mxu0 0.0
        %v2278 = vand.u32 %v305, 4294901760
        %2279 = vmatpush1.msra.mxu0 %v2278
        %2280 = vmatprep.subr.mxu0 0.0
        %v2281 = vand.u32 %v310, 4294901760
        %2282 = vmatpush1.msra.mxu0 %v2281
        %2283 = vmatprep.subr.mxu0 0.0
        %v2284 = vand.u32 %v315, 4294901760
        %2285 = vmatpush1.msra.mxu0 %v2284
        %2286 = vmatprep.subr.mxu0 0.0
        %v2287 = vand.u32 %v320, 4294901760
        %2288 = vmatpush1.msra.mxu0 %v2287
        %2289 = vmatprep.subr.mxu0 0.0
        %v2290 = vand.u32 %v325, 4294901760
        %2291 = vmatpush1.msra.mxu0 %v2290
        %2292 = vmatprep.subr.mxu0 0.0
        %v2293 = vand.u32 %v330, 4294901760
        %2294 = vmatpush1.msra.mxu0 %v2293
        %2295 = vmatprep.subr.mxu0 0.0
        %2296 = vmatpush1.msra.mxu0 0.0
        %2297 = vmatprep.subr.mxu0 0.0
        %2298 = vmatpush1.msra.mxu0 0.0
        %2299 = vmatprep.subr.mxu0 0.0
        %2300 = vmatpush1.msra.mxu0 0.0
        %2301 = vmatprep.subr.mxu0 0.0
        %2302 = vmatpush1.msra.mxu0 0.0
        %2303 = vmatprep.subr.mxu0 0.0
        %2304 = vmatpush1.msra.mxu0 0.0
        %2305 = vmatprep.subr.mxu0 0.0
        %2306 = vmatpush1.msra.mxu0 0.0
        %2307 = vmatprep.subr.mxu0 0.0
        %2308 = vmatpush1.msra.mxu0 0.0
        %2309 = vmatprep.subr.mxu0 0.0
        %2310 = vmatpush1.msra.mxu0 0.0
        %2311 = vmatprep.subr.mxu0 0.0
        %2312 = vmatpush1.msra.mxu0 0.0
        %2313 = vmatprep.subr.mxu0 0.0
        %2314 = vmatpush1.msra.mxu0 0.0
        %2315 = vmatprep.subr.mxu0 0.0
        %2316 = vmatpush1.msra.mxu0 0.0
        %2317 = vmatprep.subr.mxu0 0.0
        %2318 = vmatpush1.msra.mxu0 0.0
        %2319 = vmatprep.subr.mxu0 0.0
        %2320 = vmatpush1.msra.mxu0 0.0
        %2321 = vmatprep.subr.mxu0 0.0
        %2322 = vmatpush1.msra.mxu0 0.0
        %2323 = vmatprep.subr.mxu0 0.0
        %2324 = vmatpush1.msra.mxu0 0.0
        %2325 = vmatprep.subr.mxu0 0.0
        %2326 = vmatpush1.msra.mxu0 0.0
        %2327 = vmatprep.subr.mxu0 0.0
        %2328 = vmatpush1.msra.mxu0 0.0
        %2329 = vmatprep.subr.mxu0 0.0
        %2330 = vmatpush1.msra.mxu0 0.0
        %2331 = vmatprep.subr.mxu0 0.0
        %2332 = vmatpush1.msra.mxu0 0.0
        %2333 = vmatprep.subr.mxu0 0.0
        %2334 = vmatpush1.msra.mxu0 0.0
        %2335 = vmatprep.subr.mxu0 0.0
        %2336 = vmatpush1.msra.mxu0 0.0
        %2337 = vmatprep.subr.mxu0 0.0
        %2338 = vmatpush1.msra.mxu0 0.0
        %2339 = vmatprep.mubr.f32.mxu0 0.0
        %v2340 = vand.u32 %v383, 4294901760
        %2341 = vmatmul.mubr.f32.gmra.mrb[0].mxu0 %v2340
        %v2342 = vpop.f32.mrb[0].mxu0
        %v2343 = vadd.f32 %v2262, %v2342
        %v2344 = vpop.f32.mrb[0].mxu0
        %2345 = vdwg.mxu0
        %v2346 = vld [vmem:[%s3] sm:$0x1f]
        %v2348 = vlaneseq
        %v2349 = vshrl.u32 %v2348, 7
        %v2350 = vsub.s32 0, %v2349
        %v2351 = vrot.slane %v2346, %v2350
        %v2352 = vlaneseq
        %v2353 = vshrl.u32 %v2352, 7
        %v2354 = vsub.s32 1, %v2353
        %v2355 = vrot.slane %v2346, %v2354
        %v2356 = vlaneseq
        %v2357 = vshrl.u32 %v2356, 7
        %v2358 = vsub.s32 2, %v2357
        %v2359 = vrot.slane %v2346, %v2358
        %v2360 = vlaneseq
        %v2361 = vshrl.u32 %v2360, 7
        %v2362 = vsub.s32 3, %v2361
        %v2363 = vrot.slane %v2346, %v2362
        %v2364 = vlaneseq
        %v2365 = vshrl.u32 %v2364, 7
        %v2366 = vsub.s32 4, %v2365
        %v2367 = vrot.slane %v2346, %v2366
        %v2373 = vand.u32 %v332, 4294901760
        %2374 = vmatprep.subr.mxu0 %v2373
        %v2375 = vand.u32 %v331, 4294901760
        %2376 = vmatpush1.msra.mxu0 %v2375
        %v2377 = vand.u32 %v337, 4294901760
        %2378 = vmatprep.subr.mxu0 %v2377
        %v2379 = vand.u32 %v336, 4294901760
        %2380 = vmatpush1.msra.mxu0 %v2379
        %v2381 = vand.u32 %v342, 4294901760
        %2382 = vmatprep.subr.mxu0 %v2381
        %v2383 = vand.u32 %v341, 4294901760
        %2384 = vmatpush1.msra.mxu0 %v2383
        %v2385 = vand.u32 %v347, 4294901760
        %2386 = vmatprep.subr.mxu0 %v2385
        %v2387 = vand.u32 %v346, 4294901760
        %2388 = vmatpush1.msra.mxu0 %v2387
        %v2389 = vand.u32 %v352, 4294901760
        %2390 = vmatprep.subr.mxu0 %v2389
        %v2391 = vand.u32 %v351, 4294901760
        %2392 = vmatpush1.msra.mxu0 %v2391
        %v2393 = vand.u32 %v357, 4294901760
        %2394 = vmatprep.subr.mxu0 %v2393
        %v2395 = vand.u32 %v356, 4294901760
        %2396 = vmatpush1.msra.mxu0 %v2395
        %v2397 = vand.u32 %v362, 4294901760
        %2398 = vmatprep.subr.mxu0 %v2397
        %v2399 = vand.u32 %v361, 4294901760
        %2400 = vmatpush1.msra.mxu0 %v2399
        %v2401 = vand.u32 %v367, 4294901760
        %2402 = vmatprep.subr.mxu0 %v2401
        %v2403 = vand.u32 %v366, 4294901760
        %2404 = vmatpush1.msra.mxu0 %v2403
        %v2405 = vand.u32 %v372, 4294901760
        %2406 = vmatprep.subr.mxu0 %v2405
        %v2407 = vand.u32 %v371, 4294901760
        %2408 = vmatpush1.msra.mxu0 %v2407
        %v2409 = vand.u32 %v377, 4294901760
        %2410 = vmatprep.subr.mxu0 %v2409
        %v2411 = vand.u32 %v376, 4294901760
        %2412 = vmatpush1.msra.mxu0 %v2411
        %2413 = vmatprep.subr.mxu0 0.0
        %2414 = vmatpush1.msra.mxu0 0.0
        %2415 = vmatprep.subr.mxu0 0.0
        %2416 = vmatpush1.msra.mxu0 0.0
        %2417 = vmatprep.subr.mxu0 0.0
        %2418 = vmatpush1.msra.mxu0 0.0
        %2419 = vmatprep.subr.mxu0 0.0
        %2420 = vmatpush1.msra.mxu0 0.0
        %2421 = vmatprep.subr.mxu0 0.0
        %2422 = vmatpush1.msra.mxu0 0.0
        %2423 = vmatprep.subr.mxu0 0.0
        %2424 = vmatpush1.msra.mxu0 0.0
        %2425 = vmatprep.subr.mxu0 0.0
        %2426 = vmatpush1.msra.mxu0 0.0
        %2427 = vmatprep.subr.mxu0 0.0
        %2428 = vmatpush1.msra.mxu0 0.0
        %2429 = vmatprep.subr.mxu0 0.0
        %2430 = vmatpush1.msra.mxu0 0.0
        %2431 = vmatprep.subr.mxu0 0.0
        %2432 = vmatpush1.msra.mxu0 0.0
        %2433 = vmatprep.subr.mxu0 0.0
        %2434 = vmatpush1.msra.mxu0 0.0
        %2435 = vmatprep.subr.mxu0 0.0
        %2436 = vmatpush1.msra.mxu0 0.0
        %2437 = vmatprep.subr.mxu0 0.0
        %2438 = vmatpush1.msra.mxu0 0.0
        %2439 = vmatprep.subr.mxu0 0.0
        %2440 = vmatpush1.msra.mxu0 0.0
        %2441 = vmatprep.subr.mxu0 0.0
        %2442 = vmatpush1.msra.mxu0 0.0
        %2443 = vmatprep.subr.mxu0 0.0
        %2444 = vmatpush1.msra.mxu0 0.0
        %2445 = vmatprep.subr.mxu0 0.0
        %2446 = vmatpush1.msra.mxu0 0.0
        %2447 = vmatprep.subr.mxu0 0.0
        %2448 = vmatpush1.msra.mxu0 0.0
        %2449 = vmatprep.subr.mxu0 0.0
        %2450 = vmatpush1.msra.mxu0 0.0
        %2451 = vmatprep.subr.mxu0 0.0
        %2452 = vmatpush1.msra.mxu0 0.0
        %2453 = vmatprep.subr.mxu0 0.0
        %2454 = vmatpush1.msra.mxu0 0.0
        %2455 = vmatprep.subr.mxu0 0.0
        %2456 = vmatpush1.msra.mxu0 0.0
        %2457 = vmatprep.mubr.f32.mxu0 0.0
        %v2458 = vand.u32 %v383, 4294901760
        %v2459 = vsub.f32 %v383, %v2458
        %v2460 = vand.u32 %v2459, 4294901760
        %v2461 = vsub.f32 %v2459, %v2460
        %v2462 = vand.u32 %v2461, 4294901760
        %2463 = vmatmul.mubr.f32.gmra.mrb[0].mxu0 %v2462
        %v2464 = vpop.f32.mrb[0].mxu0
        %v2465 = vadd.f32 %v2351, %v2464
        %v2466 = vpop.f32.mrb[0].mxu0
        %v2467 = vadd.f32 %v2355, %v2466
        %2468 = vdwg.mxu0
        %v2469 = vand.u32 %v332, 4294901760
        %v2470 = vsub.f32 %v332, %v2469
        %v2471 = vand.u32 %v2470, 4294901760
        %v2472 = vsub.f32 %v2470, %v2471
        %v2473 = vand.u32 %v2472, 4294901760
        %2474 = vmatprep.subr.mxu0 %v2473
        %v2475 = vand.u32 %v331, 4294901760
        %v2476 = vsub.f32 %v331, %v2475
        %v2477 = vand.u32 %v2476, 4294901760
        %v2478 = vsub.f32 %v2476, %v2477
        %v2479 = vand.u32 %v2478, 4294901760
        %2480 = vmatpush1.msra.mxu0 %v2479
        %v2481 = vand.u32 %v337, 4294901760
        %v2482 = vsub.f32 %v337, %v2481
        %v2483 = vand.u32 %v2482, 4294901760
        %v2484 = vsub.f32 %v2482, %v2483
        %v2485 = vand.u32 %v2484, 4294901760
        %2486 = vmatprep.subr.mxu0 %v2485
        %v2487 = vand.u32 %v336, 4294901760
        %v2488 = vsub.f32 %v336, %v2487
        %v2489 = vand.u32 %v2488, 4294901760
        %v2490 = vsub.f32 %v2488, %v2489
        %v2491 = vand.u32 %v2490, 4294901760
        %2492 = vmatpush1.msra.mxu0 %v2491
        %v2493 = vand.u32 %v342, 4294901760
        %v2494 = vsub.f32 %v342, %v2493
        %v2495 = vand.u32 %v2494, 4294901760
        %v2496 = vsub.f32 %v2494, %v2495
        %v2497 = vand.u32 %v2496, 4294901760
        %2498 = vmatprep.subr.mxu0 %v2497
        %v2499 = vand.u32 %v341, 4294901760
        %v2500 = vsub.f32 %v341, %v2499
        %v2501 = vand.u32 %v2500, 4294901760
        %v2502 = vsub.f32 %v2500, %v2501
        %v2503 = vand.u32 %v2502, 4294901760
        %2504 = vmatpush1.msra.mxu0 %v2503
        %v2505 = vand.u32 %v347, 4294901760
        %v2506 = vsub.f32 %v347, %v2505
        %v2507 = vand.u32 %v2506, 4294901760
        %v2508 = vsub.f32 %v2506, %v2507
        %v2509 = vand.u32 %v2508, 4294901760
        %2510 = vmatprep.subr.mxu0 %v2509
        %v2511 = vand.u32 %v346, 4294901760
        %v2512 = vsub.f32 %v346, %v2511
        %v2513 = vand.u32 %v2512, 4294901760
        %v2514 = vsub.f32 %v2512, %v2513
        %v2515 = vand.u32 %v2514, 4294901760
        %2516 = vmatpush1.msra.mxu0 %v2515
        %v2517 = vand.u32 %v352, 4294901760
        %v2518 = vsub.f32 %v352, %v2517
        %v2519 = vand.u32 %v2518, 4294901760
        %v2520 = vsub.f32 %v2518, %v2519
        %v2521 = vand.u32 %v2520, 4294901760
        %2522 = vmatprep.subr.mxu0 %v2521
        %v2523 = vand.u32 %v351, 4294901760
        %v2524 = vsub.f32 %v351, %v2523
        %v2525 = vand.u32 %v2524, 4294901760
        %v2526 = vsub.f32 %v2524, %v2525
        %v2527 = vand.u32 %v2526, 4294901760
        %2528 = vmatpush1.msra.mxu0 %v2527
        %v2529 = vand.u32 %v357, 4294901760
        %v2530 = vsub.f32 %v357, %v2529
        %v2531 = vand.u32 %v2530, 4294901760
        %v2532 = vsub.f32 %v2530, %v2531
        %v2533 = vand.u32 %v2532, 4294901760
        %2534 = vmatprep.subr.mxu0 %v2533
        %v2535 = vand.u32 %v356, 4294901760
        %v2536 = vsub.f32 %v356, %v2535
        %v2537 = vand.u32 %v2536, 4294901760
        %v2538 = vsub.f32 %v2536, %v2537
        %v2539 = vand.u32 %v2538, 4294901760
        %2540 = vmatpush1.msra.mxu0 %v2539
        %v2541 = vand.u32 %v362, 4294901760
        %v2542 = vsub.f32 %v362, %v2541
        %v2543 = vand.u32 %v2542, 4294901760
        %v2544 = vsub.f32 %v2542, %v2543
        %v2545 = vand.u32 %v2544, 4294901760
        %2546 = vmatprep.subr.mxu0 %v2545
        %v2547 = vand.u32 %v361, 4294901760
        %v2548 = vsub.f32 %v361, %v2547
        %v2549 = vand.u32 %v2548, 4294901760
        %v2550 = vsub.f32 %v2548, %v2549
        %v2551 = vand.u32 %v2550, 4294901760
        %2552 = vmatpush1.msra.mxu0 %v2551
        %v2553 = vand.u32 %v367, 4294901760
        %v2554 = vsub.f32 %v367, %v2553
        %v2555 = vand.u32 %v2554, 4294901760
        %v2556 = vsub.f32 %v2554, %v2555
        %v2557 = vand.u32 %v2556, 4294901760
        %2558 = vmatprep.subr.mxu0 %v2557
        %v2559 = vand.u32 %v366, 4294901760
        %v2560 = vsub.f32 %v366, %v2559
        %v2561 = vand.u32 %v2560, 4294901760
        %v2562 = vsub.f32 %v2560, %v2561
        %v2563 = vand.u32 %v2562, 4294901760
        %2564 = vmatpush1.msra.mxu0 %v2563
        %v2565 = vand.u32 %v372, 4294901760
        %v2566 = vsub.f32 %v372, %v2565
        %v2567 = vand.u32 %v2566, 4294901760
        %v2568 = vsub.f32 %v2566, %v2567
        %v2569 = vand.u32 %v2568, 4294901760
        %2570 = vmatprep.subr.mxu0 %v2569
        %v2571 = vand.u32 %v371, 4294901760
        %v2572 = vsub.f32 %v371, %v2571
        %v2573 = vand.u32 %v2572, 4294901760
        %v2574 = vsub.f32 %v2572, %v2573
        %v2575 = vand.u32 %v2574, 4294901760
        %2576 = vmatpush1.msra.mxu0 %v2575
        %v2577 = vand.u32 %v377, 4294901760
        %v2578 = vsub.f32 %v377, %v2577
        %v2579 = vand.u32 %v2578, 4294901760
        %v2580 = vsub.f32 %v2578, %v2579
        %v2581 = vand.u32 %v2580, 4294901760
        %2582 = vmatprep.subr.mxu0 %v2581
        %v2583 = vand.u32 %v376, 4294901760
        %v2584 = vsub.f32 %v376, %v2583
        %v2585 = vand.u32 %v2584, 4294901760
        %v2586 = vsub.f32 %v2584, %v2585
        %v2587 = vand.u32 %v2586, 4294901760
        %2588 = vmatpush1.msra.mxu0 %v2587
        %2589 = vmatprep.subr.mxu0 0.0
        %2590 = vmatpush1.msra.mxu0 0.0
        %2591 = vmatprep.subr.mxu0 0.0
        %2592 = vmatpush1.msra.mxu0 0.0
        %2593 = vmatprep.subr.mxu0 0.0
        %2594 = vmatpush1.msra.mxu0 0.0
        %2595 = vmatprep.subr.mxu0 0.0
        %2596 = vmatpush1.msra.mxu0 0.0
        %2597 = vmatprep.subr.mxu0 0.0
        %2598 = vmatpush1.msra.mxu0 0.0
        %2599 = vmatprep.subr.mxu0 0.0
        %2600 = vmatpush1.msra.mxu0 0.0
        %2601 = vmatprep.subr.mxu0 0.0
        %2602 = vmatpush1.msra.mxu0 0.0
        %2603 = vmatprep.subr.mxu0 0.0
        %2604 = vmatpush1.msra.mxu0 0.0
        %2605 = vmatprep.subr.mxu0 0.0
        %2606 = vmatpush1.msra.mxu0 0.0
        %2607 = vmatprep.subr.mxu0 0.0
        %2608 = vmatpush1.msra.mxu0 0.0
        %2609 = vmatprep.subr.mxu0 0.0
        %2610 = vmatpush1.msra.mxu0 0.0
        %2611 = vmatprep.subr.mxu0 0.0
        %2612 = vmatpush1.msra.mxu0 0.0
        %2613 = vmatprep.subr.mxu0 0.0
        %2614 = vmatpush1.msra.mxu0 0.0
        %2615 = vmatprep.subr.mxu0 0.0
        %2616 = vmatpush1.msra.mxu0 0.0
        %2617 = vmatprep.subr.mxu0 0.0
        %2618 = vmatpush1.msra.mxu0 0.0
        %2619 = vmatprep.subr.mxu0 0.0
        %2620 = vmatpush1.msra.mxu0 0.0
        %2621 = vmatprep.subr.mxu0 0.0
        %2622 = vmatpush1.msra.mxu0 0.0
        %2623 = vmatprep.subr.mxu0 0.0
        %2624 = vmatpush1.msra.mxu0 0.0
        %2625 = vmatprep.subr.mxu0 0.0
        %2626 = vmatpush1.msra.mxu0 0.0
        %2627 = vmatprep.subr.mxu0 0.0
        %2628 = vmatpush1.msra.mxu0 0.0
        %2629 = vmatprep.subr.mxu0 0.0
        %2630 = vmatpush1.msra.mxu0 0.0
        %2631 = vmatprep.subr.mxu0 0.0
        %2632 = vmatpush1.msra.mxu0 0.0
        %2633 = vmatprep.mubr.f32.mxu0 0.0
        %v2634 = vand.u32 %v383, 4294901760
        %2635 = vmatmul.mubr.f32.gmra.mrb[0].mxu0 %v2634
        %v2636 = vpop.f32.mrb[0].mxu0
        %v2637 = vadd.f32 %v2465, %v2636
        %v2638 = vpop.f32.mrb[0].mxu0
        %v2639 = vadd.f32 %v2467, %v2638
        %2640 = vdwg.mxu0
        %v2641 = vand.u32 %v332, 4294901760
        %v2642 = vsub.f32 %v332, %v2641
        %2643 = vmatprep.subr.mxu0 %v2642
        %v2644 = vand.u32 %v331, 4294901760
        %v2645 = vsub.f32 %v331, %v2644
        %2646 = vmatpush1.msra.mxu0 %v2645
        %v2647 = vand.u32 %v337, 4294901760
        %v2648 = vsub.f32 %v337, %v2647
        %2649 = vmatprep.subr.mxu0 %v2648
        %v2650 = vand.u32 %v336, 4294901760
        %v2651 = vsub.f32 %v336, %v2650
        %2652 = vmatpush1.msra.mxu0 %v2651
        %v2653 = vand.u32 %v342, 4294901760
        %v2654 = vsub.f32 %v342, %v2653
        %2655 = vmatprep.subr.mxu0 %v2654
        %v2656 = vand.u32 %v341, 4294901760
        %v2657 = vsub.f32 %v341, %v2656
        %2658 = vmatpush1.msra.mxu0 %v2657
        %v2659 = vand.u32 %v347, 4294901760
        %v2660 = vsub.f32 %v347, %v2659
        %2661 = vmatprep.subr.mxu0 %v2660
        %v2662 = vand.u32 %v346, 4294901760
        %v2663 = vsub.f32 %v346, %v2662
        %2664 = vmatpush1.msra.mxu0 %v2663
        %v2665 = vand.u32 %v352, 4294901760
        %v2666 = vsub.f32 %v352, %v2665
        %2667 = vmatprep.subr.mxu0 %v2666
        %v2668 = vand.u32 %v351, 4294901760
        %v2669 = vsub.f32 %v351, %v2668
        %2670 = vmatpush1.msra.mxu0 %v2669
        %v2671 = vand.u32 %v357, 4294901760
        %v2672 = vsub.f32 %v357, %v2671
        %2673 = vmatprep.subr.mxu0 %v2672
        %v2674 = vand.u32 %v356, 4294901760
        %v2675 = vsub.f32 %v356, %v2674
        %2676 = vmatpush1.msra.mxu0 %v2675
        %v2677 = vand.u32 %v362, 4294901760
        %v2678 = vsub.f32 %v362, %v2677
        %2679 = vmatprep.subr.mxu0 %v2678
        %v2680 = vand.u32 %v361, 4294901760
        %v2681 = vsub.f32 %v361, %v2680
        %2682 = vmatpush1.msra.mxu0 %v2681
        %v2683 = vand.u32 %v367, 4294901760
        %v2684 = vsub.f32 %v367, %v2683
        %2685 = vmatprep.subr.mxu0 %v2684
        %v2686 = vand.u32 %v366, 4294901760
        %v2687 = vsub.f32 %v366, %v2686
        %2688 = vmatpush1.msra.mxu0 %v2687
        %v2689 = vand.u32 %v372, 4294901760
        %v2690 = vsub.f32 %v372, %v2689
        %2691 = vmatprep.subr.mxu0 %v2690
        %v2692 = vand.u32 %v371, 4294901760
        %v2693 = vsub.f32 %v371, %v2692
        %2694 = vmatpush1.msra.mxu0 %v2693
        %v2695 = vand.u32 %v377, 4294901760
        %v2696 = vsub.f32 %v377, %v2695
        %2697 = vmatprep.subr.mxu0 %v2696
        %v2698 = vand.u32 %v376, 4294901760
        %v2699 = vsub.f32 %v376, %v2698
        %2700 = vmatpush1.msra.mxu0 %v2699
        %2701 = vmatprep.subr.mxu0 0.0
        %2702 = vmatpush1.msra.mxu0 0.0
        %2703 = vmatprep.subr.mxu0 0.0
        %2704 = vmatpush1.msra.mxu0 0.0
        %2705 = vmatprep.subr.mxu0 0.0
        %2706 = vmatpush1.msra.mxu0 0.0
        %2707 = vmatprep.subr.mxu0 0.0
        %2708 = vmatpush1.msra.mxu0 0.0
        %2709 = vmatprep.subr.mxu0 0.0
        %2710 = vmatpush1.msra.mxu0 0.0
        %2711 = vmatprep.subr.mxu0 0.0
        %2712 = vmatpush1.msra.mxu0 0.0
        %2713 = vmatprep.subr.mxu0 0.0
        %2714 = vmatpush1.msra.mxu0 0.0
        %2715 = vmatprep.subr.mxu0 0.0
        %2716 = vmatpush1.msra.mxu0 0.0
        %2717 = vmatprep.subr.mxu0 0.0
        %2718 = vmatpush1.msra.mxu0 0.0
        %2719 = vmatprep.subr.mxu0 0.0
        %2720 = vmatpush1.msra.mxu0 0.0
        %2721 = vmatprep.subr.mxu0 0.0
        %2722 = vmatpush1.msra.mxu0 0.0
        %2723 = vmatprep.subr.mxu0 0.0
        %2724 = vmatpush1.msra.mxu0 0.0
        %2725 = vmatprep.subr.mxu0 0.0
        %2726 = vmatpush1.msra.mxu0 0.0
        %2727 = vmatprep.subr.mxu0 0.0
        %2728 = vmatpush1.msra.mxu0 0.0
        %2729 = vmatprep.subr.mxu0 0.0
        %2730 = vmatpush1.msra.mxu0 0.0
        %2731 = vmatprep.subr.mxu0 0.0
        %2732 = vmatpush1.msra.mxu0 0.0
        %2733 = vmatprep.subr.mxu0 0.0
        %2734 = vmatpush1.msra.mxu0 0.0
        %2735 = vmatprep.subr.mxu0 0.0
        %2736 = vmatpush1.msra.mxu0 0.0
        %2737 = vmatprep.subr.mxu0 0.0
        %2738 = vmatpush1.msra.mxu0 0.0
        %2739 = vmatprep.subr.mxu0 0.0
        %2740 = vmatpush1.msra.mxu0 0.0
        %2741 = vmatprep.subr.mxu0 0.0
        %2742 = vmatpush1.msra.mxu0 0.0
        %2743 = vmatprep.subr.mxu0 0.0
        %2744 = vmatpush1.msra.mxu0 0.0
        %2745 = vmatprep.mubr.f32.mxu0 0.0
        %v2746 = vand.u32 %v383, 4294901760
        %v2747 = vsub.f32 %v383, %v2746
        %2748 = vmatmul.mubr.f32.gmra.mrb[0].mxu0 %v2747
        %v2749 = vpop.f32.mrb[0].mxu0
        %v2750 = vadd.f32 %v2637, %v2749
        %v2751 = vpop.f32.mrb[0].mxu0
        %v2752 = vadd.f32 %v2639, %v2751
        %2753 = vdwg.mxu0
        %v2754 = vand.u32 %v332, 4294901760
        %2755 = vmatprep.subr.mxu0 %v2754
        %v2756 = vand.u32 %v331, 4294901760
        %2757 = vmatpush1.msra.mxu0 %v2756
        %v2758 = vand.u32 %v337, 4294901760
        %2759 = vmatprep.subr.mxu0 %v2758
        %v2760 = vand.u32 %v336, 4294901760
        %2761 = vmatpush1.msra.mxu0 %v2760
        %v2762 = vand.u32 %v342, 4294901760
        %2763 = vmatprep.subr.mxu0 %v2762
        %v2764 = vand.u32 %v341, 4294901760
        %2765 = vmatpush1.msra.mxu0 %v2764
        %v2766 = vand.u32 %v347, 4294901760
        %2767 = vmatprep.subr.mxu0 %v2766
        %v2768 = vand.u32 %v346, 4294901760
        %2769 = vmatpush1.msra.mxu0 %v2768
        %v2770 = vand.u32 %v352, 4294901760
        %2771 = vmatprep.subr.mxu0 %v2770
        %v2772 = vand.u32 %v351, 4294901760
        %2773 = vmatpush1.msra.mxu0 %v2772
        %v2774 = vand.u32 %v357, 4294901760
        %2775 = vmatprep.subr.mxu0 %v2774
        %v2776 = vand.u32 %v356, 4294901760
        %2777 = vmatpush1.msra.mxu0 %v2776
        %v2778 = vand.u32 %v362, 4294901760
        %2779 = vmatprep.subr.mxu0 %v2778
        %v2780 = vand.u32 %v361, 4294901760
        %2781 = vmatpush1.msra.mxu0 %v2780
        %v2782 = vand.u32 %v367, 4294901760
        %2783 = vmatprep.subr.mxu0 %v2782
        %v2784 = vand.u32 %v366, 4294901760
        %2785 = vmatpush1.msra.mxu0 %v2784
        %v2786 = vand.u32 %v372, 4294901760
        %2787 = vmatprep.subr.mxu0 %v2786
        %v2788 = vand.u32 %v371, 4294901760
        %2789 = vmatpush1.msra.mxu0 %v2788
        %v2790 = vand.u32 %v377, 4294901760
        %2791 = vmatprep.subr.mxu0 %v2790
        %v2792 = vand.u32 %v376, 4294901760
        %2793 = vmatpush1.msra.mxu0 %v2792
        %2794 = vmatprep.subr.mxu0 0.0
        %2795 = vmatpush1.msra.mxu0 0.0
        %2796 = vmatprep.subr.mxu0 0.0
        %2797 = vmatpush1.msra.mxu0 0.0
        %2798 = vmatprep.subr.mxu0 0.0
        %2799 = vmatpush1.msra.mxu0 0.0
        %2800 = vmatprep.subr.mxu0 0.0
        %2801 = vmatpush1.msra.mxu0 0.0
        %2802 = vmatprep.subr.mxu0 0.0
        %2803 = vmatpush1.msra.mxu0 0.0
        %2804 = vmatprep.subr.mxu0 0.0
        %2805 = vmatpush1.msra.mxu0 0.0
        %2806 = vmatprep.subr.mxu0 0.0
        %2807 = vmatpush1.msra.mxu0 0.0
        %2808 = vmatprep.subr.mxu0 0.0
        %2809 = vmatpush1.msra.mxu0 0.0
        %2810 = vmatprep.subr.mxu0 0.0
        %2811 = vmatpush1.msra.mxu0 0.0
        %2812 = vmatprep.subr.mxu0 0.0
        %2813 = vmatpush1.msra.mxu0 0.0
        %2814 = vmatprep.subr.mxu0 0.0
        %2815 = vmatpush1.msra.mxu0 0.0
        %2816 = vmatprep.subr.mxu0 0.0
        %2817 = vmatpush1.msra.mxu0 0.0
        %2818 = vmatprep.subr.mxu0 0.0
        %2819 = vmatpush1.msra.mxu0 0.0
        %2820 = vmatprep.subr.mxu0 0.0
        %2821 = vmatpush1.msra.mxu0 0.0
        %2822 = vmatprep.subr.mxu0 0.0
        %2823 = vmatpush1.msra.mxu0 0.0
        %2824 = vmatprep.subr.mxu0 0.0
        %2825 = vmatpush1.msra.mxu0 0.0
        %2826 = vmatprep.subr.mxu0 0.0
        %2827 = vmatpush1.msra.mxu0 0.0
        %2828 = vmatprep.subr.mxu0 0.0
        %2829 = vmatpush1.msra.mxu0 0.0
        %2830 = vmatprep.subr.mxu0 0.0
        %2831 = vmatpush1.msra.mxu0 0.0
        %2832 = vmatprep.subr.mxu0 0.0
        %2833 = vmatpush1.msra.mxu0 0.0
        %2834 = vmatprep.subr.mxu0 0.0
        %2835 = vmatpush1.msra.mxu0 0.0
        %2836 = vmatprep.subr.mxu0 0.0
        %2837 = vmatpush1.msra.mxu0 0.0
        %2838 = vmatprep.mubr.f32.mxu0 0.0
        %v2839 = vand.u32 %v383, 4294901760
        %v2840 = vsub.f32 %v383, %v2839
        %v2841 = vand.u32 %v2840, 4294901760
        %2842 = vmatmul.mubr.f32.gmra.mrb[0].mxu0 %v2841
        %v2843 = vpop.f32.mrb[0].mxu0
        %v2844 = vadd.f32 %v2750, %v2843
        %v2845 = vpop.f32.mrb[0].mxu0
        %v2846 = vadd.f32 %v2752, %v2845
        %2847 = vdwg.mxu0
        %v2848 = vand.u32 %v332, 4294901760
        %v2849 = vsub.f32 %v332, %v2848
        %v2850 = vand.u32 %v2849, 4294901760
        %2851 = vmatprep.subr.mxu0 %v2850
        %v2852 = vand.u32 %v331, 4294901760
        %v2853 = vsub.f32 %v331, %v2852
        %v2854 = vand.u32 %v2853, 4294901760
        %2855 = vmatpush1.msra.mxu0 %v2854
        %v2856 = vand.u32 %v337, 4294901760
        %v2857 = vsub.f32 %v337, %v2856
        %v2858 = vand.u32 %v2857, 4294901760
        %2859 = vmatprep.subr.mxu0 %v2858
        %v2860 = vand.u32 %v336, 4294901760
        %v2861 = vsub.f32 %v336, %v2860
        %v2862 = vand.u32 %v2861, 4294901760
        %2863 = vmatpush1.msra.mxu0 %v2862
        %v2864 = vand.u32 %v342, 4294901760
        %v2865 = vsub.f32 %v342, %v2864
        %v2866 = vand.u32 %v2865, 4294901760
        %2867 = vmatprep.subr.mxu0 %v2866
        %v2868 = vand.u32 %v341, 4294901760
        %v2869 = vsub.f32 %v341, %v2868
        %v2870 = vand.u32 %v2869, 4294901760
        %2871 = vmatpush1.msra.mxu0 %v2870
        %v2872 = vand.u32 %v347, 4294901760
        %v2873 = vsub.f32 %v347, %v2872
        %v2874 = vand.u32 %v2873, 4294901760
        %2875 = vmatprep.subr.mxu0 %v2874
        %v2876 = vand.u32 %v346, 4294901760
        %v2877 = vsub.f32 %v346, %v2876
        %v2878 = vand.u32 %v2877, 4294901760
        %2879 = vmatpush1.msra.mxu0 %v2878
        %v2880 = vand.u32 %v352, 4294901760
        %v2881 = vsub.f32 %v352, %v2880
        %v2882 = vand.u32 %v2881, 4294901760
        %2883 = vmatprep.subr.mxu0 %v2882
        %v2884 = vand.u32 %v351, 4294901760
        %v2885 = vsub.f32 %v351, %v2884
        %v2886 = vand.u32 %v2885, 4294901760
        %2887 = vmatpush1.msra.mxu0 %v2886
        %v2888 = vand.u32 %v357, 4294901760
        %v2889 = vsub.f32 %v357, %v2888
        %v2890 = vand.u32 %v2889, 4294901760
        %2891 = vmatprep.subr.mxu0 %v2890
        %v2892 = vand.u32 %v356, 4294901760
        %v2893 = vsub.f32 %v356, %v2892
        %v2894 = vand.u32 %v2893, 4294901760
        %2895 = vmatpush1.msra.mxu0 %v2894
        %v2896 = vand.u32 %v362, 4294901760
        %v2897 = vsub.f32 %v362, %v2896
        %v2898 = vand.u32 %v2897, 4294901760
        %2899 = vmatprep.subr.mxu0 %v2898
        %v2900 = vand.u32 %v361, 4294901760
        %v2901 = vsub.f32 %v361, %v2900
        %v2902 = vand.u32 %v2901, 4294901760
        %2903 = vmatpush1.msra.mxu0 %v2902
        %v2904 = vand.u32 %v367, 4294901760
        %v2905 = vsub.f32 %v367, %v2904
        %v2906 = vand.u32 %v2905, 4294901760
        %2907 = vmatprep.subr.mxu0 %v2906
        %v2908 = vand.u32 %v366, 4294901760
        %v2909 = vsub.f32 %v366, %v2908
        %v2910 = vand.u32 %v2909, 4294901760
        %2911 = vmatpush1.msra.mxu0 %v2910
        %v2912 = vand.u32 %v372, 4294901760
        %v2913 = vsub.f32 %v372, %v2912
        %v2914 = vand.u32 %v2913, 4294901760
        %2915 = vmatprep.subr.mxu0 %v2914
        %v2916 = vand.u32 %v371, 4294901760
        %v2917 = vsub.f32 %v371, %v2916
        %v2918 = vand.u32 %v2917, 4294901760
        %2919 = vmatpush1.msra.mxu0 %v2918
        %v2920 = vand.u32 %v377, 4294901760
        %v2921 = vsub.f32 %v377, %v2920
        %v2922 = vand.u32 %v2921, 4294901760
        %2923 = vmatprep.subr.mxu0 %v2922
        %v2924 = vand.u32 %v376, 4294901760
        %v2925 = vsub.f32 %v376, %v2924
        %v2926 = vand.u32 %v2925, 4294901760
        %2927 = vmatpush1.msra.mxu0 %v2926
        %2928 = vmatprep.subr.mxu0 0.0
        %2929 = vmatpush1.msra.mxu0 0.0
        %2930 = vmatprep.subr.mxu0 0.0
        %2931 = vmatpush1.msra.mxu0 0.0
        %2932 = vmatprep.subr.mxu0 0.0
        %2933 = vmatpush1.msra.mxu0 0.0
        %2934 = vmatprep.subr.mxu0 0.0
        %2935 = vmatpush1.msra.mxu0 0.0
        %2936 = vmatprep.subr.mxu0 0.0
        %2937 = vmatpush1.msra.mxu0 0.0
        %2938 = vmatprep.subr.mxu0 0.0
        %2939 = vmatpush1.msra.mxu0 0.0
        %2940 = vmatprep.subr.mxu0 0.0
        %2941 = vmatpush1.msra.mxu0 0.0
        %2942 = vmatprep.subr.mxu0 0.0
        %2943 = vmatpush1.msra.mxu0 0.0
        %2944 = vmatprep.subr.mxu0 0.0
        %2945 = vmatpush1.msra.mxu0 0.0
        %2946 = vmatprep.subr.mxu0 0.0
        %2947 = vmatpush1.msra.mxu0 0.0
        %2948 = vmatprep.subr.mxu0 0.0
        %2949 = vmatpush1.msra.mxu0 0.0
        %2950 = vmatprep.subr.mxu0 0.0
        %2951 = vmatpush1.msra.mxu0 0.0
        %2952 = vmatprep.subr.mxu0 0.0
        %2953 = vmatpush1.msra.mxu0 0.0
        %2954 = vmatprep.subr.mxu0 0.0
        %2955 = vmatpush1.msra.mxu0 0.0
        %2956 = vmatprep.subr.mxu0 0.0
        %2957 = vmatpush1.msra.mxu0 0.0
        %2958 = vmatprep.subr.mxu0 0.0
        %2959 = vmatpush1.msra.mxu0 0.0
        %2960 = vmatprep.subr.mxu0 0.0
        %2961 = vmatpush1.msra.mxu0 0.0
        %2962 = vmatprep.subr.mxu0 0.0
        %2963 = vmatpush1.msra.mxu0 0.0
        %2964 = vmatprep.subr.mxu0 0.0
        %2965 = vmatpush1.msra.mxu0 0.0
        %2966 = vmatprep.subr.mxu0 0.0
        %2967 = vmatpush1.msra.mxu0 0.0
        %2968 = vmatprep.subr.mxu0 0.0
        %2969 = vmatpush1.msra.mxu0 0.0
        %2970 = vmatprep.subr.mxu0 0.0
        %2971 = vmatpush1.msra.mxu0 0.0
        %2972 = vmatprep.mubr.f32.mxu0 0.0
        %v2973 = vand.u32 %v383, 4294901760
        %2974 = vmatmul.mubr.f32.gmra.mrb[0].mxu0 %v2973
        %v2975 = vpop.f32.mrb[0].mxu0
        %v2976 = vadd.f32 %v2844, %v2975
        %v2977 = vpop.f32.mrb[0].mxu0
        %v2978 = vadd.f32 %v2846, %v2977
        %2979 = vdwg.mxu0
        %v2980 = vand.u32 %v332, 4294901760
        %2981 = vmatprep.subr.mxu0 %v2980
        %v2982 = vand.u32 %v331, 4294901760
        %2983 = vmatpush1.msra.mxu0 %v2982
        %v2984 = vand.u32 %v337, 4294901760
        %2985 = vmatprep.subr.mxu0 %v2984
        %v2986 = vand.u32 %v336, 4294901760
        %2987 = vmatpush1.msra.mxu0 %v2986
        %v2988 = vand.u32 %v342, 4294901760
        %2989 = vmatprep.subr.mxu0 %v2988
        %v2990 = vand.u32 %v341, 4294901760
        %2991 = vmatpush1.msra.mxu0 %v2990
        %v2992 = vand.u32 %v347, 4294901760
        %2993 = vmatprep.subr.mxu0 %v2992
        %v2994 = vand.u32 %v346, 4294901760
        %2995 = vmatpush1.msra.mxu0 %v2994
        %v2996 = vand.u32 %v352, 4294901760
        %2997 = vmatprep.subr.mxu0 %v2996
        %v2998 = vand.u32 %v351, 4294901760
        %2999 = vmatpush1.msra.mxu0 %v2998
        %v3000 = vand.u32 %v357, 4294901760
        %3001 = vmatprep.subr.mxu0 %v3000
        %v3002 = vand.u32 %v356, 4294901760
        %3003 = vmatpush1.msra.mxu0 %v3002
        %v3004 = vand.u32 %v362, 4294901760
        %3005 = vmatprep.subr.mxu0 %v3004
        %v3006 = vand.u32 %v361, 4294901760
        %3007 = vmatpush1.msra.mxu0 %v3006
        %v3008 = vand.u32 %v367, 4294901760
        %3009 = vmatprep.subr.mxu0 %v3008
        %v3010 = vand.u32 %v366, 4294901760
        %3011 = vmatpush1.msra.mxu0 %v3010
        %v3012 = vand.u32 %v372, 4294901760
        %3013 = vmatprep.subr.mxu0 %v3012
        %v3014 = vand.u32 %v371, 4294901760
        %3015 = vmatpush1.msra.mxu0 %v3014
        %v3016 = vand.u32 %v377, 4294901760
        %3017 = vmatprep.subr.mxu0 %v3016
        %v3018 = vand.u32 %v376, 4294901760
        %3019 = vmatpush1.msra.mxu0 %v3018
        %3020 = vmatprep.subr.mxu0 0.0
        %3021 = vmatpush1.msra.mxu0 0.0
        %3022 = vmatprep.subr.mxu0 0.0
        %3023 = vmatpush1.msra.mxu0 0.0
        %3024 = vmatprep.subr.mxu0 0.0
        %3025 = vmatpush1.msra.mxu0 0.0
        %3026 = vmatprep.subr.mxu0 0.0
        %3027 = vmatpush1.msra.mxu0 0.0
        %3028 = vmatprep.subr.mxu0 0.0
        %3029 = vmatpush1.msra.mxu0 0.0
        %3030 = vmatprep.subr.mxu0 0.0
        %3031 = vmatpush1.msra.mxu0 0.0
        %3032 = vmatprep.subr.mxu0 0.0
        %3033 = vmatpush1.msra.mxu0 0.0
        %3034 = vmatprep.subr.mxu0 0.0
        %3035 = vmatpush1.msra.mxu0 0.0
        %3036 = vmatprep.subr.mxu0 0.0
        %3037 = vmatpush1.msra.mxu0 0.0
        %3038 = vmatprep.subr.mxu0 0.0
        %3039 = vmatpush1.msra.mxu0 0.0
        %3040 = vmatprep.subr.mxu0 0.0
        %3041 = vmatpush1.msra.mxu0 0.0
        %3042 = vmatprep.subr.mxu0 0.0
        %3043 = vmatpush1.msra.mxu0 0.0
        %3044 = vmatprep.subr.mxu0 0.0
        %3045 = vmatpush1.msra.mxu0 0.0
        %3046 = vmatprep.subr.mxu0 0.0
        %3047 = vmatpush1.msra.mxu0 0.0
        %3048 = vmatprep.subr.mxu0 0.0
        %3049 = vmatpush1.msra.mxu0 0.0
        %3050 = vmatprep.subr.mxu0 0.0
        %3051 = vmatpush1.msra.mxu0 0.0
        %3052 = vmatprep.subr.mxu0 0.0
        %3053 = vmatpush1.msra.mxu0 0.0
        %3054 = vmatprep.subr.mxu0 0.0
        %3055 = vmatpush1.msra.mxu0 0.0
        %3056 = vmatprep.subr.mxu0 0.0
        %3057 = vmatpush1.msra.mxu0 0.0
        %3058 = vmatprep.subr.mxu0 0.0
        %3059 = vmatpush1.msra.mxu0 0.0
        %3060 = vmatprep.subr.mxu0 0.0
        %3061 = vmatpush1.msra.mxu0 0.0
        %3062 = vmatprep.subr.mxu0 0.0
        %3063 = vmatpush1.msra.mxu0 0.0
        %3064 = vmatprep.mubr.f32.mxu0 0.0
        %v3065 = vand.u32 %v383, 4294901760
        %3066 = vmatmul.mubr.f32.gmra.mrb[0].mxu0 %v3065
        %v3067 = vpop.f32.mrb[0].mxu0
        %v3068 = vadd.f32 %v2976, %v3067
        %v3069 = vpop.f32.mrb[0].mxu0
        %v3070 = vadd.f32 %v2978, %v3069
        %3071 = vdwg.mxu0
        %v3072 = vand.u32 %v334, 4294901760
        %3073 = vmatprep.subr.mxu0 %v3072
        %v3074 = vand.u32 %v333, 4294901760
        %3075 = vmatpush1.msra.mxu0 %v3074
        %v3076 = vand.u32 %v339, 4294901760
        %3077 = vmatprep.subr.mxu0 %v3076
        %v3078 = vand.u32 %v338, 4294901760
        %3079 = vmatpush1.msra.mxu0 %v3078
        %v3080 = vand.u32 %v344, 4294901760
        %3081 = vmatprep.subr.mxu0 %v3080
        %v3082 = vand.u32 %v343, 4294901760
        %3083 = vmatpush1.msra.mxu0 %v3082
        %v3084 = vand.u32 %v349, 4294901760
        %3085 = vmatprep.subr.mxu0 %v3084
        %v3086 = vand.u32 %v348, 4294901760
        %3087 = vmatpush1.msra.mxu0 %v3086
        %v3088 = vand.u32 %v354, 4294901760
        %3089 = vmatprep.subr.mxu0 %v3088
        %v3090 = vand.u32 %v353, 4294901760
        %3091 = vmatpush1.msra.mxu0 %v3090
        %v3092 = vand.u32 %v359, 4294901760
        %3093 = vmatprep.subr.mxu0 %v3092
        %v3094 = vand.u32 %v358, 4294901760
        %3095 = vmatpush1.msra.mxu0 %v3094
        %v3096 = vand.u32 %v364, 4294901760
        %3097 = vmatprep.subr.mxu0 %v3096
        %v3098 = vand.u32 %v363, 4294901760
        %3099 = vmatpush1.msra.mxu0 %v3098
        %v3100 = vand.u32 %v369, 4294901760
        %3101 = vmatprep.subr.mxu0 %v3100
        %v3102 = vand.u32 %v368, 4294901760
        %3103 = vmatpush1.msra.mxu0 %v3102
        %v3104 = vand.u32 %v374, 4294901760
        %3105 = vmatprep.subr.mxu0 %v3104
        %v3106 = vand.u32 %v373, 4294901760
        %3107 = vmatpush1.msra.mxu0 %v3106
        %v3108 = vand.u32 %v379, 4294901760
        %3109 = vmatprep.subr.mxu0 %v3108
        %v3110 = vand.u32 %v378, 4294901760
        %3111 = vmatpush1.msra.mxu0 %v3110
        %3112 = vmatprep.subr.mxu0 0.0
        %3113 = vmatpush1.msra.mxu0 0.0
        %3114 = vmatprep.subr.mxu0 0.0
        %3115 = vmatpush1.msra.mxu0 0.0
        %3116 = vmatprep.subr.mxu0 0.0
        %3117 = vmatpush1.msra.mxu0 0.0
        %3118 = vmatprep.subr.mxu0 0.0
        %3119 = vmatpush1.msra.mxu0 0.0
        %3120 = vmatprep.subr.mxu0 0.0
        %3121 = vmatpush1.msra.mxu0 0.0
        %3122 = vmatprep.subr.mxu0 0.0
        %3123 = vmatpush1.msra.mxu0 0.0
        %3124 = vmatprep.subr.mxu0 0.0
        %3125 = vmatpush1.msra.mxu0 0.0
        %3126 = vmatprep.subr.mxu0 0.0
        %3127 = vmatpush1.msra.mxu0 0.0
        %3128 = vmatprep.subr.mxu0 0.0
        %3129 = vmatpush1.msra.mxu0 0.0
        %3130 = vmatprep.subr.mxu0 0.0
        %3131 = vmatpush1.msra.mxu0 0.0
        %3132 = vmatprep.subr.mxu0 0.0
        %3133 = vmatpush1.msra.mxu0 0.0
        %3134 = vmatprep.subr.mxu0 0.0
        %3135 = vmatpush1.msra.mxu0 0.0
        %3136 = vmatprep.subr.mxu0 0.0
        %3137 = vmatpush1.msra.mxu0 0.0
        %3138 = vmatprep.subr.mxu0 0.0
        %3139 = vmatpush1.msra.mxu0 0.0
        %3140 = vmatprep.subr.mxu0 0.0
        %3141 = vmatpush1.msra.mxu0 0.0
        %3142 = vmatprep.subr.mxu0 0.0
        %3143 = vmatpush1.msra.mxu0 0.0
        %3144 = vmatprep.subr.mxu0 0.0
        %3145 = vmatpush1.msra.mxu0 0.0
        %3146 = vmatprep.subr.mxu0 0.0
        %3147 = vmatpush1.msra.mxu0 0.0
        %3148 = vmatprep.subr.mxu0 0.0
        %3149 = vmatpush1.msra.mxu0 0.0
        %3150 = vmatprep.subr.mxu0 0.0
        %3151 = vmatpush1.msra.mxu0 0.0
        %3152 = vmatprep.subr.mxu0 0.0
        %3153 = vmatpush1.msra.mxu0 0.0
        %3154 = vmatprep.subr.mxu0 0.0
        %3155 = vmatpush1.msra.mxu0 0.0
        %3156 = vmatprep.mubr.f32.mxu0 0.0
        %v3157 = vand.u32 %v383, 4294901760
        %v3158 = vsub.f32 %v383, %v3157
        %v3159 = vand.u32 %v3158, 4294901760
        %v3160 = vsub.f32 %v3158, %v3159
        %v3161 = vand.u32 %v3160, 4294901760
        %3162 = vmatmul.mubr.f32.gmra.mrb[0].mxu0 %v3161
        %v3163 = vpop.f32.mrb[0].mxu0
        %v3164 = vadd.f32 %v2359, %v3163
        %v3165 = vpop.f32.mrb[0].mxu0
        %v3166 = vadd.f32 %v2363, %v3165
        %3167 = vdwg.mxu0
        %v3168 = vand.u32 %v334, 4294901760
        %v3169 = vsub.f32 %v334, %v3168
        %v3170 = vand.u32 %v3169, 4294901760
        %v3171 = vsub.f32 %v3169, %v3170
        %v3172 = vand.u32 %v3171, 4294901760
        %3173 = vmatprep.subr.mxu0 %v3172
        %v3174 = vand.u32 %v333, 4294901760
        %v3175 = vsub.f32 %v333, %v3174
        %v3176 = vand.u32 %v3175, 4294901760
        %v3177 = vsub.f32 %v3175, %v3176
        %v3178 = vand.u32 %v3177, 4294901760
        %3179 = vmatpush1.msra.mxu0 %v3178
        %v3180 = vand.u32 %v339, 4294901760
        %v3181 = vsub.f32 %v339, %v3180
        %v3182 = vand.u32 %v3181, 4294901760
        %v3183 = vsub.f32 %v3181, %v3182
        %v3184 = vand.u32 %v3183, 4294901760
        %3185 = vmatprep.subr.mxu0 %v3184
        %v3186 = vand.u32 %v338, 4294901760
        %v3187 = vsub.f32 %v338, %v3186
        %v3188 = vand.u32 %v3187, 4294901760
        %v3189 = vsub.f32 %v3187, %v3188
        %v3190 = vand.u32 %v3189, 4294901760
        %3191 = vmatpush1.msra.mxu0 %v3190
        %v3192 = vand.u32 %v344, 4294901760
        %v3193 = vsub.f32 %v344, %v3192
        %v3194 = vand.u32 %v3193, 4294901760
        %v3195 = vsub.f32 %v3193, %v3194
        %v3196 = vand.u32 %v3195, 4294901760
        %3197 = vmatprep.subr.mxu0 %v3196
        %v3198 = vand.u32 %v343, 4294901760
        %v3199 = vsub.f32 %v343, %v3198
        %v3200 = vand.u32 %v3199, 4294901760
        %v3201 = vsub.f32 %v3199, %v3200
        %v3202 = vand.u32 %v3201, 4294901760
        %3203 = vmatpush1.msra.mxu0 %v3202
        %v3204 = vand.u32 %v349, 4294901760
        %v3205 = vsub.f32 %v349, %v3204
        %v3206 = vand.u32 %v3205, 4294901760
        %v3207 = vsub.f32 %v3205, %v3206
        %v3208 = vand.u32 %v3207, 4294901760
        %3209 = vmatprep.subr.mxu0 %v3208
        %v3210 = vand.u32 %v348, 4294901760
        %v3211 = vsub.f32 %v348, %v3210
        %v3212 = vand.u32 %v3211, 4294901760
        %v3213 = vsub.f32 %v3211, %v3212
        %v3214 = vand.u32 %v3213, 4294901760
        %3215 = vmatpush1.msra.mxu0 %v3214
        %v3216 = vand.u32 %v354, 4294901760
        %v3217 = vsub.f32 %v354, %v3216
        %v3218 = vand.u32 %v3217, 4294901760
        %v3219 = vsub.f32 %v3217, %v3218
        %v3220 = vand.u32 %v3219, 4294901760
        %3221 = vmatprep.subr.mxu0 %v3220
        %v3222 = vand.u32 %v353, 4294901760
        %v3223 = vsub.f32 %v353, %v3222
        %v3224 = vand.u32 %v3223, 4294901760
        %v3225 = vsub.f32 %v3223, %v3224
        %v3226 = vand.u32 %v3225, 4294901760
        %3227 = vmatpush1.msra.mxu0 %v3226
        %v3228 = vand.u32 %v359, 4294901760
        %v3229 = vsub.f32 %v359, %v3228
        %v3230 = vand.u32 %v3229, 4294901760
        %v3231 = vsub.f32 %v3229, %v3230
        %v3232 = vand.u32 %v3231, 4294901760
        %3233 = vmatprep.subr.mxu0 %v3232
        %v3234 = vand.u32 %v358, 4294901760
        %v3235 = vsub.f32 %v358, %v3234
        %v3236 = vand.u32 %v3235, 4294901760
        %v3237 = vsub.f32 %v3235, %v3236
        %v3238 = vand.u32 %v3237, 4294901760
        %3239 = vmatpush1.msra.mxu0 %v3238
        %v3240 = vand.u32 %v364, 4294901760
        %v3241 = vsub.f32 %v364, %v3240
        %v3242 = vand.u32 %v3241, 4294901760
        %v3243 = vsub.f32 %v3241, %v3242
        %v3244 = vand.u32 %v3243, 4294901760
        %3245 = vmatprep.subr.mxu0 %v3244
        %v3246 = vand.u32 %v363, 4294901760
        %v3247 = vsub.f32 %v363, %v3246
        %v3248 = vand.u32 %v3247, 4294901760
        %v3249 = vsub.f32 %v3247, %v3248
        %v3250 = vand.u32 %v3249, 4294901760
        %3251 = vmatpush1.msra.mxu0 %v3250
        %v3252 = vand.u32 %v369, 4294901760
        %v3253 = vsub.f32 %v369, %v3252
        %v3254 = vand.u32 %v3253, 4294901760
        %v3255 = vsub.f32 %v3253, %v3254
        %v3256 = vand.u32 %v3255, 4294901760
        %3257 = vmatprep.subr.mxu0 %v3256
        %v3258 = vand.u32 %v368, 4294901760
        %v3259 = vsub.f32 %v368, %v3258
        %v3260 = vand.u32 %v3259, 4294901760
        %v3261 = vsub.f32 %v3259, %v3260
        %v3262 = vand.u32 %v3261, 4294901760
        %3263 = vmatpush1.msra.mxu0 %v3262
        %v3264 = vand.u32 %v374, 4294901760
        %v3265 = vsub.f32 %v374, %v3264
        %v3266 = vand.u32 %v3265, 4294901760
        %v3267 = vsub.f32 %v3265, %v3266
        %v3268 = vand.u32 %v3267, 4294901760
        %3269 = vmatprep.subr.mxu0 %v3268
        %v3270 = vand.u32 %v373, 4294901760
        %v3271 = vsub.f32 %v373, %v3270
        %v3272 = vand.u32 %v3271, 4294901760
        %v3273 = vsub.f32 %v3271, %v3272
        %v3274 = vand.u32 %v3273, 4294901760
        %3275 = vmatpush1.msra.mxu0 %v3274
        %v3276 = vand.u32 %v379, 4294901760
        %v3277 = vsub.f32 %v379, %v3276
        %v3278 = vand.u32 %v3277, 4294901760
        %v3279 = vsub.f32 %v3277, %v3278
        %v3280 = vand.u32 %v3279, 4294901760
        %3281 = vmatprep.subr.mxu0 %v3280
        %v3282 = vand.u32 %v378, 4294901760
        %v3283 = vsub.f32 %v378, %v3282
        %v3284 = vand.u32 %v3283, 4294901760
        %v3285 = vsub.f32 %v3283, %v3284
        %v3286 = vand.u32 %v3285, 4294901760
        %3287 = vmatpush1.msra.mxu0 %v3286
        %3288 = vmatprep.subr.mxu0 0.0
        %3289 = vmatpush1.msra.mxu0 0.0
        %3290 = vmatprep.subr.mxu0 0.0
        %3291 = vmatpush1.msra.mxu0 0.0
        %3292 = vmatprep.subr.mxu0 0.0
        %3293 = vmatpush1.msra.mxu0 0.0
        %3294 = vmatprep.subr.mxu0 0.0
        %3295 = vmatpush1.msra.mxu0 0.0
        %3296 = vmatprep.subr.mxu0 0.0
        %3297 = vmatpush1.msra.mxu0 0.0
        %3298 = vmatprep.subr.mxu0 0.0
        %3299 = vmatpush1.msra.mxu0 0.0
        %3300 = vmatprep.subr.mxu0 0.0
        %3301 = vmatpush1.msra.mxu0 0.0
        %3302 = vmatprep.subr.mxu0 0.0
        %3303 = vmatpush1.msra.mxu0 0.0
        %3304 = vmatprep.subr.mxu0 0.0
        %3305 = vmatpush1.msra.mxu0 0.0
        %3306 = vmatprep.subr.mxu0 0.0
        %3307 = vmatpush1.msra.mxu0 0.0
        %3308 = vmatprep.subr.mxu0 0.0
        %3309 = vmatpush1.msra.mxu0 0.0
        %3310 = vmatprep.subr.mxu0 0.0
        %3311 = vmatpush1.msra.mxu0 0.0
        %3312 = vmatprep.subr.mxu0 0.0
        %3313 = vmatpush1.msra.mxu0 0.0
        %3314 = vmatprep.subr.mxu0 0.0
        %3315 = vmatpush1.msra.mxu0 0.0
        %3316 = vmatprep.subr.mxu0 0.0
        %3317 = vmatpush1.msra.mxu0 0.0
        %3318 = vmatprep.subr.mxu0 0.0
        %3319 = vmatpush1.msra.mxu0 0.0
        %3320 = vmatprep.subr.mxu0 0.0
        %3321 = vmatpush1.msra.mxu0 0.0
        %3322 = vmatprep.subr.mxu0 0.0
        %3323 = vmatpush1.msra.mxu0 0.0
        %3324 = vmatprep.subr.mxu0 0.0
        %3325 = vmatpush1.msra.mxu0 0.0
        %3326 = vmatprep.subr.mxu0 0.0
        %3327 = vmatpush1.msra.mxu0 0.0
        %3328 = vmatprep.subr.mxu0 0.0
        %3329 = vmatpush1.msra.mxu0 0.0
        %3330 = vmatprep.subr.mxu0 0.0
        %3331 = vmatpush1.msra.mxu0 0.0
        %3332 = vmatprep.mubr.f32.mxu0 0.0
        %v3333 = vand.u32 %v383, 4294901760
        %3334 = vmatmul.mubr.f32.gmra.mrb[0].mxu0 %v3333
        %v3335 = vpop.f32.mrb[0].mxu0
        %v3336 = vadd.f32 %v3164, %v3335
        %v3337 = vpop.f32.mrb[0].mxu0
        %v3338 = vadd.f32 %v3166, %v3337
        %3339 = vdwg.mxu0
        %v3340 = vand.u32 %v334, 4294901760
        %v3341 = vsub.f32 %v334, %v3340
        %3342 = vmatprep.subr.mxu0 %v3341
        %v3343 = vand.u32 %v333, 4294901760
        %v3344 = vsub.f32 %v333, %v3343
        %3345 = vmatpush1.msra.mxu0 %v3344
        %v3346 = vand.u32 %v339, 4294901760
        %v3347 = vsub.f32 %v339, %v3346
        %3348 = vmatprep.subr.mxu0 %v3347
        %v3349 = vand.u32 %v338, 4294901760
        %v3350 = vsub.f32 %v338, %v3349
        %3351 = vmatpush1.msra.mxu0 %v3350
        %v3352 = vand.u32 %v344, 4294901760
        %v3353 = vsub.f32 %v344, %v3352
        %3354 = vmatprep.subr.mxu0 %v3353
        %v3355 = vand.u32 %v343, 4294901760
        %v3356 = vsub.f32 %v343, %v3355
        %3357 = vmatpush1.msra.mxu0 %v3356
        %v3358 = vand.u32 %v349, 4294901760
        %v3359 = vsub.f32 %v349, %v3358
        %3360 = vmatprep.subr.mxu0 %v3359
        %v3361 = vand.u32 %v348, 4294901760
        %v3362 = vsub.f32 %v348, %v3361
        %3363 = vmatpush1.msra.mxu0 %v3362
        %v3364 = vand.u32 %v354, 4294901760
        %v3365 = vsub.f32 %v354, %v3364
        %3366 = vmatprep.subr.mxu0 %v3365
        %v3367 = vand.u32 %v353, 4294901760
        %v3368 = vsub.f32 %v353, %v3367
        %3369 = vmatpush1.msra.mxu0 %v3368
        %v3370 = vand.u32 %v359, 4294901760
        %v3371 = vsub.f32 %v359, %v3370
        %3372 = vmatprep.subr.mxu0 %v3371
        %v3373 = vand.u32 %v358, 4294901760
        %v3374 = vsub.f32 %v358, %v3373
        %3375 = vmatpush1.msra.mxu0 %v3374
        %v3376 = vand.u32 %v364, 4294901760
        %v3377 = vsub.f32 %v364, %v3376
        %3378 = vmatprep.subr.mxu0 %v3377
        %v3379 = vand.u32 %v363, 4294901760
        %v3380 = vsub.f32 %v363, %v3379
        %3381 = vmatpush1.msra.mxu0 %v3380
        %v3382 = vand.u32 %v369, 4294901760
        %v3383 = vsub.f32 %v369, %v3382
        %3384 = vmatprep.subr.mxu0 %v3383
        %v3385 = vand.u32 %v368, 4294901760
        %v3386 = vsub.f32 %v368, %v3385
        %3387 = vmatpush1.msra.mxu0 %v3386
        %v3388 = vand.u32 %v374, 4294901760
        %v3389 = vsub.f32 %v374, %v3388
        %3390 = vmatprep.subr.mxu0 %v3389
        %v3391 = vand.u32 %v373, 4294901760
        %v3392 = vsub.f32 %v373, %v3391
        %3393 = vmatpush1.msra.mxu0 %v3392
        %v3394 = vand.u32 %v379, 4294901760
        %v3395 = vsub.f32 %v379, %v3394
        %3396 = vmatprep.subr.mxu0 %v3395
        %v3397 = vand.u32 %v378, 4294901760
        %v3398 = vsub.f32 %v378, %v3397
        %3399 = vmatpush1.msra.mxu0 %v3398
        %3400 = vmatprep.subr.mxu0 0.0
        %3401 = vmatpush1.msra.mxu0 0.0
        %3402 = vmatprep.subr.mxu0 0.0
        %3403 = vmatpush1.msra.mxu0 0.0
        %3404 = vmatprep.subr.mxu0 0.0
        %3405 = vmatpush1.msra.mxu0 0.0
        %3406 = vmatprep.subr.mxu0 0.0
        %3407 = vmatpush1.msra.mxu0 0.0
        %3408 = vmatprep.subr.mxu0 0.0
        %3409 = vmatpush1.msra.mxu0 0.0
        %3410 = vmatprep.subr.mxu0 0.0
        %3411 = vmatpush1.msra.mxu0 0.0
        %3412 = vmatprep.subr.mxu0 0.0
        %3413 = vmatpush1.msra.mxu0 0.0
        %3414 = vmatprep.subr.mxu0 0.0
        %3415 = vmatpush1.msra.mxu0 0.0
        %3416 = vmatprep.subr.mxu0 0.0
        %3417 = vmatpush1.msra.mxu0 0.0
        %3418 = vmatprep.subr.mxu0 0.0
        %3419 = vmatpush1.msra.mxu0 0.0
        %3420 = vmatprep.subr.mxu0 0.0
        %3421 = vmatpush1.msra.mxu0 0.0
        %3422 = vmatprep.subr.mxu0 0.0
        %3423 = vmatpush1.msra.mxu0 0.0
        %3424 = vmatprep.subr.mxu0 0.0
        %3425 = vmatpush1.msra.mxu0 0.0
        %3426 = vmatprep.subr.mxu0 0.0
        %3427 = vmatpush1.msra.mxu0 0.0
        %3428 = vmatprep.subr.mxu0 0.0
        %3429 = vmatpush1.msra.mxu0 0.0
        %3430 = vmatprep.subr.mxu0 0.0
        %3431 = vmatpush1.msra.mxu0 0.0
        %3432 = vmatprep.subr.mxu0 0.0
        %3433 = vmatpush1.msra.mxu0 0.0
        %3434 = vmatprep.subr.mxu0 0.0
        %3435 = vmatpush1.msra.mxu0 0.0
        %3436 = vmatprep.subr.mxu0 0.0
        %3437 = vmatpush1.msra.mxu0 0.0
        %3438 = vmatprep.subr.mxu0 0.0
        %3439 = vmatpush1.msra.mxu0 0.0
        %3440 = vmatprep.subr.mxu0 0.0
        %3441 = vmatpush1.msra.mxu0 0.0
        %3442 = vmatprep.subr.mxu0 0.0
        %3443 = vmatpush1.msra.mxu0 0.0
        %3444 = vmatprep.mubr.f32.mxu0 0.0
        %v3445 = vand.u32 %v383, 4294901760
        %v3446 = vsub.f32 %v383, %v3445
        %3447 = vmatmul.mubr.f32.gmra.mrb[0].mxu0 %v3446
        %v3448 = vpop.f32.mrb[0].mxu0
        %v3449 = vadd.f32 %v3336, %v3448
        %v3450 = vpop.f32.mrb[0].mxu0
        %v3451 = vadd.f32 %v3338, %v3450
        %3452 = vdwg.mxu0
        %v3453 = vand.u32 %v334, 4294901760
        %3454 = vmatprep.subr.mxu0 %v3453
        %v3455 = vand.u32 %v333, 4294901760
        %3456 = vmatpush1.msra.mxu0 %v3455
        %v3457 = vand.u32 %v339, 4294901760
        %3458 = vmatprep.subr.mxu0 %v3457
        %v3459 = vand.u32 %v338, 4294901760
        %3460 = vmatpush1.msra.mxu0 %v3459
        %v3461 = vand.u32 %v344, 4294901760
        %3462 = vmatprep.subr.mxu0 %v3461
        %v3463 = vand.u32 %v343, 4294901760
        %3464 = vmatpush1.msra.mxu0 %v3463
        %v3465 = vand.u32 %v349, 4294901760
        %3466 = vmatprep.subr.mxu0 %v3465
        %v3467 = vand.u32 %v348, 4294901760
        %3468 = vmatpush1.msra.mxu0 %v3467
        %v3469 = vand.u32 %v354, 4294901760
        %3470 = vmatprep.subr.mxu0 %v3469
        %v3471 = vand.u32 %v353, 4294901760
        %3472 = vmatpush1.msra.mxu0 %v3471
        %v3473 = vand.u32 %v359, 4294901760
        %3474 = vmatprep.subr.mxu0 %v3473
        %v3475 = vand.u32 %v358, 4294901760
        %3476 = vmatpush1.msra.mxu0 %v3475
        %v3477 = vand.u32 %v364, 4294901760
        %3478 = vmatprep.subr.mxu0 %v3477
        %v3479 = vand.u32 %v363, 4294901760
        %3480 = vmatpush1.msra.mxu0 %v3479
        %v3481 = vand.u32 %v369, 4294901760
        %3482 = vmatprep.subr.mxu0 %v3481
        %v3483 = vand.u32 %v368, 4294901760
        %3484 = vmatpush1.msra.mxu0 %v3483
        %v3485 = vand.u32 %v374, 4294901760
        %3486 = vmatprep.subr.mxu0 %v3485
        %v3487 = vand.u32 %v373, 4294901760
        %3488 = vmatpush1.msra.mxu0 %v3487
        %v3489 = vand.u32 %v379, 4294901760
        %3490 = vmatprep.subr.mxu0 %v3489
        %v3491 = vand.u32 %v378, 4294901760
        %3492 = vmatpush1.msra.mxu0 %v3491
        %3493 = vmatprep.subr.mxu0 0.0
        %3494 = vmatpush1.msra.mxu0 0.0
        %3495 = vmatprep.subr.mxu0 0.0
        %3496 = vmatpush1.msra.mxu0 0.0
        %3497 = vmatprep.subr.mxu0 0.0
        %3498 = vmatpush1.msra.mxu0 0.0
        %3499 = vmatprep.subr.mxu0 0.0
        %3500 = vmatpush1.msra.mxu0 0.0
        %3501 = vmatprep.subr.mxu0 0.0
        %3502 = vmatpush1.msra.mxu0 0.0
        %3503 = vmatprep.subr.mxu0 0.0
        %3504 = vmatpush1.msra.mxu0 0.0
        %3505 = vmatprep.subr.mxu0 0.0
        %3506 = vmatpush1.msra.mxu0 0.0
        %3507 = vmatprep.subr.mxu0 0.0
        %3508 = vmatpush1.msra.mxu0 0.0
        %3509 = vmatprep.subr.mxu0 0.0
        %3510 = vmatpush1.msra.mxu0 0.0
        %3511 = vmatprep.subr.mxu0 0.0
        %3512 = vmatpush1.msra.mxu0 0.0
        %3513 = vmatprep.subr.mxu0 0.0
        %3514 = vmatpush1.msra.mxu0 0.0
        %3515 = vmatprep.subr.mxu0 0.0
        %3516 = vmatpush1.msra.mxu0 0.0
        %3517 = vmatprep.subr.mxu0 0.0
        %3518 = vmatpush1.msra.mxu0 0.0
        %3519 = vmatprep.subr.mxu0 0.0
        %3520 = vmatpush1.msra.mxu0 0.0
        %3521 = vmatprep.subr.mxu0 0.0
        %3522 = vmatpush1.msra.mxu0 0.0
        %3523 = vmatprep.subr.mxu0 0.0
        %3524 = vmatpush1.msra.mxu0 0.0
        %3525 = vmatprep.subr.mxu0 0.0
        %3526 = vmatpush1.msra.mxu0 0.0
        %3527 = vmatprep.subr.mxu0 0.0
        %3528 = vmatpush1.msra.mxu0 0.0
        %3529 = vmatprep.subr.mxu0 0.0
        %3530 = vmatpush1.msra.mxu0 0.0
        %3531 = vmatprep.subr.mxu0 0.0
        %3532 = vmatpush1.msra.mxu0 0.0
        %3533 = vmatprep.subr.mxu0 0.0
        %3534 = vmatpush1.msra.mxu0 0.0
        %3535 = vmatprep.subr.mxu0 0.0
        %3536 = vmatpush1.msra.mxu0 0.0
        %3537 = vmatprep.mubr.f32.mxu0 0.0
        %v3538 = vand.u32 %v383, 4294901760
        %v3539 = vsub.f32 %v383, %v3538
        %v3540 = vand.u32 %v3539, 4294901760
        %3541 = vmatmul.mubr.f32.gmra.mrb[0].mxu0 %v3540
        %v3542 = vpop.f32.mrb[0].mxu0
        %v3543 = vadd.f32 %v3449, %v3542
        %v3544 = vpop.f32.mrb[0].mxu0
        %v3545 = vadd.f32 %v3451, %v3544
        %3546 = vdwg.mxu0
        %v3547 = vand.u32 %v334, 4294901760
        %v3548 = vsub.f32 %v334, %v3547
        %v3549 = vand.u32 %v3548, 4294901760
        %3550 = vmatprep.subr.mxu0 %v3549
        %v3551 = vand.u32 %v333, 4294901760
        %v3552 = vsub.f32 %v333, %v3551
        %v3553 = vand.u32 %v3552, 4294901760
        %3554 = vmatpush1.msra.mxu0 %v3553
        %v3555 = vand.u32 %v339, 4294901760
        %v3556 = vsub.f32 %v339, %v3555
        %v3557 = vand.u32 %v3556, 4294901760
        %3558 = vmatprep.subr.mxu0 %v3557
        %v3559 = vand.u32 %v338, 4294901760
        %v3560 = vsub.f32 %v338, %v3559
        %v3561 = vand.u32 %v3560, 4294901760
        %3562 = vmatpush1.msra.mxu0 %v3561
        %v3563 = vand.u32 %v344, 4294901760
        %v3564 = vsub.f32 %v344, %v3563
        %v3565 = vand.u32 %v3564, 4294901760
        %3566 = vmatprep.subr.mxu0 %v3565
        %v3567 = vand.u32 %v343, 4294901760
        %v3568 = vsub.f32 %v343, %v3567
        %v3569 = vand.u32 %v3568, 4294901760
        %3570 = vmatpush1.msra.mxu0 %v3569
        %v3571 = vand.u32 %v349, 4294901760
        %v3572 = vsub.f32 %v349, %v3571
        %v3573 = vand.u32 %v3572, 4294901760
        %3574 = vmatprep.subr.mxu0 %v3573
        %v3575 = vand.u32 %v348, 4294901760
        %v3576 = vsub.f32 %v348, %v3575
        %v3577 = vand.u32 %v3576, 4294901760
        %3578 = vmatpush1.msra.mxu0 %v3577
        %v3579 = vand.u32 %v354, 4294901760
        %v3580 = vsub.f32 %v354, %v3579
        %v3581 = vand.u32 %v3580, 4294901760
        %3582 = vmatprep.subr.mxu0 %v3581
        %v3583 = vand.u32 %v353, 4294901760
        %v3584 = vsub.f32 %v353, %v3583
        %v3585 = vand.u32 %v3584, 4294901760
        %3586 = vmatpush1.msra.mxu0 %v3585
        %v3587 = vand.u32 %v359, 4294901760
        %v3588 = vsub.f32 %v359, %v3587
        %v3589 = vand.u32 %v3588, 4294901760
        %3590 = vmatprep.subr.mxu0 %v3589
        %v3591 = vand.u32 %v358, 4294901760
        %v3592 = vsub.f32 %v358, %v3591
        %v3593 = vand.u32 %v3592, 4294901760
        %3594 = vmatpush1.msra.mxu0 %v3593
        %v3595 = vand.u32 %v364, 4294901760
        %v3596 = vsub.f32 %v364, %v3595
        %v3597 = vand.u32 %v3596, 4294901760
        %3598 = vmatprep.subr.mxu0 %v3597
        %v3599 = vand.u32 %v363, 4294901760
        %v3600 = vsub.f32 %v363, %v3599
        %v3601 = vand.u32 %v3600, 4294901760
        %3602 = vmatpush1.msra.mxu0 %v3601
        %v3603 = vand.u32 %v369, 4294901760
        %v3604 = vsub.f32 %v369, %v3603
        %v3605 = vand.u32 %v3604, 4294901760
        %3606 = vmatprep.subr.mxu0 %v3605
        %v3607 = vand.u32 %v368, 4294901760
        %v3608 = vsub.f32 %v368, %v3607
        %v3609 = vand.u32 %v3608, 4294901760
        %3610 = vmatpush1.msra.mxu0 %v3609
        %v3611 = vand.u32 %v374, 4294901760
        %v3612 = vsub.f32 %v374, %v3611
        %v3613 = vand.u32 %v3612, 4294901760
        %3614 = vmatprep.subr.mxu0 %v3613
        %v3615 = vand.u32 %v373, 4294901760
        %v3616 = vsub.f32 %v373, %v3615
        %v3617 = vand.u32 %v3616, 4294901760
        %3618 = vmatpush1.msra.mxu0 %v3617
        %v3619 = vand.u32 %v379, 4294901760
        %v3620 = vsub.f32 %v379, %v3619
        %v3621 = vand.u32 %v3620, 4294901760
        %3622 = vmatprep.subr.mxu0 %v3621
        %v3623 = vand.u32 %v378, 4294901760
        %v3624 = vsub.f32 %v378, %v3623
        %v3625 = vand.u32 %v3624, 4294901760
        %3626 = vmatpush1.msra.mxu0 %v3625
        %3627 = vmatprep.subr.mxu0 0.0
        %3628 = vmatpush1.msra.mxu0 0.0
        %3629 = vmatprep.subr.mxu0 0.0
        %3630 = vmatpush1.msra.mxu0 0.0
        %3631 = vmatprep.subr.mxu0 0.0
        %3632 = vmatpush1.msra.mxu0 0.0
        %3633 = vmatprep.subr.mxu0 0.0
        %3634 = vmatpush1.msra.mxu0 0.0
        %3635 = vmatprep.subr.mxu0 0.0
        %3636 = vmatpush1.msra.mxu0 0.0
        %3637 = vmatprep.subr.mxu0 0.0
        %3638 = vmatpush1.msra.mxu0 0.0
        %3639 = vmatprep.subr.mxu0 0.0
        %3640 = vmatpush1.msra.mxu0 0.0
        %3641 = vmatprep.subr.mxu0 0.0
        %3642 = vmatpush1.msra.mxu0 0.0
        %3643 = vmatprep.subr.mxu0 0.0
        %3644 = vmatpush1.msra.mxu0 0.0
        %3645 = vmatprep.subr.mxu0 0.0
        %3646 = vmatpush1.msra.mxu0 0.0
        %3647 = vmatprep.subr.mxu0 0.0
        %3648 = vmatpush1.msra.mxu0 0.0
        %3649 = vmatprep.subr.mxu0 0.0
        %3650 = vmatpush1.msra.mxu0 0.0
        %3651 = vmatprep.subr.mxu0 0.0
        %3652 = vmatpush1.msra.mxu0 0.0
        %3653 = vmatprep.subr.mxu0 0.0
        %3654 = vmatpush1.msra.mxu0 0.0
        %3655 = vmatprep.subr.mxu0 0.0
        %3656 = vmatpush1.msra.mxu0 0.0
        %3657 = vmatprep.subr.mxu0 0.0
        %3658 = vmatpush1.msra.mxu0 0.0
        %3659 = vmatprep.subr.mxu0 0.0
        %3660 = vmatpush1.msra.mxu0 0.0
        %3661 = vmatprep.subr.mxu0 0.0
        %3662 = vmatpush1.msra.mxu0 0.0
        %3663 = vmatprep.subr.mxu0 0.0
        %3664 = vmatpush1.msra.mxu0 0.0
        %3665 = vmatprep.subr.mxu0 0.0
        %3666 = vmatpush1.msra.mxu0 0.0
        %3667 = vmatprep.subr.mxu0 0.0
        %3668 = vmatpush1.msra.mxu0 0.0
        %3669 = vmatprep.subr.mxu0 0.0
        %3670 = vmatpush1.msra.mxu0 0.0
        %3671 = vmatprep.mubr.f32.mxu0 0.0
        %v3672 = vand.u32 %v383, 4294901760
        %3673 = vmatmul.mubr.f32.gmra.mrb[0].mxu0 %v3672
        %v3674 = vpop.f32.mrb[0].mxu0
        %v3675 = vadd.f32 %v3543, %v3674
        %v3676 = vpop.f32.mrb[0].mxu0
        %v3677 = vadd.f32 %v3545, %v3676
        %3678 = vdwg.mxu0
        %v3679 = vand.u32 %v334, 4294901760
        %3680 = vmatprep.subr.mxu0 %v3679
        %v3681 = vand.u32 %v333, 4294901760
        %3682 = vmatpush1.msra.mxu0 %v3681
        %v3683 = vand.u32 %v339, 4294901760
        %3684 = vmatprep.subr.mxu0 %v3683
        %v3685 = vand.u32 %v338, 4294901760
        %3686 = vmatpush1.msra.mxu0 %v3685
        %v3687 = vand.u32 %v344, 4294901760
        %3688 = vmatprep.subr.mxu0 %v3687
        %v3689 = vand.u32 %v343, 4294901760
        %3690 = vmatpush1.msra.mxu0 %v3689
        %v3691 = vand.u32 %v349, 4294901760
        %3692 = vmatprep.subr.mxu0 %v3691
        %v3693 = vand.u32 %v348, 4294901760
        %3694 = vmatpush1.msra.mxu0 %v3693
        %v3695 = vand.u32 %v354, 4294901760
        %3696 = vmatprep.subr.mxu0 %v3695
        %v3697 = vand.u32 %v353, 4294901760
        %3698 = vmatpush1.msra.mxu0 %v3697
        %v3699 = vand.u32 %v359, 4294901760
        %3700 = vmatprep.subr.mxu0 %v3699
        %v3701 = vand.u32 %v358, 4294901760
        %3702 = vmatpush1.msra.mxu0 %v3701
        %v3703 = vand.u32 %v364, 4294901760
        %3704 = vmatprep.subr.mxu0 %v3703
        %v3705 = vand.u32 %v363, 4294901760
        %3706 = vmatpush1.msra.mxu0 %v3705
        %v3707 = vand.u32 %v369, 4294901760
        %3708 = vmatprep.subr.mxu0 %v3707
        %v3709 = vand.u32 %v368, 4294901760
        %3710 = vmatpush1.msra.mxu0 %v3709
        %v3711 = vand.u32 %v374, 4294901760
        %3712 = vmatprep.subr.mxu0 %v3711
        %v3713 = vand.u32 %v373, 4294901760
        %3714 = vmatpush1.msra.mxu0 %v3713
        %v3715 = vand.u32 %v379, 4294901760
        %3716 = vmatprep.subr.mxu0 %v3715
        %v3717 = vand.u32 %v378, 4294901760
        %3718 = vmatpush1.msra.mxu0 %v3717
        %3719 = vmatprep.subr.mxu0 0.0
        %3720 = vmatpush1.msra.mxu0 0.0
        %3721 = vmatprep.subr.mxu0 0.0
        %3722 = vmatpush1.msra.mxu0 0.0
        %3723 = vmatprep.subr.mxu0 0.0
        %3724 = vmatpush1.msra.mxu0 0.0
        %3725 = vmatprep.subr.mxu0 0.0
        %3726 = vmatpush1.msra.mxu0 0.0
        %3727 = vmatprep.subr.mxu0 0.0
        %3728 = vmatpush1.msra.mxu0 0.0
        %3729 = vmatprep.subr.mxu0 0.0
        %3730 = vmatpush1.msra.mxu0 0.0
        %3731 = vmatprep.subr.mxu0 0.0
        %3732 = vmatpush1.msra.mxu0 0.0
        %3733 = vmatprep.subr.mxu0 0.0
        %3734 = vmatpush1.msra.mxu0 0.0
        %3735 = vmatprep.subr.mxu0 0.0
        %3736 = vmatpush1.msra.mxu0 0.0
        %3737 = vmatprep.subr.mxu0 0.0
        %3738 = vmatpush1.msra.mxu0 0.0
        %3739 = vmatprep.subr.mxu0 0.0
        %3740 = vmatpush1.msra.mxu0 0.0
        %3741 = vmatprep.subr.mxu0 0.0
        %3742 = vmatpush1.msra.mxu0 0.0
        %3743 = vmatprep.subr.mxu0 0.0
        %3744 = vmatpush1.msra.mxu0 0.0
        %3745 = vmatprep.subr.mxu0 0.0
        %3746 = vmatpush1.msra.mxu0 0.0
        %3747 = vmatprep.subr.mxu0 0.0
        %3748 = vmatpush1.msra.mxu0 0.0
        %3749 = vmatprep.subr.mxu0 0.0
        %3750 = vmatpush1.msra.mxu0 0.0
        %3751 = vmatprep.subr.mxu0 0.0
        %3752 = vmatpush1.msra.mxu0 0.0
        %3753 = vmatprep.subr.mxu0 0.0
        %3754 = vmatpush1.msra.mxu0 0.0
        %3755 = vmatprep.subr.mxu0 0.0
        %3756 = vmatpush1.msra.mxu0 0.0
        %3757 = vmatprep.subr.mxu0 0.0
        %3758 = vmatpush1.msra.mxu0 0.0
        %3759 = vmatprep.subr.mxu0 0.0
        %3760 = vmatpush1.msra.mxu0 0.0
        %3761 = vmatprep.subr.mxu0 0.0
        %3762 = vmatpush1.msra.mxu0 0.0
        %3763 = vmatprep.mubr.f32.mxu0 0.0
        %v3764 = vand.u32 %v383, 4294901760
        %3765 = vmatmul.mubr.f32.gmra.mrb[0].mxu0 %v3764
        %v3766 = vpop.f32.mrb[0].mxu0
        %v3767 = vadd.f32 %v3675, %v3766
        %v3768 = vpop.f32.mrb[0].mxu0
        %v3769 = vadd.f32 %v3677, %v3768
        %3770 = vdwg.mxu0
        %3771 = vmatprep.subr.mxu0 0.0
        %v3772 = vand.u32 %v335, 4294901760
        %3773 = vmatpush1.msra.mxu0 %v3772
        %3774 = vmatprep.subr.mxu0 0.0
        %v3775 = vand.u32 %v340, 4294901760
        %3776 = vmatpush1.msra.mxu0 %v3775
        %3777 = vmatprep.subr.mxu0 0.0
        %v3778 = vand.u32 %v345, 4294901760
        %3779 = vmatpush1.msra.mxu0 %v3778
        %3780 = vmatprep.subr.mxu0 0.0
        %v3781 = vand.u32 %v350, 4294901760
        %3782 = vmatpush1.msra.mxu0 %v3781
        %3783 = vmatprep.subr.mxu0 0.0
        %v3784 = vand.u32 %v355, 4294901760
        %3785 = vmatpush1.msra.mxu0 %v3784
        %3786 = vmatprep.subr.mxu0 0.0
        %v3787 = vand.u32 %v360, 4294901760
        %3788 = vmatpush1.msra.mxu0 %v3787
        %3789 = vmatprep.subr.mxu0 0.0
        %v3790 = vand.u32 %v365, 4294901760
        %3791 = vmatpush1.msra.mxu0 %v3790
        %3792 = vmatprep.subr.mxu0 0.0
        %v3793 = vand.u32 %v370, 4294901760
        %3794 = vmatpush1.msra.mxu0 %v3793
        %3795 = vmatprep.subr.mxu0 0.0
        %v3796 = vand.u32 %v375, 4294901760
        %3797 = vmatpush1.msra.mxu0 %v3796
        %3798 = vmatprep.subr.mxu0 0.0
        %v3799 = vand.u32 %v380, 4294901760
        %3800 = vmatpush1.msra.mxu0 %v3799
        %3801 = vmatprep.subr.mxu0 0.0
        %3802 = vmatpush1.msra.mxu0 0.0
        %3803 = vmatprep.subr.mxu0 0.0
        %3804 = vmatpush1.msra.mxu0 0.0
        %3805 = vmatprep.subr.mxu0 0.0
        %3806 = vmatpush1.msra.mxu0 0.0
        %3807 = vmatprep.subr.mxu0 0.0
        %3808 = vmatpush1.msra.mxu0 0.0
        %3809 = vmatprep.subr.mxu0 0.0
        %3810 = vmatpush1.msra.mxu0 0.0
        %3811 = vmatprep.subr.mxu0 0.0
        %3812 = vmatpush1.msra.mxu0 0.0
        %3813 = vmatprep.subr.mxu0 0.0
        %3814 = vmatpush1.msra.mxu0 0.0
        %3815 = vmatprep.subr.mxu0 0.0
        %3816 = vmatpush1.msra.mxu0 0.0
        %3817 = vmatprep.subr.mxu0 0.0
        %3818 = vmatpush1.msra.mxu0 0.0
        %3819 = vmatprep.subr.mxu0 0.0
        %3820 = vmatpush1.msra.mxu0 0.0
        %3821 = vmatprep.subr.mxu0 0.0
        %3822 = vmatpush1.msra.mxu0 0.0
        %3823 = vmatprep.subr.mxu0 0.0
        %3824 = vmatpush1.msra.mxu0 0.0
        %3825 = vmatprep.subr.mxu0 0.0
        %3826 = vmatpush1.msra.mxu0 0.0
        %3827 = vmatprep.subr.mxu0 0.0
        %3828 = vmatpush1.msra.mxu0 0.0
        %3829 = vmatprep.subr.mxu0 0.0
        %3830 = vmatpush1.msra.mxu0 0.0
        %3831 = vmatprep.subr.mxu0 0.0
        %3832 = vmatpush1.msra.mxu0 0.0
        %3833 = vmatprep.subr.mxu0 0.0
        %3834 = vmatpush1.msra.mxu0 0.0
        %3835 = vmatprep.subr.mxu0 0.0
        %3836 = vmatpush1.msra.mxu0 0.0
        %3837 = vmatprep.subr.mxu0 0.0
        %3838 = vmatpush1.msra.mxu0 0.0
        %3839 = vmatprep.subr.mxu0 0.0
        %3840 = vmatpush1.msra.mxu0 0.0
        %3841 = vmatprep.subr.mxu0 0.0
        %3842 = vmatpush1.msra.mxu0 0.0
        %3843 = vmatprep.subr.mxu0 0.0
        %3844 = vmatpush1.msra.mxu0 0.0
        %3845 = vmatprep.mubr.f32.mxu0 0.0
        %v3846 = vand.u32 %v383, 4294901760
        %v3847 = vsub.f32 %v383, %v3846
        %v3848 = vand.u32 %v3847, 4294901760
        %v3849 = vsub.f32 %v3847, %v3848
        %v3850 = vand.u32 %v3849, 4294901760
        %3851 = vmatmul.mubr.f32.gmra.mrb[0].mxu0 %v3850
        %v3852 = vpop.f32.mrb[0].mxu0
        %v3853 = vadd.f32 %v2367, %v3852
        %v3854 = vpop.f32.mrb[0].mxu0
        %3855 = vdwg.mxu0
        %3856 = vmatprep.subr.mxu0 0.0
        %v3857 = vand.u32 %v335, 4294901760
        %v3858 = vsub.f32 %v335, %v3857
        %v3859 = vand.u32 %v3858, 4294901760
        %v3860 = vsub.f32 %v3858, %v3859
        %v3861 = vand.u32 %v3860, 4294901760
        %3862 = vmatpush1.msra.mxu0 %v3861
        %3863 = vmatprep.subr.mxu0 0.0
        %v3864 = vand.u32 %v340, 4294901760
        %v3865 = vsub.f32 %v340, %v3864
        %v3866 = vand.u32 %v3865, 4294901760
        %v3867 = vsub.f32 %v3865, %v3866
        %v3868 = vand.u32 %v3867, 4294901760
        %3869 = vmatpush1.msra.mxu0 %v3868
        %3870 = vmatprep.subr.mxu0 0.0
        %v3871 = vand.u32 %v345, 4294901760
        %v3872 = vsub.f32 %v345, %v3871
        %v3873 = vand.u32 %v3872, 4294901760
        %v3874 = vsub.f32 %v3872, %v3873
        %v3875 = vand.u32 %v3874, 4294901760
        %3876 = vmatpush1.msra.mxu0 %v3875
        %3877 = vmatprep.subr.mxu0 0.0
        %v3878 = vand.u32 %v350, 4294901760
        %v3879 = vsub.f32 %v350, %v3878
        %v3880 = vand.u32 %v3879, 4294901760
        %v3881 = vsub.f32 %v3879, %v3880
        %v3882 = vand.u32 %v3881, 4294901760
        %3883 = vmatpush1.msra.mxu0 %v3882
        %3884 = vmatprep.subr.mxu0 0.0
        %v3885 = vand.u32 %v355, 4294901760
        %v3886 = vsub.f32 %v355, %v3885
        %v3887 = vand.u32 %v3886, 4294901760
        %v3888 = vsub.f32 %v3886, %v3887
        %v3889 = vand.u32 %v3888, 4294901760
        %3890 = vmatpush1.msra.mxu0 %v3889
        %3891 = vmatprep.subr.mxu0 0.0
        %v3892 = vand.u32 %v360, 4294901760
        %v3893 = vsub.f32 %v360, %v3892
        %v3894 = vand.u32 %v3893, 4294901760
        %v3895 = vsub.f32 %v3893, %v3894
        %v3896 = vand.u32 %v3895, 4294901760
        %3897 = vmatpush1.msra.mxu0 %v3896
        %3898 = vmatprep.subr.mxu0 0.0
        %v3899 = vand.u32 %v365, 4294901760
        %v3900 = vsub.f32 %v365, %v3899
        %v3901 = vand.u32 %v3900, 4294901760
        %v3902 = vsub.f32 %v3900, %v3901
        %v3903 = vand.u32 %v3902, 4294901760
        %3904 = vmatpush1.msra.mxu0 %v3903
        %3905 = vmatprep.subr.mxu0 0.0
        %v3906 = vand.u32 %v370, 4294901760
        %v3907 = vsub.f32 %v370, %v3906
        %v3908 = vand.u32 %v3907, 4294901760
        %v3909 = vsub.f32 %v3907, %v3908
        %v3910 = vand.u32 %v3909, 4294901760
        %3911 = vmatpush1.msra.mxu0 %v3910
        %3912 = vmatprep.subr.mxu0 0.0
        %v3913 = vand.u32 %v375, 4294901760
        %v3914 = vsub.f32 %v375, %v3913
        %v3915 = vand.u32 %v3914, 4294901760
        %v3916 = vsub.f32 %v3914, %v3915
        %v3917 = vand.u32 %v3916, 4294901760
        %3918 = vmatpush1.msra.mxu0 %v3917
        %3919 = vmatprep.subr.mxu0 0.0
        %v3920 = vand.u32 %v380, 4294901760
        %v3921 = vsub.f32 %v380, %v3920
        %v3922 = vand.u32 %v3921, 4294901760
        %v3923 = vsub.f32 %v3921, %v3922
        %v3924 = vand.u32 %v3923, 4294901760
        %3925 = vmatpush1.msra.mxu0 %v3924
        %3926 = vmatprep.subr.mxu0 0.0
        %3927 = vmatpush1.msra.mxu0 0.0
        %3928 = vmatprep.subr.mxu0 0.0
        %3929 = vmatpush1.msra.mxu0 0.0
        %3930 = vmatprep.subr.mxu0 0.0
        %3931 = vmatpush1.msra.mxu0 0.0
        %3932 = vmatprep.subr.mxu0 0.0
        %3933 = vmatpush1.msra.mxu0 0.0
        %3934 = vmatprep.subr.mxu0 0.0
        %3935 = vmatpush1.msra.mxu0 0.0
        %3936 = vmatprep.subr.mxu0 0.0
        %3937 = vmatpush1.msra.mxu0 0.0
        %3938 = vmatprep.subr.mxu0 0.0
        %3939 = vmatpush1.msra.mxu0 0.0
        %3940 = vmatprep.subr.mxu0 0.0
        %3941 = vmatpush1.msra.mxu0 0.0
        %3942 = vmatprep.subr.mxu0 0.0
        %3943 = vmatpush1.msra.mxu0 0.0
        %3944 = vmatprep.subr.mxu0 0.0
        %3945 = vmatpush1.msra.mxu0 0.0
        %3946 = vmatprep.subr.mxu0 0.0
        %3947 = vmatpush1.msra.mxu0 0.0
        %3948 = vmatprep.subr.mxu0 0.0
        %3949 = vmatpush1.msra.mxu0 0.0
        %3950 = vmatprep.subr.mxu0 0.0
        %3951 = vmatpush1.msra.mxu0 0.0
        %3952 = vmatprep.subr.mxu0 0.0
        %3953 = vmatpush1.msra.mxu0 0.0
        %3954 = vmatprep.subr.mxu0 0.0
        %3955 = vmatpush1.msra.mxu0 0.0
        %3956 = vmatprep.subr.mxu0 0.0
        %3957 = vmatpush1.msra.mxu0 0.0
        %3958 = vmatprep.subr.mxu0 0.0
        %3959 = vmatpush1.msra.mxu0 0.0
        %3960 = vmatprep.subr.mxu0 0.0
        %3961 = vmatpush1.msra.mxu0 0.0
        %3962 = vmatprep.subr.mxu0 0.0
        %3963 = vmatpush1.msra.mxu0 0.0
        %3964 = vmatprep.subr.mxu0 0.0
        %3965 = vmatpush1.msra.mxu0 0.0
        %3966 = vmatprep.subr.mxu0 0.0
        %3967 = vmatpush1.msra.mxu0 0.0
        %3968 = vmatprep.subr.mxu0 0.0
        %3969 = vmatpush1.msra.mxu0 0.0
        %3970 = vmatprep.mubr.f32.mxu0 0.0
        %v3971 = vand.u32 %v383, 4294901760
        %3972 = vmatmul.mubr.f32.gmra.mrb[0].mxu0 %v3971
        %v3973 = vpop.f32.mrb[0].mxu0
        %v3974 = vadd.f32 %v3853, %v3973
        %v3975 = vpop.f32.mrb[0].mxu0
        %3976 = vdwg.mxu0
        %3977 = vmatprep.subr.mxu0 0.0
        %v3978 = vand.u32 %v335, 4294901760
        %v3979 = vsub.f32 %v335, %v3978
        %3980 = vmatpush1.msra.mxu0 %v3979
        %3981 = vmatprep.subr.mxu0 0.0
        %v3982 = vand.u32 %v340, 4294901760
        %v3983 = vsub.f32 %v340, %v3982
        %3984 = vmatpush1.msra.mxu0 %v3983
        %3985 = vmatprep.subr.mxu0 0.0
        %v3986 = vand.u32 %v345, 4294901760
        %v3987 = vsub.f32 %v345, %v3986
        %3988 = vmatpush1.msra.mxu0 %v3987
        %3989 = vmatprep.subr.mxu0 0.0
        %v3990 = vand.u32 %v350, 4294901760
        %v3991 = vsub.f32 %v350, %v3990
        %3992 = vmatpush1.msra.mxu0 %v3991
        %3993 = vmatprep.subr.mxu0 0.0
        %v3994 = vand.u32 %v355, 4294901760
        %v3995 = vsub.f32 %v355, %v3994
        %3996 = vmatpush1.msra.mxu0 %v3995
        %3997 = vmatprep.subr.mxu0 0.0
        %v3998 = vand.u32 %v360, 4294901760
        %v3999 = vsub.f32 %v360, %v3998
        %4000 = vmatpush1.msra.mxu0 %v3999
        %4001 = vmatprep.subr.mxu0 0.0
        %v4002 = vand.u32 %v365, 4294901760
        %v4003 = vsub.f32 %v365, %v4002
        %4004 = vmatpush1.msra.mxu0 %v4003
        %4005 = vmatprep.subr.mxu0 0.0
        %v4006 = vand.u32 %v370, 4294901760
        %v4007 = vsub.f32 %v370, %v4006
        %4008 = vmatpush1.msra.mxu0 %v4007
        %4009 = vmatprep.subr.mxu0 0.0
        %v4010 = vand.u32 %v375, 4294901760
        %v4011 = vsub.f32 %v375, %v4010
        %4012 = vmatpush1.msra.mxu0 %v4011
        %4013 = vmatprep.subr.mxu0 0.0
        %v4014 = vand.u32 %v380, 4294901760
        %v4015 = vsub.f32 %v380, %v4014
        %4016 = vmatpush1.msra.mxu0 %v4015
        %4017 = vmatprep.subr.mxu0 0.0
        %4018 = vmatpush1.msra.mxu0 0.0
        %4019 = vmatprep.subr.mxu0 0.0
        %4020 = vmatpush1.msra.mxu0 0.0
        %4021 = vmatprep.subr.mxu0 0.0
        %4022 = vmatpush1.msra.mxu0 0.0
        %4023 = vmatprep.subr.mxu0 0.0
        %4024 = vmatpush1.msra.mxu0 0.0
        %4025 = vmatprep.subr.mxu0 0.0
        %4026 = vmatpush1.msra.mxu0 0.0
        %4027 = vmatprep.subr.mxu0 0.0
        %4028 = vmatpush1.msra.mxu0 0.0
        %4029 = vmatprep.subr.mxu0 0.0
        %4030 = vmatpush1.msra.mxu0 0.0
        %4031 = vmatprep.subr.mxu0 0.0
        %4032 = vmatpush1.msra.mxu0 0.0
        %4033 = vmatprep.subr.mxu0 0.0
        %4034 = vmatpush1.msra.mxu0 0.0
        %4035 = vmatprep.subr.mxu0 0.0
        %4036 = vmatpush1.msra.mxu0 0.0
        %4037 = vmatprep.subr.mxu0 0.0
        %4038 = vmatpush1.msra.mxu0 0.0
        %4039 = vmatprep.subr.mxu0 0.0
        %4040 = vmatpush1.msra.mxu0 0.0
        %4041 = vmatprep.subr.mxu0 0.0
        %4042 = vmatpush1.msra.mxu0 0.0
        %4043 = vmatprep.subr.mxu0 0.0
        %4044 = vmatpush1.msra.mxu0 0.0
        %4045 = vmatprep.subr.mxu0 0.0
        %4046 = vmatpush1.msra.mxu0 0.0
        %4047 = vmatprep.subr.mxu0 0.0
        %4048 = vmatpush1.msra.mxu0 0.0
        %4049 = vmatprep.subr.mxu0 0.0
        %4050 = vmatpush1.msra.mxu0 0.0
        %4051 = vmatprep.subr.mxu0 0.0
        %4052 = vmatpush1.msra.mxu0 0.0
        %4053 = vmatprep.subr.mxu0 0.0
        %4054 = vmatpush1.msra.mxu0 0.0
        %4055 = vmatprep.subr.mxu0 0.0
        %4056 = vmatpush1.msra.mxu0 0.0
        %4057 = vmatprep.subr.mxu0 0.0
        %4058 = vmatpush1.msra.mxu0 0.0
        %4059 = vmatprep.subr.mxu0 0.0
        %4060 = vmatpush1.msra.mxu0 0.0
        %4061 = vmatprep.mubr.f32.mxu0 0.0
        %v4062 = vand.u32 %v383, 4294901760
        %v4063 = vsub.f32 %v383, %v4062
        %4064 = vmatmul.mubr.f32.gmra.mrb[0].mxu0 %v4063
        %v4065 = vpop.f32.mrb[0].mxu0
        %v4066 = vadd.f32 %v3974, %v4065
        %v4067 = vpop.f32.mrb[0].mxu0
        %4068 = vdwg.mxu0
        %4069 = vmatprep.subr.mxu0 0.0
        %v4070 = vand.u32 %v335, 4294901760
        %4071 = vmatpush1.msra.mxu0 %v4070
        %4072 = vmatprep.subr.mxu0 0.0
        %v4073 = vand.u32 %v340, 4294901760
        %4074 = vmatpush1.msra.mxu0 %v4073
        %4075 = vmatprep.subr.mxu0 0.0
        %v4076 = vand.u32 %v345, 4294901760
        %4077 = vmatpush1.msra.mxu0 %v4076
        %4078 = vmatprep.subr.mxu0 0.0
        %v4079 = vand.u32 %v350, 4294901760
        %4080 = vmatpush1.msra.mxu0 %v4079
        %4081 = vmatprep.subr.mxu0 0.0
        %v4082 = vand.u32 %v355, 4294901760
        %4083 = vmatpush1.msra.mxu0 %v4082
        %4084 = vmatprep.subr.mxu0 0.0
        %v4085 = vand.u32 %v360, 4294901760
        %4086 = vmatpush1.msra.mxu0 %v4085
        %4087 = vmatprep.subr.mxu0 0.0
        %v4088 = vand.u32 %v365, 4294901760
        %4089 = vmatpush1.msra.mxu0 %v4088
        %4090 = vmatprep.subr.mxu0 0.0
        %v4091 = vand.u32 %v370, 4294901760
        %4092 = vmatpush1.msra.mxu0 %v4091
        %4093 = vmatprep.subr.mxu0 0.0
        %v4094 = vand.u32 %v375, 4294901760
        %4095 = vmatpush1.msra.mxu0 %v4094
        %4096 = vmatprep.subr.mxu0 0.0
        %v4097 = vand.u32 %v380, 4294901760
        %4098 = vmatpush1.msra.mxu0 %v4097
        %4099 = vmatprep.subr.mxu0 0.0
        %4100 = vmatpush1.msra.mxu0 0.0
        %4101 = vmatprep.subr.mxu0 0.0
        %4102 = vmatpush1.msra.mxu0 0.0
        %4103 = vmatprep.subr.mxu0 0.0
        %4104 = vmatpush1.msra.mxu0 0.0
        %4105 = vmatprep.subr.mxu0 0.0
        %4106 = vmatpush1.msra.mxu0 0.0
        %4107 = vmatprep.subr.mxu0 0.0
        %4108 = vmatpush1.msra.mxu0 0.0
        %4109 = vmatprep.subr.mxu0 0.0
        %4110 = vmatpush1.msra.mxu0 0.0
        %4111 = vmatprep.subr.mxu0 0.0
        %4112 = vmatpush1.msra.mxu0 0.0
        %4113 = vmatprep.subr.mxu0 0.0
        %4114 = vmatpush1.msra.mxu0 0.0
        %4115 = vmatprep.subr.mxu0 0.0
        %4116 = vmatpush1.msra.mxu0 0.0
        %4117 = vmatprep.subr.mxu0 0.0
        %4118 = vmatpush1.msra.mxu0 0.0
        %4119 = vmatprep.subr.mxu0 0.0
        %4120 = vmatpush1.msra.mxu0 0.0
        %4121 = vmatprep.subr.mxu0 0.0
        %4122 = vmatpush1.msra.mxu0 0.0
        %4123 = vmatprep.subr.mxu0 0.0
        %4124 = vmatpush1.msra.mxu0 0.0
        %4125 = vmatprep.subr.mxu0 0.0
        %4126 = vmatpush1.msra.mxu0 0.0
        %4127 = vmatprep.subr.mxu0 0.0
        %4128 = vmatpush1.msra.mxu0 0.0
        %4129 = vmatprep.subr.mxu0 0.0
        %4130 = vmatpush1.msra.mxu0 0.0
        %4131 = vmatprep.subr.mxu0 0.0
        %4132 = vmatpush1.msra.mxu0 0.0
        %4133 = vmatprep.subr.mxu0 0.0
        %4134 = vmatpush1.msra.mxu0 0.0
        %4135 = vmatprep.subr.mxu0 0.0
        %4136 = vmatpush1.msra.mxu0 0.0
        %4137 = vmatprep.subr.mxu0 0.0
        %4138 = vmatpush1.msra.mxu0 0.0
        %4139 = vmatprep.subr.mxu0 0.0
        %4140 = vmatpush1.msra.mxu0 0.0
        %4141 = vmatprep.subr.mxu0 0.0
        %4142 = vmatpush1.msra.mxu0 0.0
        %4143 = vmatprep.mubr.f32.mxu0 0.0
        %v4144 = vand.u32 %v383, 4294901760
        %v4145 = vsub.f32 %v383, %v4144
        %v4146 = vand.u32 %v4145, 4294901760
        %4147 = vmatmul.mubr.f32.gmra.mrb[0].mxu0 %v4146
        %v4148 = vpop.f32.mrb[0].mxu0
        %v4149 = vadd.f32 %v4066, %v4148
        %v4150 = vpop.f32.mrb[0].mxu0
        %4151 = vdwg.mxu0
        %4152 = vmatprep.subr.mxu0 0.0
        %v4153 = vand.u32 %v335, 4294901760
        %v4154 = vsub.f32 %v335, %v4153
        %v4155 = vand.u32 %v4154, 4294901760
        %4156 = vmatpush1.msra.mxu0 %v4155
        %4157 = vmatprep.subr.mxu0 0.0
        %v4158 = vand.u32 %v340, 4294901760
        %v4159 = vsub.f32 %v340, %v4158
        %v4160 = vand.u32 %v4159, 4294901760
        %4161 = vmatpush1.msra.mxu0 %v4160
        %4162 = vmatprep.subr.mxu0 0.0
        %v4163 = vand.u32 %v345, 4294901760
        %v4164 = vsub.f32 %v345, %v4163
        %v4165 = vand.u32 %v4164, 4294901760
        %4166 = vmatpush1.msra.mxu0 %v4165
        %4167 = vmatprep.subr.mxu0 0.0
        %v4168 = vand.u32 %v350, 4294901760
        %v4169 = vsub.f32 %v350, %v4168
        %v4170 = vand.u32 %v4169, 4294901760
        %4171 = vmatpush1.msra.mxu0 %v4170
        %4172 = vmatprep.subr.mxu0 0.0
        %v4173 = vand.u32 %v355, 4294901760
        %v4174 = vsub.f32 %v355, %v4173
        %v4175 = vand.u32 %v4174, 4294901760
        %4176 = vmatpush1.msra.mxu0 %v4175
        %4177 = vmatprep.subr.mxu0 0.0
        %v4178 = vand.u32 %v360, 4294901760
        %v4179 = vsub.f32 %v360, %v4178
        %v4180 = vand.u32 %v4179, 4294901760
        %4181 = vmatpush1.msra.mxu0 %v4180
        %4182 = vmatprep.subr.mxu0 0.0
        %v4183 = vand.u32 %v365, 4294901760
        %v4184 = vsub.f32 %v365, %v4183
        %v4185 = vand.u32 %v4184, 4294901760
        %4186 = vmatpush1.msra.mxu0 %v4185
        %4187 = vmatprep.subr.mxu0 0.0
        %v4188 = vand.u32 %v370, 4294901760
        %v4189 = vsub.f32 %v370, %v4188
        %v4190 = vand.u32 %v4189, 4294901760
        %4191 = vmatpush1.msra.mxu0 %v4190
        %4192 = vmatprep.subr.mxu0 0.0
        %v4193 = vand.u32 %v375, 4294901760
        %v4194 = vsub.f32 %v375, %v4193
        %v4195 = vand.u32 %v4194, 4294901760
        %4196 = vmatpush1.msra.mxu0 %v4195
        %4197 = vmatprep.subr.mxu0 0.0
        %v4198 = vand.u32 %v380, 4294901760
        %v4199 = vsub.f32 %v380, %v4198
        %v4200 = vand.u32 %v4199, 4294901760
        %4201 = vmatpush1.msra.mxu0 %v4200
        %4202 = vmatprep.subr.mxu0 0.0
        %4203 = vmatpush1.msra.mxu0 0.0
        %4204 = vmatprep.subr.mxu0 0.0
        %4205 = vmatpush1.msra.mxu0 0.0
        %4206 = vmatprep.subr.mxu0 0.0
        %4207 = vmatpush1.msra.mxu0 0.0
        %4208 = vmatprep.subr.mxu0 0.0
        %4209 = vmatpush1.msra.mxu0 0.0
        %4210 = vmatprep.subr.mxu0 0.0
        %4211 = vmatpush1.msra.mxu0 0.0
        %4212 = vmatprep.subr.mxu0 0.0
        %4213 = vmatpush1.msra.mxu0 0.0
        %4214 = vmatprep.subr.mxu0 0.0
        %4215 = vmatpush1.msra.mxu0 0.0
        %4216 = vmatprep.subr.mxu0 0.0
        %4217 = vmatpush1.msra.mxu0 0.0
        %4218 = vmatprep.subr.mxu0 0.0
        %4219 = vmatpush1.msra.mxu0 0.0
        %4220 = vmatprep.subr.mxu0 0.0
        %4221 = vmatpush1.msra.mxu0 0.0
        %4222 = vmatprep.subr.mxu0 0.0
        %4223 = vmatpush1.msra.mxu0 0.0
        %4224 = vmatprep.subr.mxu0 0.0
        %4225 = vmatpush1.msra.mxu0 0.0
        %4226 = vmatprep.subr.mxu0 0.0
        %4227 = vmatpush1.msra.mxu0 0.0
        %4228 = vmatprep.subr.mxu0 0.0
        %4229 = vmatpush1.msra.mxu0 0.0
        %4230 = vmatprep.subr.mxu0 0.0
        %4231 = vmatpush1.msra.mxu0 0.0
        %4232 = vmatprep.subr.mxu0 0.0
        %4233 = vmatpush1.msra.mxu0 0.0
        %4234 = vmatprep.subr.mxu0 0.0
        %4235 = vmatpush1.msra.mxu0 0.0
        %4236 = vmatprep.subr.mxu0 0.0
        %4237 = vmatpush1.msra.mxu0 0.0
        %4238 = vmatprep.subr.mxu0 0.0
        %4239 = vmatpush1.msra.mxu0 0.0
        %4240 = vmatprep.subr.mxu0 0.0
        %4241 = vmatpush1.msra.mxu0 0.0
        %4242 = vmatprep.subr.mxu0 0.0
        %4243 = vmatpush1.msra.mxu0 0.0
        %4244 = vmatprep.subr.mxu0 0.0
        %4245 = vmatpush1.msra.mxu0 0.0
        %4246 = vmatprep.mubr.f32.mxu0 0.0
        %v4247 = vand.u32 %v383, 4294901760
        %4248 = vmatmul.mubr.f32.gmra.mrb[0].mxu0 %v4247
        %v4249 = vpop.f32.mrb[0].mxu0
        %v4250 = vadd.f32 %v4149, %v4249
        %v4251 = vpop.f32.mrb[0].mxu0
        %4252 = vdwg.mxu0
        %4253 = vmatprep.subr.mxu0 0.0
        %v4254 = vand.u32 %v335, 4294901760
        %4255 = vmatpush1.msra.mxu0 %v4254
        %4256 = vmatprep.subr.mxu0 0.0
        %v4257 = vand.u32 %v340, 4294901760
        %4258 = vmatpush1.msra.mxu0 %v4257
        %4259 = vmatprep.subr.mxu0 0.0
        %v4260 = vand.u32 %v345, 4294901760
        %4261 = vmatpush1.msra.mxu0 %v4260
        %4262 = vmatprep.subr.mxu0 0.0
        %v4263 = vand.u32 %v350, 4294901760
        %4264 = vmatpush1.msra.mxu0 %v4263
        %4265 = vmatprep.subr.mxu0 0.0
        %v4266 = vand.u32 %v355, 4294901760
        %4267 = vmatpush1.msra.mxu0 %v4266
        %4268 = vmatprep.subr.mxu0 0.0
        %v4269 = vand.u32 %v360, 4294901760
        %4270 = vmatpush1.msra.mxu0 %v4269
        %4271 = vmatprep.subr.mxu0 0.0
        %v4272 = vand.u32 %v365, 4294901760
        %4273 = vmatpush1.msra.mxu0 %v4272
        %4274 = vmatprep.subr.mxu0 0.0
        %v4275 = vand.u32 %v370, 4294901760
        %4276 = vmatpush1.msra.mxu0 %v4275
        %4277 = vmatprep.subr.mxu0 0.0
        %v4278 = vand.u32 %v375, 4294901760
        %4279 = vmatpush1.msra.mxu0 %v4278
        %4280 = vmatprep.subr.mxu0 0.0
        %v4281 = vand.u32 %v380, 4294901760
        %4282 = vmatpush1.msra.mxu0 %v4281
        %4283 = vmatprep.subr.mxu0 0.0
        %4284 = vmatpush1.msra.mxu0 0.0
        %4285 = vmatprep.subr.mxu0 0.0
        %4286 = vmatpush1.msra.mxu0 0.0
        %4287 = vmatprep.subr.mxu0 0.0
        %4288 = vmatpush1.msra.mxu0 0.0
        %4289 = vmatprep.subr.mxu0 0.0
        %4290 = vmatpush1.msra.mxu0 0.0
        %4291 = vmatprep.subr.mxu0 0.0
        %4292 = vmatpush1.msra.mxu0 0.0
        %4293 = vmatprep.subr.mxu0 0.0
        %4294 = vmatpush1.msra.mxu0 0.0
        %4295 = vmatprep.subr.mxu0 0.0
        %4296 = vmatpush1.msra.mxu0 0.0
        %4297 = vmatprep.subr.mxu0 0.0
        %4298 = vmatpush1.msra.mxu0 0.0
        %4299 = vmatprep.subr.mxu0 0.0
        %4300 = vmatpush1.msra.mxu0 0.0
        %4301 = vmatprep.subr.mxu0 0.0
        %4302 = vmatpush1.msra.mxu0 0.0
        %4303 = vmatprep.subr.mxu0 0.0
        %4304 = vmatpush1.msra.mxu0 0.0
        %4305 = vmatprep.subr.mxu0 0.0
        %4306 = vmatpush1.msra.mxu0 0.0
        %4307 = vmatprep.subr.mxu0 0.0
        %4308 = vmatpush1.msra.mxu0 0.0
        %4309 = vmatprep.subr.mxu0 0.0
        %4310 = vmatpush1.msra.mxu0 0.0
        %4311 = vmatprep.subr.mxu0 0.0
        %4312 = vmatpush1.msra.mxu0 0.0
        %4313 = vmatprep.subr.mxu0 0.0
        %4314 = vmatpush1.msra.mxu0 0.0
        %4315 = vmatprep.subr.mxu0 0.0
        %4316 = vmatpush1.msra.mxu0 0.0
        %4317 = vmatprep.subr.mxu0 0.0
        %4318 = vmatpush1.msra.mxu0 0.0
        %4319 = vmatprep.subr.mxu0 0.0
        %4320 = vmatpush1.msra.mxu0 0.0
        %4321 = vmatprep.subr.mxu0 0.0
        %4322 = vmatpush1.msra.mxu0 0.0
        %4323 = vmatprep.subr.mxu0 0.0
        %4324 = vmatpush1.msra.mxu0 0.0
        %4325 = vmatprep.subr.mxu0 0.0
        %4326 = vmatpush1.msra.mxu0 0.0
        %4327 = vmatprep.mubr.f32.mxu0 0.0
        %v4328 = vand.u32 %v383, 4294901760
        %4329 = vmatmul.mubr.f32.gmra.mrb[0].mxu0 %v4328
        %v4330 = vpop.f32.mrb[0].mxu0
        %v4331 = vadd.f32 %v4250, %v4330
        %v4332 = vpop.f32.mrb[0].mxu0
        %4333 = vdwg.mxu0
        %4334 = vst [vmem:[%s272] sm:$0xff] %v1080
        %4335 = vst [vmem:[%s272 + $0x8] sm:$0xff] %v1082
        %4336 = vst [vmem:[%s272 + $0x10] sm:$0xff] %v1779
        %4337 = vst [vmem:[%s272 + $0x18] sm:$0xff] %v1781
        %vm4338 = vcmask 7168
        %4339 = vst.msk [vmem:[%s272 + $0x20] sm:$0xff] %vm4338, %v2343
        %4340 = vst [vmem:[%s279] sm:$0xff] %v3068
        %4341 = vst [vmem:[%s279 + $0x8] sm:$0xff] %v3070
        %4342 = vst [vmem:[%s279 + $0x10] sm:$0xff] %v3767
        %4343 = vst [vmem:[%s279 + $0x18] sm:$0xff] %v3769
        %4344 = vst.msk [vmem:[%s279 + $0x20] sm:$0xff] %vm4338, %v4331
        %s4345 = sand.u32 %s124, 1
        %s4346 = scalar_lea.sflag [#allocation4], %s4345
        %s4347 = sand.u32 %s124, 1
        %s4348 = smul.addr %s4347, 40
        %s4349 = scalar_lea.vmem [#allocation8], %s4348
        %s4350 = sand.u32 %s150, 1
        %s4351 = scalar_lea.sflag [#allocation10], %s4350
        %s4352 = sand.u32 %s150, 1
        %s4353 = smul.addr %s4352, 40
        %s4354 = scalar_lea.vmem [#allocation9], %s4353
        // Predicated region
        $region49: #{tpu_custom_call.1} parent=35 // pred_check
          %p4355 = pneg %p134
        $region50: #{tpu_custom_call.1} parent=35 // pred_check_branch
          %4357 = sbr.rel (%p4355) target = $region52
        $region51: #{tpu_custom_call.1} parent=35 // pred_region
          %s4359 = ssub.s32 640, 640
          %4360 = vsyncadd %s4346, %s4359
          %s4361 = smul.addr %s27, 5
          %s4362 = smul.addr %s4361, 128
          %s4363 = scalar_lea.hbm %s4, %s4362
          %s4365 = sshll.u32 %s4349, 4
          %s4366 = int_to_ptr.vmem [resolvable:$true] %s4365
          %4368 = dma.vmem_to_hbm [thread:$0]  %s4366, 640, %s4363, %s4346
        $region52: #{tpu_custom_call.1} parent=35 // pred_fallthru
          _
        // Predicated region
        $region53: #{tpu_custom_call.1} parent=35 // pred_check
          %p4369 = pneg %p160
        $region54: #{tpu_custom_call.1} parent=35 // pred_check_branch
          %4371 = sbr.rel (%p4369) target = $region56
        $region55: #{tpu_custom_call.1} parent=35 // pred_region
          %s4373 = ssub.s32 640, 640
          %4374 = vsyncadd %s4351, %s4373
          %s4375 = smul.addr %s27, 5
          %s4376 = smul.addr %s4375, 128
          %s4377 = scalar_lea.hbm %s5, %s4376
          %s4379 = sshll.u32 %s4354, 4
          %s4380 = int_to_ptr.vmem [resolvable:$true] %s4379
          %4382 = dma.vmem_to_hbm [thread:$0]  %s4380, 640, %s4377, %s4351
        $region56: #{tpu_custom_call.1} parent=35 // pred_fallthru
          _
      $region36: #{tpu_custom_call.1} parent=5 // pred_fallthru
        _
      %p4383 = scmp.le.s32.totalorder 2, %s22
      // Predicated region
      $region57: #{tpu_custom_call.1} parent=5 // pred_check
        %p4384 = pneg %p4383
      $region58: #{tpu_custom_call.1} parent=5 // pred_check_branch
        %4386 = sbr.rel (%p4384) target = $region60
      $region59: #{tpu_custom_call.1} parent=5 // pred_region
        %s4387 = ssub.s32 %s22, 2
        // Predicated region
        $region61: #{tpu_custom_call.1} parent=59 // pred_check
          %p4388 = pneg %p140
        $region62: #{tpu_custom_call.1} parent=59 // pred_check_branch
          %4390 = sbr.rel (%p4388) target = $region64
        $region63: #{tpu_custom_call.1} parent=59 // pred_region
          %s4391 = sand.u32 %s125, 1
          %s4392 = scalar_lea.sflag [#allocation4], %s4391
          %s4393 = sand.u32 %s125, 1
          %s4394 = smul.addr %s4393, 40
          %s4395 = scalar_lea.vmem [#allocation8], %s4394
          %4396 = dma.done %s4392, 640
        $region64: #{tpu_custom_call.1} parent=59 // pred_fallthru
          _
        // Predicated region
        $region65: #{tpu_custom_call.1} parent=59 // pred_check
          %p4397 = pneg %p166
        $region66: #{tpu_custom_call.1} parent=59 // pred_check_branch
          %4399 = sbr.rel (%p4397) target = $region68
        $region67: #{tpu_custom_call.1} parent=59 // pred_region
          %s4400 = sand.u32 %s151, 1
          %s4401 = scalar_lea.sflag [#allocation10], %s4400
          %s4402 = sand.u32 %s151, 1
          %s4403 = smul.addr %s4402, 40
          %s4404 = scalar_lea.vmem [#allocation9], %s4403
          %4405 = dma.done %s4401, 640
        $region68: #{tpu_custom_call.1} parent=59 // pred_fallthru
          _
      $region60: #{tpu_custom_call.1} parent=5 // pred_fallthru
        _
    $region6: #{tpu_custom_call.1} parent=1 // loop_footer
      %s26 = sadd.s32 1, %s22
    $region7: #{tpu_custom_call.1} parent=1 // loop_footer_branch
      %21 = sbr.rel target = $region3
    $region8: #{tpu_custom_call.1} parent=1 // loop_exit
      _
    %4406 = vsyncpa [#allocation3], 1
    %s4407 = scalar_lea.sflag [#allocation3], 1
    %4408 = vsyncpa %s4407, 1
    %4409 = vsyncpa [#allocation6], 1
    %4410 = vsyncpa [#allocation4], 1
    %s4411 = scalar_lea.sflag [#allocation4], 1
    %4412 = vsyncpa %s4411, 1
    %4413 = vsyncpa [#allocation10], 1
    %s4414 = scalar_lea.sflag [#allocation10], 1
    %4415 = vsyncpa %s4414, 1

</llo_original>
